<compile_context>
chip_gen: v7x
topology: tpu7x:2x2x1
jax: 0.10.0
libtpu: 0.0.40
codegen_flags: <defaults>
</compile_context>

<pallas_src>
import jax
import jax.numpy as jnp
from jax.experimental import pallas as pl
from jax.experimental.pallas import tpu as pltpu

# Problem sizes (channels fixed by the module; batch/spatial kept small).
N, CIN, COUT, H, W = 2, 256, 256, 8, 8
KH = KW = 3
EPS = 1e-5  # nn.BatchNorm2d default eps


def dmt2_block_kernel(xp_ref, w_ref, gamma_ref, beta_ref, o_ref):
    """Fused 3x3 conv (9 tap matmuls) + batch-stat BN + ReLU.

    xp_ref    : (N, H+2, W+2, CIN) bf16  zero-padded NHWC activations
    w_ref     : (9, CIN, COUT)     bf16  tap-major conv weights
    gamma_ref : (1, COUT)          f32   BN weight
    beta_ref  : (1, COUT)          f32   BN bias
    o_ref     : (N*H*W, COUT)      bf16  output (rows enumerate (n, h, w))
    """
    n, hp, wp, cin = xp_ref.shape
    h, w = hp - 2, wp - 2
    rows = n * h * w
    cout = o_ref.shape[1]

    # ---- Conv2d(256,256,3,1,1): 9 accumulating K=256 MXU matmuls, f32 accumulation ----
    acc = jnp.zeros((rows, cout), dtype=jnp.float32)
    for ky in range(KH):
        for kx in range(KW):
            patch = xp_ref[:, ky:ky + h, kx:kx + w, :].reshape(rows, cin)
            acc = acc + jnp.dot(patch, w_ref[ky * KW + kx],
                                preferred_element_type=jnp.float32)

    # ---- BatchNorm2d (training-mode batch stats), per-channel over all rows ----
    # One-pass variance (E[x^2] - mean^2) is fine here: conv outputs are O(1).
    inv_rows = 1.0 / rows
    mean = jnp.sum(acc, axis=0, keepdims=True) * inv_rows            # (1, COUT)
    mean_sq = jnp.sum(acc * acc, axis=0, keepdims=True) * inv_rows
    var = mean_sq - mean * mean                                      # biased variance
    scale = jax.lax.rsqrt(var + EPS) * gamma_ref[...]
    shift = beta_ref[...] - mean * scale

    # ---- affine + ReLU, bf16 writeback ----
    o_ref[...] = jnp.maximum(acc * scale + shift, 0.0).astype(o_ref.dtype)


def block_of_dmt2(x_nchw, w_oihw, b, gamma, beta):
    """Wrapper: NCHW in / NCHW out, matching the PyTorch module's forward."""
    n, cin, h, w = x_nchw.shape
    cout = w_oihw.shape[0]
    rows = n * h * w

    # Conv bias cancels exactly under training-mode BatchNorm -> intentionally unused.
    del b

    # NCHW -> NHWC (lane-dense channels-last), bf16, zero-pad once for padding=1.
    # TODO(synk): if the surrounding graph is already channels-last, drop both transposes.
    x_nhwc = jnp.transpose(x_nchw, (0, 2, 3, 1)).astype(jnp.bfloat16)
    xp = jnp.pad(x_nhwc, ((0, 0), (1, 1), (1, 1), (0, 0)))           # (N, H+2, W+2, CIN)

    # (COUT, CIN, KH, KW) -> (KH, KW, CIN, COUT) -> (9, CIN, COUT): tap-major so each
    # in-kernel tap matmul reads a contiguous (CIN, COUT) weight slab.
    w9 = jnp.transpose(w_oihw, (2, 3, 1, 0)).reshape(KH * KW, cin, cout).astype(jnp.bfloat16)
    g2 = gamma.reshape(1, cout).astype(jnp.float32)
    bt2 = beta.reshape(1, cout).astype(jnp.float32)

    out2d = pl.pallas_call(
        dmt2_block_kernel,
        out_shape=jax.ShapeDtypeStruct((rows, cout), jnp.bfloat16),
        grid=(1,),                                       # single step, full-width output
        in_specs=[
            pl.BlockSpec(xp.shape, lambda i: (0, 0, 0, 0)),   # padded activations (~100 KiB)
            pl.BlockSpec(w9.shape, lambda i: (0, 0, 0)),      # contiguous weight slab
            pl.BlockSpec((1, cout), lambda i: (0, 0)),        # gamma
            pl.BlockSpec((1, cout), lambda i: (0, 0)),        # beta
        ],
        out_specs=pl.BlockSpec((rows, cout), lambda i: (0, 0)),
        compiler_params=pltpu.CompilerParams(
            dimension_semantics=("arbitrary",),
        ),
    )(xp, w9, g2, bt2)

    out_nhwc = out2d.reshape(n, h, w, cout)
    return jnp.transpose(out_nhwc, (0, 3, 1, 2)).astype(jnp.float32)   # back to NCHW


def reference(x_nchw, w_oihw, b, gamma, beta):
    """Pure-JAX f32 reference reproducing the PyTorch forward (training-mode BN)."""
    y = jax.lax.conv_general_dilated(
        x_nchw.astype(jnp.float32), w_oihw.astype(jnp.float32),
        window_strides=(1, 1), padding="SAME",
        dimension_numbers=("NCHW", "OIHW", "NCHW"),
        precision=jax.lax.Precision.HIGHEST)
    y = y + b[None, :, None, None]
    mean = jnp.mean(y, axis=(0, 2, 3), keepdims=True)
    var = jnp.mean((y - mean) ** 2, axis=(0, 2, 3), keepdims=True)
    y = (y - mean) * jax.lax.rsqrt(var + EPS)
    y = y * gamma[None, :, None, None] + beta[None, :, None, None]
    return jnp.maximum(y, 0.0)


if __name__ == "__main__":
    key = jax.random.PRNGKey(0)
    kx, kw, kb, kg, kbt = jax.random.split(key, 5)

    # Deterministic synthetic parameters (shapes from the module's __init__).
    x = jax.random.normal(kx, (N, CIN, H, W), dtype=jnp.float32)
    fan_in = CIN * KH * KW
    w_conv = jax.random.normal(kw, (COUT, CIN, KH, KW), dtype=jnp.float32) / jnp.sqrt(fan_in)
    b_conv = jax.random.normal(kb, (COUT,), dtype=jnp.float32) * 0.1
    gamma = 1.0 + 0.1 * jax.random.normal(kg, (COUT,), dtype=jnp.float32)
    beta = 0.1 * jax.random.normal(kbt, (COUT,), dtype=jnp.float32)

    out = jax.block_until_ready(block_of_dmt2(x, w_conv, b_conv, gamma, beta))
    ref = jax.block_until_ready(reference(x, w_conv, b_conv, gamma, beta))

    assert out.shape == (N, COUT, H, W), out.shape
    # Tolerance reflects the deliberate bf16 activation/weight/output precision (f32 accum).
    err = float(jnp.max(jnp.abs(out - ref) / (1.0 + jnp.abs(ref))))
    assert err < 3e-2, f"max scaled error {err}"

    print("KERNEL_OK")
</pallas_src>

<mosaic_0001>
module attributes {stable_mosaic.version = 11 : i64} {
  func.func @dmt2_block_kernel(%arg0: i32, %arg1: memref<2x10x10x256xbf16, #tpu.memory_space<vmem>>, %arg2: memref<9x256x256xbf16, #tpu.memory_space<vmem>>, %arg3: memref<1x256xf32, #tpu.memory_space<vmem>>, %arg4: memref<1x256xf32, #tpu.memory_space<vmem>>, %arg5: memref<128x256xbf16, #tpu.memory_space<vmem>>) attributes {dimension_semantics = [#tpu.dimension_semantics<arbitrary>], iteration_bounds = array<i64: 1>, scalar_prefetch = 0 : i64, scratch_operands = 0 : i64, tpu.core_type = #tpu.core_type<tc>, window_params = [{pipeline_mode = #tpu.pipeline_mode<synchronous>, transform_indices = @transform_0, window_bounds = array<i64: 2, 10, 10, 256>}, {pipeline_mode = #tpu.pipeline_mode<synchronous>, transform_indices = @transform_1, window_bounds = array<i64: 9, 256, 256>}, {pipeline_mode = #tpu.pipeline_mode<synchronous>, transform_indices = @transform_2, window_bounds = array<i64: 1, 256>}, {pipeline_mode = #tpu.pipeline_mode<synchronous>, transform_indices = @transform_3, window_bounds = array<i64: 1, 256>}, {pipeline_mode = #tpu.pipeline_mode<synchronous>, transform_indices = @transform_4, window_bounds = array<i64: 128, 256>}]} {
    %cst = arith.constant 0.000000e+00 : f32
    %0 = vector.broadcast %cst : f32 to vector<128x256xf32>
    %c0 = arith.constant 0 : index
    %c0_0 = arith.constant 0 : index
    %c0_1 = arith.constant 0 : index
    %c0_2 = arith.constant 0 : index
    %1 = vector.load %arg1[%c0, %c0_0, %c0_1, %c0_2] : memref<2x10x10x256xbf16, #tpu.memory_space<vmem>>, vector<2x8x8x256xbf16>
    %2 = vector.shape_cast %1 : vector<2x8x8x256xbf16> to vector<128x256xbf16>
    %c0_3 = arith.constant 0 : index
    %c0_4 = arith.constant 0 : index
    %c0_5 = arith.constant 0 : index
    %3 = vector.load %arg2[%c0_3, %c0_4, %c0_5] : memref<9x256x256xbf16, #tpu.memory_space<vmem>>, vector<1x256x256xbf16>
    %4 = vector.shape_cast %3 : vector<1x256x256xbf16> to vector<256x256xbf16>
    %cst_6 = arith.constant dense<0.000000e+00> : vector<128x256xf32>
    %5 = tpu.matmul %2, %4, %cst_6 {dimension_numbers = #tpu.dot_dimension_numbers<[1], [0], [0], [1], [0, 0, 1, 1], [], []>} : vector<128x256xbf16>, vector<256x256xbf16>, vector<128x256xf32> -> vector<128x256xf32>
    %6 = arith.addf %0, %5 : vector<128x256xf32>
    %c0_7 = arith.constant 0 : index
    %c0_8 = arith.constant 0 : index
    %c1 = arith.constant 1 : index
    %c0_9 = arith.constant 0 : index
    %7 = vector.load %arg1[%c0_7, %c0_8, %c1, %c0_9] : memref<2x10x10x256xbf16, #tpu.memory_space<vmem>>, vector<2x8x8x256xbf16>
    %8 = vector.shape_cast %7 : vector<2x8x8x256xbf16> to vector<128x256xbf16>
    %c1_10 = arith.constant 1 : index
    %c0_11 = arith.constant 0 : index
    %c0_12 = arith.constant 0 : index
    %9 = vector.load %arg2[%c1_10, %c0_11, %c0_12] : memref<9x256x256xbf16, #tpu.memory_space<vmem>>, vector<1x256x256xbf16>
    %10 = vector.shape_cast %9 : vector<1x256x256xbf16> to vector<256x256xbf16>
    %cst_13 = arith.constant dense<0.000000e+00> : vector<128x256xf32>
    %11 = tpu.matmul %8, %10, %cst_13 {dimension_numbers = #tpu.dot_dimension_numbers<[1], [0], [0], [1], [0, 0, 1, 1], [], []>} : vector<128x256xbf16>, vector<256x256xbf16>, vector<128x256xf32> -> vector<128x256xf32>
    %12 = arith.addf %6, %11 : vector<128x256xf32>
    %c0_14 = arith.constant 0 : index
    %c0_15 = arith.constant 0 : index
    %c2 = arith.constant 2 : index
    %c0_16 = arith.constant 0 : index
    %13 = vector.load %arg1[%c0_14, %c0_15, %c2, %c0_16] : memref<2x10x10x256xbf16, #tpu.memory_space<vmem>>, vector<2x8x8x256xbf16>
    %14 = vector.shape_cast %13 : vector<2x8x8x256xbf16> to vector<128x256xbf16>
    %c2_17 = arith.constant 2 : index
    %c0_18 = arith.constant 0 : index
    %c0_19 = arith.constant 0 : index
    %15 = vector.load %arg2[%c2_17, %c0_18, %c0_19] : memref<9x256x256xbf16, #tpu.memory_space<vmem>>, vector<1x256x256xbf16>
    %16 = vector.shape_cast %15 : vector<1x256x256xbf16> to vector<256x256xbf16>
    %cst_20 = arith.constant dense<0.000000e+00> : vector<128x256xf32>
    %17 = tpu.matmul %14, %16, %cst_20 {dimension_numbers = #tpu.dot_dimension_numbers<[1], [0], [0], [1], [0, 0, 1, 1], [], []>} : vector<128x256xbf16>, vector<256x256xbf16>, vector<128x256xf32> -> vector<128x256xf32>
    %18 = arith.addf %12, %17 : vector<128x256xf32>
    %c0_21 = arith.constant 0 : index
    %c1_22 = arith.constant 1 : index
    %c0_23 = arith.constant 0 : index
    %c0_24 = arith.constant 0 : index
    %19 = vector.load %arg1[%c0_21, %c1_22, %c0_23, %c0_24] : memref<2x10x10x256xbf16, #tpu.memory_space<vmem>>, vector<2x8x8x256xbf16>
    %20 = vector.shape_cast %19 : vector<2x8x8x256xbf16> to vector<128x256xbf16>
    %c3 = arith.constant 3 : index
    %c0_25 = arith.constant 0 : index
    %c0_26 = arith.constant 0 : index
    %21 = vector.load %arg2[%c3, %c0_25, %c0_26] : memref<9x256x256xbf16, #tpu.memory_space<vmem>>, vector<1x256x256xbf16>
    %22 = vector.shape_cast %21 : vector<1x256x256xbf16> to vector<256x256xbf16>
    %cst_27 = arith.constant dense<0.000000e+00> : vector<128x256xf32>
    %23 = tpu.matmul %20, %22, %cst_27 {dimension_numbers = #tpu.dot_dimension_numbers<[1], [0], [0], [1], [0, 0, 1, 1], [], []>} : vector<128x256xbf16>, vector<256x256xbf16>, vector<128x256xf32> -> vector<128x256xf32>
    %24 = arith.addf %18, %23 : vector<128x256xf32>
    %c0_28 = arith.constant 0 : index
    %c1_29 = arith.constant 1 : index
    %c1_30 = arith.constant 1 : index
    %c0_31 = arith.constant 0 : index
    %25 = vector.load %arg1[%c0_28, %c1_29, %c1_30, %c0_31] : memref<2x10x10x256xbf16, #tpu.memory_space<vmem>>, vector<2x8x8x256xbf16>
    %26 = vector.shape_cast %25 : vector<2x8x8x256xbf16> to vector<128x256xbf16>
    %c4 = arith.constant 4 : index
    %c0_32 = arith.constant 0 : index
    %c0_33 = arith.constant 0 : index
    %27 = vector.load %arg2[%c4, %c0_32, %c0_33] : memref<9x256x256xbf16, #tpu.memory_space<vmem>>, vector<1x256x256xbf16>
    %28 = vector.shape_cast %27 : vector<1x256x256xbf16> to vector<256x256xbf16>
    %cst_34 = arith.constant dense<0.000000e+00> : vector<128x256xf32>
    %29 = tpu.matmul %26, %28, %cst_34 {dimension_numbers = #tpu.dot_dimension_numbers<[1], [0], [0], [1], [0, 0, 1, 1], [], []>} : vector<128x256xbf16>, vector<256x256xbf16>, vector<128x256xf32> -> vector<128x256xf32>
    %30 = arith.addf %24, %29 : vector<128x256xf32>
    %c0_35 = arith.constant 0 : index
    %c1_36 = arith.constant 1 : index
    %c2_37 = arith.constant 2 : index
    %c0_38 = arith.constant 0 : index
    %31 = vector.load %arg1[%c0_35, %c1_36, %c2_37, %c0_38] : memref<2x10x10x256xbf16, #tpu.memory_space<vmem>>, vector<2x8x8x256xbf16>
    %32 = vector.shape_cast %31 : vector<2x8x8x256xbf16> to vector<128x256xbf16>
    %c5 = arith.constant 5 : index
    %c0_39 = arith.constant 0 : index
    %c0_40 = arith.constant 0 : index
    %33 = vector.load %arg2[%c5, %c0_39, %c0_40] : memref<9x256x256xbf16, #tpu.memory_space<vmem>>, vector<1x256x256xbf16>
    %34 = vector.shape_cast %33 : vector<1x256x256xbf16> to vector<256x256xbf16>
    %cst_41 = arith.constant dense<0.000000e+00> : vector<128x256xf32>
    %35 = tpu.matmul %32, %34, %cst_41 {dimension_numbers = #tpu.dot_dimension_numbers<[1], [0], [0], [1], [0, 0, 1, 1], [], []>} : vector<128x256xbf16>, vector<256x256xbf16>, vector<128x256xf32> -> vector<128x256xf32>
    %36 = arith.addf %30, %35 : vector<128x256xf32>
    %c0_42 = arith.constant 0 : index
    %c2_43 = arith.constant 2 : index
    %c0_44 = arith.constant 0 : index
    %c0_45 = arith.constant 0 : index
    %37 = vector.load %arg1[%c0_42, %c2_43, %c0_44, %c0_45] : memref<2x10x10x256xbf16, #tpu.memory_space<vmem>>, vector<2x8x8x256xbf16>
    %38 = vector.shape_cast %37 : vector<2x8x8x256xbf16> to vector<128x256xbf16>
    %c6 = arith.constant 6 : index
    %c0_46 = arith.constant 0 : index
    %c0_47 = arith.constant 0 : index
    %39 = vector.load %arg2[%c6, %c0_46, %c0_47] : memref<9x256x256xbf16, #tpu.memory_space<vmem>>, vector<1x256x256xbf16>
    %40 = vector.shape_cast %39 : vector<1x256x256xbf16> to vector<256x256xbf16>
    %cst_48 = arith.constant dense<0.000000e+00> : vector<128x256xf32>
    %41 = tpu.matmul %38, %40, %cst_48 {dimension_numbers = #tpu.dot_dimension_numbers<[1], [0], [0], [1], [0, 0, 1, 1], [], []>} : vector<128x256xbf16>, vector<256x256xbf16>, vector<128x256xf32> -> vector<128x256xf32>
    %42 = arith.addf %36, %41 : vector<128x256xf32>
    %c0_49 = arith.constant 0 : index
    %c2_50 = arith.constant 2 : index
    %c1_51 = arith.constant 1 : index
    %c0_52 = arith.constant 0 : index
    %43 = vector.load %arg1[%c0_49, %c2_50, %c1_51, %c0_52] : memref<2x10x10x256xbf16, #tpu.memory_space<vmem>>, vector<2x8x8x256xbf16>
    %44 = vector.shape_cast %43 : vector<2x8x8x256xbf16> to vector<128x256xbf16>
    %c7 = arith.constant 7 : index
    %c0_53 = arith.constant 0 : index
    %c0_54 = arith.constant 0 : index
    %45 = vector.load %arg2[%c7, %c0_53, %c0_54] : memref<9x256x256xbf16, #tpu.memory_space<vmem>>, vector<1x256x256xbf16>
    %46 = vector.shape_cast %45 : vector<1x256x256xbf16> to vector<256x256xbf16>
    %cst_55 = arith.constant dense<0.000000e+00> : vector<128x256xf32>
    %47 = tpu.matmul %44, %46, %cst_55 {dimension_numbers = #tpu.dot_dimension_numbers<[1], [0], [0], [1], [0, 0, 1, 1], [], []>} : vector<128x256xbf16>, vector<256x256xbf16>, vector<128x256xf32> -> vector<128x256xf32>
    %48 = arith.addf %42, %47 : vector<128x256xf32>
    %c0_56 = arith.constant 0 : index
    %c2_57 = arith.constant 2 : index
    %c2_58 = arith.constant 2 : index
    %c0_59 = arith.constant 0 : index
    %49 = vector.load %arg1[%c0_56, %c2_57, %c2_58, %c0_59] : memref<2x10x10x256xbf16, #tpu.memory_space<vmem>>, vector<2x8x8x256xbf16>
    %50 = vector.shape_cast %49 : vector<2x8x8x256xbf16> to vector<128x256xbf16>
    %c8 = arith.constant 8 : index
    %c0_60 = arith.constant 0 : index
    %c0_61 = arith.constant 0 : index
    %51 = vector.load %arg2[%c8, %c0_60, %c0_61] : memref<9x256x256xbf16, #tpu.memory_space<vmem>>, vector<1x256x256xbf16>
    %52 = vector.shape_cast %51 : vector<1x256x256xbf16> to vector<256x256xbf16>
    %cst_62 = arith.constant dense<0.000000e+00> : vector<128x256xf32>
    %53 = tpu.matmul %50, %52, %cst_62 {dimension_numbers = #tpu.dot_dimension_numbers<[1], [0], [0], [1], [0, 0, 1, 1], [], []>} : vector<128x256xbf16>, vector<256x256xbf16>, vector<128x256xf32> -> vector<128x256xf32>
    %54 = arith.addf %48, %53 : vector<128x256xf32>
    %cst_63 = arith.constant dense<0.000000e+00> : vector<256xf32>
    %55 = vector.multi_reduction <add>, %54, %cst_63 [0] : vector<128x256xf32> to vector<256xf32>
    %56 = vector.shape_cast %55 : vector<256xf32> to vector<1x256xf32>
    %cst_64 = arith.constant 7.812500e-03 : f32
    %57 = vector.broadcast %cst_64 : f32 to vector<1x256xf32>
    %58 = arith.mulf %56, %57 : vector<1x256xf32>
    %59 = arith.mulf %54, %54 : vector<128x256xf32>
    %cst_65 = arith.constant dense<0.000000e+00> : vector<256xf32>
    %60 = vector.multi_reduction <add>, %59, %cst_65 [0] : vector<128x256xf32> to vector<256xf32>
    %61 = vector.shape_cast %60 : vector<256xf32> to vector<1x256xf32>
    %cst_66 = arith.constant 7.812500e-03 : f32
    %62 = vector.broadcast %cst_66 : f32 to vector<1x256xf32>
    %63 = arith.mulf %61, %62 : vector<1x256xf32>
    %64 = arith.mulf %58, %58 : vector<1x256xf32>
    %65 = arith.subf %63, %64 : vector<1x256xf32>
    %cst_67 = arith.constant 9.99999974E-6 : f32
    %66 = vector.broadcast %cst_67 : f32 to vector<1x256xf32>
    %67 = arith.addf %65, %66 : vector<1x256xf32>
    %68 = math.rsqrt %67 : vector<1x256xf32>
    %c0_68 = arith.constant 0 : index
    %c0_69 = arith.constant 0 : index
    %69 = vector.load %arg3[%c0_68, %c0_69] : memref<1x256xf32, #tpu.memory_space<vmem>>, vector<1x256xf32>
    %70 = arith.mulf %68, %69 : vector<1x256xf32>
    %c0_70 = arith.constant 0 : index
    %c0_71 = arith.constant 0 : index
    %71 = vector.load %arg4[%c0_70, %c0_71] : memref<1x256xf32, #tpu.memory_space<vmem>>, vector<1x256xf32>
    %72 = arith.mulf %58, %70 : vector<1x256xf32>
    %73 = arith.subf %71, %72 : vector<1x256xf32>
    %74 = vector.broadcast %70 : vector<1x256xf32> to vector<128x256xf32>
    %75 = arith.mulf %54, %74 : vector<128x256xf32>
    %76 = vector.broadcast %73 : vector<1x256xf32> to vector<128x256xf32>
    %77 = arith.addf %75, %76 : vector<128x256xf32>
    %cst_72 = arith.constant 0.000000e+00 : f32
    %78 = vector.broadcast %cst_72 : f32 to vector<128x256xf32>
    %79 = arith.maximumf %77, %78 : vector<128x256xf32>
    %80 = arith.truncf %79 : vector<128x256xf32> to vector<128x256xbf16>
    %c0_73 = arith.constant 0 : index
    %c0_74 = arith.constant 0 : index
    %81 = vector.load %arg5[%c0_73, %c0_74] : memref<128x256xbf16, #tpu.memory_space<vmem>>, vector<128x256xbf16>
    tpu.vector_store %arg5[%c0_73, %c0_74], %80 {strides = array<i32>} : memref<128x256xbf16, #tpu.memory_space<vmem>>, vector<128x256xbf16>,
    return
  }
  func.func @transform_0(%arg0: i32) -> (i32, i32, i32, i32) {
    %c0_i32 = arith.constant 0 : i32
    %c0_i32_0 = arith.constant 0 : i32
    %c0_i32_1 = arith.constant 0 : i32
    %c0_i32_2 = arith.constant 0 : i32
    %c0_i32_3 = arith.constant 0 : i32
    return %c0_i32, %c0_i32_0, %c0_i32_1, %c0_i32_2 : i32, i32, i32, i32
  }
  func.func @transform_1(%arg0: i32) -> (i32, i32, i32) {
    %c0_i32 = arith.constant 0 : i32
    %c0_i32_0 = arith.constant 0 : i32
    %c0_i32_1 = arith.constant 0 : i32
    %c0_i32_2 = arith.constant 0 : i32
    return %c0_i32, %c0_i32_0, %c0_i32_1 : i32, i32, i32
  }
  func.func @transform_2(%arg0: i32) -> (i32, i32) {
    %c0_i32 = arith.constant 0 : i32
    %c0_i32_0 = arith.constant 0 : i32
    %c0_i32_1 = arith.constant 0 : i32
    return %c0_i32, %c0_i32_0 : i32, i32
  }
  func.func @transform_3(%arg0: i32) -> (i32, i32) {
    %c0_i32 = arith.constant 0 : i32
    %c0_i32_0 = arith.constant 0 : i32
    %c0_i32_1 = arith.constant 0 : i32
    return %c0_i32, %c0_i32_0 : i32, i32
  }
  func.func @transform_4(%arg0: i32) -> (i32, i32) {
    %c0_i32 = arith.constant 0 : i32
    %c0_i32_0 = arith.constant 0 : i32
    %c0_i32_1 = arith.constant 0 : i32
    return %c0_i32, %c0_i32_0 : i32, i32
  }
}

</mosaic_0001>

<llo_original>
// kernel: tpu_custom_call.1
$region0: #{tpu_custom_call.1}
  #allocation0 [shape = 'u32[]', space=smem, size = 0x4, offset = 0x4, fixed_abs, tag = 'smem constant byte address 0x4 - core index']
  #allocation1 [shape = 'u32[144,128]{1,0:T(1,128)}', space=vmem, size = 0x12000, scoped, tag = 'internal scratch']
  %s0 = inlined_call_operand.vmem [shape: bf16[2,10,10,256], index: 0, kind: input, shape index: {}]
  %s1 = inlined_call_operand.hbm [shape: bf16[9,256,256], index: 1, kind: input, shape index: {}]
  %s2 = inlined_call_operand.hbm [shape: f32[1,256], index: 2, kind: input, shape index: {}]
  %s3 = inlined_call_operand.hbm [shape: f32[1,256], index: 3, kind: input, shape index: {}]
  %s4 = inlined_call_operand.hbm [shape: bf16[128,256], index: 4, kind: output, shape index: {}]
  %s5 = sld [smem:[#allocation0]]
  $region38: #{tpu_custom_call.1} parent=0
    _
  %s7 = ssub.s32 1, %s5
  %s8 = scalar_select 0, %s7, %s5
  $region1: #{tpu_custom_call.1} parent=0
    #allocation2 [shape = 'u8[1179648]{0}', space=vmem, size = 0x120000, scoped, tag = 'input window, operand 1, single buffered']
    #allocation3 [shape = 's32[1]{0}', space=sflag, size = 0x4, scoped, tag = 'scoped memory for tpu_custom_call.1']
    #allocation4 [shape = 's32[1]{0}', space=sflag, size = 0x4, scoped, tag = 'scoped memory for tpu_custom_call.1']
    #allocation5 [shape = 'u8[1024]{0}', space=vmem, size = 0x400, scoped, tag = 'input window, operand 2, single buffered']
    #allocation6 [shape = 's32[1]{0}', space=sflag, size = 0x4, scoped, tag = 'scoped memory for tpu_custom_call.1']
    #allocation7 [shape = 'u8[1024]{0}', space=vmem, size = 0x400, scoped, tag = 'input window, operand 3, single buffered']
    #allocation8 [shape = 'u8[65536]{0}', space=vmem, size = 0x10000, scoped, tag = 'output window, operand 0, single buffered']
    %9 = vsyncpa [#allocation3], 0
    %10 = vsyncpa [#allocation6], 0
    %11 = vsyncpa [#allocation4], 0
    // Predicated region
    $region2: #{tpu_custom_call.1} parent=1 // pred_check
      _
    $region3: #{tpu_custom_call.1} parent=1 // pred_check_branch
      %13 = sbr.rel (0) target = $region5
    $region4: #{tpu_custom_call.1} parent=1 // pred_region
      _
    $region5: #{tpu_custom_call.1} parent=1 // pred_fallthru
      _
    // Predicated region
    $region6: #{tpu_custom_call.1} parent=1 // pred_check
      _
    $region7: #{tpu_custom_call.1} parent=1 // pred_check_branch
      %15 = sbr.rel (0) target = $region9
    $region8: #{tpu_custom_call.1} parent=1 // pred_region
      %s17 = ssub.s32 36864, 36864
      %18 = vsyncadd [#allocation3], %s17
      %s19 = sshll.u32 [#allocation2], 4
      %s20 = int_to_ptr.vmem [resolvable:$true] %s19
      %25 = dma.hbm_to_vmem [thread:$0]  %s1, 36864, %s20, [#allocation3], 128, 128, 8
    $region9: #{tpu_custom_call.1} parent=1 // pred_fallthru
      _
    // Predicated region
    $region10: #{tpu_custom_call.1} parent=1 // pred_check
      _
    $region11: #{tpu_custom_call.1} parent=1 // pred_check_branch
      %27 = sbr.rel (0) target = $region13
    $region12: #{tpu_custom_call.1} parent=1 // pred_region
      %s29 = ssub.s32 32, 32
      %30 = vsyncadd [#allocation6], %s29
      %s32 = sshll.u32 [#allocation5], 4
      %s33 = int_to_ptr.vmem [resolvable:$true] %s32
      %35 = dma.hbm_to_vmem [thread:$0]  %s2, 32, %s33, [#allocation6]
    $region13: #{tpu_custom_call.1} parent=1 // pred_fallthru
      _
    // Predicated region
    $region14: #{tpu_custom_call.1} parent=1 // pred_check
      _
    $region15: #{tpu_custom_call.1} parent=1 // pred_check_branch
      %37 = sbr.rel (0) target = $region17
    $region16: #{tpu_custom_call.1} parent=1 // pred_region
      %s39 = ssub.s32 32, 32
      %40 = vsyncadd [#allocation6], %s39
      %s42 = sshll.u32 [#allocation7], 4
      %s43 = int_to_ptr.vmem [resolvable:$true] %s42
      %45 = dma.hbm_to_vmem [thread:$0]  %s3, 32, %s43, [#allocation6]
    $region17: #{tpu_custom_call.1} parent=1 // pred_fallthru
      _
    // Predicated region
    $region18: #{tpu_custom_call.1} parent=1 // pred_check
      _
    $region19: #{tpu_custom_call.1} parent=1 // pred_check_branch
      %47 = sbr.rel (0) target = $region21
    $region20: #{tpu_custom_call.1} parent=1 // pred_region
      %48 = dma.done [#allocation3], 36864
    $region21: #{tpu_custom_call.1} parent=1 // pred_fallthru
      _
    // Predicated region
    $region22: #{tpu_custom_call.1} parent=1 // pred_check
      _
    $region23: #{tpu_custom_call.1} parent=1 // pred_check_branch
      %50 = sbr.rel (0) target = $region25
    $region24: #{tpu_custom_call.1} parent=1 // pred_region
      %51 = dma.done [#allocation6], 32
    $region25: #{tpu_custom_call.1} parent=1 // pred_fallthru
      _
    // Predicated region
    $region26: #{tpu_custom_call.1} parent=1 // pred_check
      _
    $region27: #{tpu_custom_call.1} parent=1 // pred_check_branch
      %53 = sbr.rel (0) target = $region29
    $region28: #{tpu_custom_call.1} parent=1 // pred_region
      %54 = dma.done [#allocation6], 32
    $region29: #{tpu_custom_call.1} parent=1 // pred_fallthru
      _
    %v55 = vld [vmem:[%s0] sm:$0xff]
    %v56 = vld [vmem:[%s0 + $0x10] sm:$0xff]
    %v57 = vld [vmem:[%s0 + $0x20] sm:$0xff]
    %v58 = vld [vmem:[%s0 + $0x30] sm:$0xff]
    %v59 = vld [vmem:[%s0 + $0x40] sm:$0xff]
    %v60 = vld [vmem:[%s0 + $0x50] sm:$0xff]
    %v61 = vld [vmem:[%s0 + $0x60] sm:$0xff]
    %v62 = vld [vmem:[%s0 + $0x70] sm:$0xff]
    %v63 = vld [vmem:[%s0 + $0xa0] sm:$0xff]
    %v64 = vld [vmem:[%s0 + $0xb0] sm:$0xff]
    %v65 = vld [vmem:[%s0 + $0xc0] sm:$0xff]
    %v66 = vld [vmem:[%s0 + $0xd0] sm:$0xff]
    %v67 = vld [vmem:[%s0 + $0xe0] sm:$0xff]
    %v68 = vld [vmem:[%s0 + $0xf0] sm:$0xff]
    %v69 = vld [vmem:[%s0 + $0x100] sm:$0xff]
    %v70 = vld [vmem:[%s0 + $0x110] sm:$0xff]
    %v71 = vld [vmem:[#allocation2] sm:$0xff]
    %v72 = vld [vmem:[#allocation2 + $0x8] sm:$0xff]
    %v73 = vld [vmem:[#allocation2 + $0x10] sm:$0xff]
    %v74 = vld [vmem:[#allocation2 + $0x18] sm:$0xff]
    %v75 = vld [vmem:[#allocation2 + $0x20] sm:$0xff]
    %v76 = vld [vmem:[#allocation2 + $0x28] sm:$0xff]
    %v77 = vld [vmem:[#allocation2 + $0x30] sm:$0xff]
    %v78 = vld [vmem:[#allocation2 + $0x38] sm:$0xff]
    %v79 = vld [vmem:[#allocation2 + $0x40] sm:$0xff]
    %v80 = vld [vmem:[#allocation2 + $0x48] sm:$0xff]
    %v81 = vld [vmem:[#allocation2 + $0x50] sm:$0xff]
    %v82 = vld [vmem:[#allocation2 + $0x58] sm:$0xff]
    %v83 = vld [vmem:[#allocation2 + $0x60] sm:$0xff]
    %v84 = vld [vmem:[#allocation2 + $0x68] sm:$0xff]
    %v85 = vld [vmem:[#allocation2 + $0x70] sm:$0xff]
    %v86 = vld [vmem:[#allocation2 + $0x78] sm:$0xff]
    %v87 = vld [vmem:[#allocation2 + $0x80] sm:$0xff]
    %v88 = vld [vmem:[#allocation2 + $0x88] sm:$0xff]
    %v89 = vld [vmem:[#allocation2 + $0x90] sm:$0xff]
    %v90 = vld [vmem:[#allocation2 + $0x98] sm:$0xff]
    %v91 = vld [vmem:[#allocation2 + $0xa0] sm:$0xff]
    %v92 = vld [vmem:[#allocation2 + $0xa8] sm:$0xff]
    %v93 = vld [vmem:[#allocation2 + $0xb0] sm:$0xff]
    %v94 = vld [vmem:[#allocation2 + $0xb8] sm:$0xff]
    %v95 = vld [vmem:[#allocation2 + $0xc0] sm:$0xff]
    %v96 = vld [vmem:[#allocation2 + $0xc8] sm:$0xff]
    %v97 = vld [vmem:[#allocation2 + $0xd0] sm:$0xff]
    %v98 = vld [vmem:[#allocation2 + $0xd8] sm:$0xff]
    %v99 = vld [vmem:[#allocation2 + $0xe0] sm:$0xff]
    %v100 = vld [vmem:[#allocation2 + $0xe8] sm:$0xff]
    %v101 = vld [vmem:[#allocation2 + $0xf0] sm:$0xff]
    %v102 = vld [vmem:[#allocation2 + $0xf8] sm:$0xff]
    %v103 = vld [vmem:[%s0 + $0x8] sm:$0x11]
    %v104 = vld [vmem:[%s0 + $0x18] sm:$0x11]
    %v105 = vld [vmem:[%s0 + $0x28] sm:$0x11]
    %v106 = vld [vmem:[%s0 + $0x38] sm:$0x11]
    %v107 = vld [vmem:[%s0 + $0x48] sm:$0x11]
    %v108 = vld [vmem:[%s0 + $0x58] sm:$0x11]
    %v109 = vld [vmem:[%s0 + $0x68] sm:$0x11]
    %v110 = vld [vmem:[%s0 + $0x78] sm:$0x11]
    %v111 = vld [vmem:[%s0 + $0xa8] sm:$0x11]
    %v112 = vld [vmem:[%s0 + $0xb8] sm:$0x11]
    %v113 = vld [vmem:[%s0 + $0xc8] sm:$0x11]
    %v114 = vld [vmem:[%s0 + $0xd8] sm:$0x11]
    %v115 = vld [vmem:[%s0 + $0xe8] sm:$0x11]
    %v116 = vld [vmem:[%s0 + $0xf8] sm:$0x11]
    %v117 = vld [vmem:[%s0 + $0x108] sm:$0x11]
    %v118 = vld [vmem:[%s0 + $0x118] sm:$0x11]
    %vm119 = vsmask.f32 3328
    %vm120 = vsmask.f32 7440
    %vm121 = vmor %vm119, %vm120
    %v123 = vshrl.u32 %v55, 16
    %v125 = vrot.slane %v123, 4
    %v126 = vshll.u32 %v55, 16
    %v128 = vrot.slane %v126, 5
    %v129 = vor.u32 %v125, %v128
    %v130 = vrot.slane %v129, 4
    %v132 = vshll.u32 %v103, 16
    %v134 = vrot.slane %v132, 5
    %v135 = vsel %vm121, %v130, %v134
    %v137 = vshrl.u32 %v56, 16
    %v139 = vrot.slane %v137, 4
    %v140 = vshll.u32 %v56, 16
    %v142 = vrot.slane %v140, 5
    %v143 = vor.u32 %v139, %v142
    %v144 = vrot.slane %v143, 4
    %v146 = vshll.u32 %v104, 16
    %v148 = vrot.slane %v146, 5
    %v149 = vsel %vm121, %v144, %v148
    %v151 = vshrl.u32 %v57, 16
    %v153 = vrot.slane %v151, 4
    %v154 = vshll.u32 %v57, 16
    %v156 = vrot.slane %v154, 5
    %v157 = vor.u32 %v153, %v156
    %v158 = vrot.slane %v157, 4
    %v160 = vshll.u32 %v105, 16
    %v162 = vrot.slane %v160, 5
    %v163 = vsel %vm121, %v158, %v162
    %v165 = vshrl.u32 %v58, 16
    %v167 = vrot.slane %v165, 4
    %v168 = vshll.u32 %v58, 16
    %v170 = vrot.slane %v168, 5
    %v171 = vor.u32 %v167, %v170
    %v172 = vrot.slane %v171, 4
    %v174 = vshll.u32 %v106, 16
    %v176 = vrot.slane %v174, 5
    %v177 = vsel %vm121, %v172, %v176
    %v179 = vshrl.u32 %v59, 16
    %v181 = vrot.slane %v179, 4
    %v182 = vshll.u32 %v59, 16
    %v184 = vrot.slane %v182, 5
    %v185 = vor.u32 %v181, %v184
    %v186 = vrot.slane %v185, 4
    %v188 = vshll.u32 %v107, 16
    %v190 = vrot.slane %v188, 5
    %v191 = vsel %vm121, %v186, %v190
    %v193 = vshrl.u32 %v60, 16
    %v195 = vrot.slane %v193, 4
    %v196 = vshll.u32 %v60, 16
    %v198 = vrot.slane %v196, 5
    %v199 = vor.u32 %v195, %v198
    %v200 = vrot.slane %v199, 4
    %v202 = vshll.u32 %v108, 16
    %v204 = vrot.slane %v202, 5
    %v205 = vsel %vm121, %v200, %v204
    %v207 = vshrl.u32 %v61, 16
    %v209 = vrot.slane %v207, 4
    %v210 = vshll.u32 %v61, 16
    %v212 = vrot.slane %v210, 5
    %v213 = vor.u32 %v209, %v212
    %v214 = vrot.slane %v213, 4
    %v216 = vshll.u32 %v109, 16
    %v218 = vrot.slane %v216, 5
    %v219 = vsel %vm121, %v214, %v218
    %v221 = vshrl.u32 %v62, 16
    %v223 = vrot.slane %v221, 4
    %v224 = vshll.u32 %v62, 16
    %v226 = vrot.slane %v224, 5
    %v227 = vor.u32 %v223, %v226
    %v228 = vrot.slane %v227, 4
    %v230 = vshll.u32 %v110, 16
    %v232 = vrot.slane %v230, 5
    %v233 = vsel %vm121, %v228, %v232
    %v235 = vshrl.u32 %v63, 16
    %v237 = vrot.slane %v235, 4
    %v238 = vshll.u32 %v63, 16
    %v240 = vrot.slane %v238, 5
    %v241 = vor.u32 %v237, %v240
    %v242 = vrot.slane %v241, 4
    %v244 = vshll.u32 %v111, 16
    %v246 = vrot.slane %v244, 5
    %v247 = vsel %vm121, %v242, %v246
    %v249 = vshrl.u32 %v64, 16
    %v251 = vrot.slane %v249, 4
    %v252 = vshll.u32 %v64, 16
    %v254 = vrot.slane %v252, 5
    %v255 = vor.u32 %v251, %v254
    %v256 = vrot.slane %v255, 4
    %v258 = vshll.u32 %v112, 16
    %v260 = vrot.slane %v258, 5
    %v261 = vsel %vm121, %v256, %v260
    %v263 = vshrl.u32 %v65, 16
    %v265 = vrot.slane %v263, 4
    %v266 = vshll.u32 %v65, 16
    %v268 = vrot.slane %v266, 5
    %v269 = vor.u32 %v265, %v268
    %v270 = vrot.slane %v269, 4
    %v272 = vshll.u32 %v113, 16
    %v274 = vrot.slane %v272, 5
    %v275 = vsel %vm121, %v270, %v274
    %v277 = vshrl.u32 %v66, 16
    %v279 = vrot.slane %v277, 4
    %v280 = vshll.u32 %v66, 16
    %v282 = vrot.slane %v280, 5
    %v283 = vor.u32 %v279, %v282
    %v284 = vrot.slane %v283, 4
    %v286 = vshll.u32 %v114, 16
    %v288 = vrot.slane %v286, 5
    %v289 = vsel %vm121, %v284, %v288
    %v291 = vshrl.u32 %v67, 16
    %v293 = vrot.slane %v291, 4
    %v294 = vshll.u32 %v67, 16
    %v296 = vrot.slane %v294, 5
    %v297 = vor.u32 %v293, %v296
    %v298 = vrot.slane %v297, 4
    %v300 = vshll.u32 %v115, 16
    %v302 = vrot.slane %v300, 5
    %v303 = vsel %vm121, %v298, %v302
    %v305 = vshrl.u32 %v68, 16
    %v307 = vrot.slane %v305, 4
    %v308 = vshll.u32 %v68, 16
    %v310 = vrot.slane %v308, 5
    %v311 = vor.u32 %v307, %v310
    %v312 = vrot.slane %v311, 4
    %v314 = vshll.u32 %v116, 16
    %v316 = vrot.slane %v314, 5
    %v317 = vsel %vm121, %v312, %v316
    %v319 = vshrl.u32 %v69, 16
    %v321 = vrot.slane %v319, 4
    %v322 = vshll.u32 %v69, 16
    %v324 = vrot.slane %v322, 5
    %v325 = vor.u32 %v321, %v324
    %v326 = vrot.slane %v325, 4
    %v328 = vshll.u32 %v117, 16
    %v330 = vrot.slane %v328, 5
    %v331 = vsel %vm121, %v326, %v330
    %v333 = vshrl.u32 %v70, 16
    %v335 = vrot.slane %v333, 4
    %v336 = vshll.u32 %v70, 16
    %v338 = vrot.slane %v336, 5
    %v339 = vor.u32 %v335, %v338
    %v340 = vrot.slane %v339, 4
    %v342 = vshll.u32 %v118, 16
    %v344 = vrot.slane %v342, 5
    %v345 = vsel %vm121, %v340, %v344
    %s346 = scalar_lea.vmem [#allocation2], 256
    %v347 = vld [vmem:[%s346] sm:$0xff]
    %v348 = vld [vmem:[%s346 + $0x8] sm:$0xff]
    %v349 = vld [vmem:[%s346 + $0x10] sm:$0xff]
    %v350 = vld [vmem:[%s346 + $0x18] sm:$0xff]
    %v351 = vld [vmem:[%s346 + $0x20] sm:$0xff]
    %v352 = vld [vmem:[%s346 + $0x28] sm:$0xff]
    %v353 = vld [vmem:[%s346 + $0x30] sm:$0xff]
    %v354 = vld [vmem:[%s346 + $0x38] sm:$0xff]
    %v355 = vld [vmem:[%s346 + $0x40] sm:$0xff]
    %v356 = vld [vmem:[%s346 + $0x48] sm:$0xff]
    %v357 = vld [vmem:[%s346 + $0x50] sm:$0xff]
    %v358 = vld [vmem:[%s346 + $0x58] sm:$0xff]
    %v359 = vld [vmem:[%s346 + $0x60] sm:$0xff]
    %v360 = vld [vmem:[%s346 + $0x68] sm:$0xff]
    %v361 = vld [vmem:[%s346 + $0x70] sm:$0xff]
    %v362 = vld [vmem:[%s346 + $0x78] sm:$0xff]
    %v363 = vld [vmem:[%s346 + $0x80] sm:$0xff]
    %v364 = vld [vmem:[%s346 + $0x88] sm:$0xff]
    %v365 = vld [vmem:[%s346 + $0x90] sm:$0xff]
    %v366 = vld [vmem:[%s346 + $0x98] sm:$0xff]
    %v367 = vld [vmem:[%s346 + $0xa0] sm:$0xff]
    %v368 = vld [vmem:[%s346 + $0xa8] sm:$0xff]
    %v369 = vld [vmem:[%s346 + $0xb0] sm:$0xff]
    %v370 = vld [vmem:[%s346 + $0xb8] sm:$0xff]
    %v371 = vld [vmem:[%s346 + $0xc0] sm:$0xff]
    %v372 = vld [vmem:[%s346 + $0xc8] sm:$0xff]
    %v373 = vld [vmem:[%s346 + $0xd0] sm:$0xff]
    %v374 = vld [vmem:[%s346 + $0xd8] sm:$0xff]
    %v375 = vld [vmem:[%s346 + $0xe0] sm:$0xff]
    %v376 = vld [vmem:[%s346 + $0xe8] sm:$0xff]
    %v377 = vld [vmem:[%s346 + $0xf0] sm:$0xff]
    %v378 = vld [vmem:[%s346 + $0xf8] sm:$0xff]
    %v379 = vunpack.c.l.b16 %v135
    %v380 = vunpack.c.h.b16 %v135
    %v381 = vunpack.c.l.b16 %v149
    %v382 = vunpack.c.h.b16 %v149
    %v383 = vunpack.c.l.b16 %v163
    %v384 = vunpack.c.h.b16 %v163
    %v385 = vunpack.c.l.b16 %v177
    %v386 = vunpack.c.h.b16 %v177
    %v387 = vunpack.c.l.b16 %v191
    %v388 = vunpack.c.h.b16 %v191
    %v389 = vunpack.c.l.b16 %v205
    %v390 = vunpack.c.h.b16 %v205
    %v391 = vunpack.c.l.b16 %v219
    %v392 = vunpack.c.h.b16 %v219
    %v393 = vunpack.c.l.b16 %v233
    %v394 = vunpack.c.h.b16 %v233
    %v395 = vunpack.c.l.b16 %v247
    %v396 = vunpack.c.h.b16 %v247
    %v397 = vunpack.c.l.b16 %v261
    %v398 = vunpack.c.h.b16 %v261
    %v399 = vunpack.c.l.b16 %v275
    %v400 = vunpack.c.h.b16 %v275
    %v401 = vunpack.c.l.b16 %v289
    %v402 = vunpack.c.h.b16 %v289
    %v403 = vunpack.c.l.b16 %v303
    %v404 = vunpack.c.h.b16 %v303
    %v405 = vunpack.c.l.b16 %v317
    %v406 = vunpack.c.h.b16 %v317
    %v407 = vunpack.c.l.b16 %v331
    %v408 = vunpack.c.h.b16 %v331
    %v409 = vunpack.c.l.b16 %v345
    %v410 = vunpack.c.h.b16 %v345
    %v411 = vpack.c.b16 %v381, %v379
    %v412 = vpack.c.b16 %v382, %v380
    %v413 = vpack.c.b16 %v385, %v383
    %v414 = vpack.c.b16 %v386, %v384
    %v415 = vpack.c.b16 %v389, %v387
    %v416 = vpack.c.b16 %v390, %v388
    %v417 = vpack.c.b16 %v393, %v391
    %v418 = vpack.c.b16 %v394, %v392
    %v419 = vpack.c.b16 %v397, %v395
    %v420 = vpack.c.b16 %v398, %v396
    %v421 = vpack.c.b16 %v401, %v399
    %v422 = vpack.c.b16 %v402, %v400
    %v423 = vpack.c.b16 %v405, %v403
    %v424 = vpack.c.b16 %v406, %v404
    %v425 = vpack.c.b16 %v409, %v407
    %v426 = vpack.c.b16 %v410, %v408
    %v475 = vunpack.c.l.b16 %v347
    %v476 = vunpack.c.h.b16 %v347
    %v477 = vunpack.c.l.b16 %v348
    %v478 = vunpack.c.h.b16 %v348
    %v479 = vunpack.c.l.b16 %v349
    %v480 = vunpack.c.h.b16 %v349
    %v481 = vunpack.c.l.b16 %v350
    %v482 = vunpack.c.h.b16 %v350
    %v483 = vunpack.c.l.b16 %v351
    %v484 = vunpack.c.h.b16 %v351
    %v485 = vunpack.c.l.b16 %v352
    %v486 = vunpack.c.h.b16 %v352
    %v487 = vunpack.c.l.b16 %v353
    %v488 = vunpack.c.h.b16 %v353
    %v489 = vunpack.c.l.b16 %v354
    %v490 = vunpack.c.h.b16 %v354
    %v491 = vunpack.c.l.b16 %v355
    %v492 = vunpack.c.h.b16 %v355
    %v493 = vunpack.c.l.b16 %v356
    %v494 = vunpack.c.h.b16 %v356
    %v495 = vunpack.c.l.b16 %v357
    %v496 = vunpack.c.h.b16 %v357
    %v497 = vunpack.c.l.b16 %v358
    %v498 = vunpack.c.h.b16 %v358
    %v499 = vunpack.c.l.b16 %v359
    %v500 = vunpack.c.h.b16 %v359
    %v501 = vunpack.c.l.b16 %v360
    %v502 = vunpack.c.h.b16 %v360
    %v503 = vunpack.c.l.b16 %v361
    %v504 = vunpack.c.h.b16 %v361
    %v505 = vunpack.c.l.b16 %v362
    %v506 = vunpack.c.h.b16 %v362
    %v507 = vunpack.c.l.b16 %v363
    %v508 = vunpack.c.h.b16 %v363
    %v509 = vunpack.c.l.b16 %v364
    %v510 = vunpack.c.h.b16 %v364
    %v511 = vunpack.c.l.b16 %v365
    %v512 = vunpack.c.h.b16 %v365
    %v513 = vunpack.c.l.b16 %v366
    %v514 = vunpack.c.h.b16 %v366
    %v515 = vunpack.c.l.b16 %v367
    %v516 = vunpack.c.h.b16 %v367
    %v517 = vunpack.c.l.b16 %v368
    %v518 = vunpack.c.h.b16 %v368
    %v519 = vunpack.c.l.b16 %v369
    %v520 = vunpack.c.h.b16 %v369
    %v521 = vunpack.c.l.b16 %v370
    %v522 = vunpack.c.h.b16 %v370
    %v523 = vunpack.c.l.b16 %v371
    %v524 = vunpack.c.h.b16 %v371
    %v525 = vunpack.c.l.b16 %v372
    %v526 = vunpack.c.h.b16 %v372
    %v527 = vunpack.c.l.b16 %v373
    %v528 = vunpack.c.h.b16 %v373
    %v529 = vunpack.c.l.b16 %v374
    %v530 = vunpack.c.h.b16 %v374
    %v531 = vunpack.c.l.b16 %v375
    %v532 = vunpack.c.h.b16 %v375
    %v533 = vunpack.c.l.b16 %v376
    %v534 = vunpack.c.h.b16 %v376
    %v535 = vunpack.c.l.b16 %v377
    %v536 = vunpack.c.h.b16 %v377
    %v537 = vunpack.c.l.b16 %v378
    %v538 = vunpack.c.h.b16 %v378
    %v539 = vpack.c.b16 %v477, %v475
    %v540 = vpack.c.b16 %v478, %v476
    %v541 = vpack.c.b16 %v481, %v479
    %v542 = vpack.c.b16 %v482, %v480
    %v543 = vpack.c.b16 %v485, %v483
    %v544 = vpack.c.b16 %v486, %v484
    %v545 = vpack.c.b16 %v489, %v487
    %v546 = vpack.c.b16 %v490, %v488
    %v547 = vpack.c.b16 %v493, %v491
    %v548 = vpack.c.b16 %v494, %v492
    %v549 = vpack.c.b16 %v497, %v495
    %v550 = vpack.c.b16 %v498, %v496
    %v551 = vpack.c.b16 %v501, %v499
    %v552 = vpack.c.b16 %v502, %v500
    %v553 = vpack.c.b16 %v505, %v503
    %v554 = vpack.c.b16 %v506, %v504
    %v555 = vpack.c.b16 %v509, %v507
    %v556 = vpack.c.b16 %v510, %v508
    %v557 = vpack.c.b16 %v513, %v511
    %v558 = vpack.c.b16 %v514, %v512
    %v559 = vpack.c.b16 %v517, %v515
    %v560 = vpack.c.b16 %v518, %v516
    %v561 = vpack.c.b16 %v521, %v519
    %v562 = vpack.c.b16 %v522, %v520
    %v563 = vpack.c.b16 %v525, %v523
    %v564 = vpack.c.b16 %v526, %v524
    %v565 = vpack.c.b16 %v529, %v527
    %v566 = vpack.c.b16 %v530, %v528
    %v567 = vpack.c.b16 %v533, %v531
    %v568 = vpack.c.b16 %v534, %v532
    %v569 = vpack.c.b16 %v537, %v535
    %v570 = vpack.c.b16 %v538, %v536
    %603 = vmatprep.subr.bf16.mxu0 %v540
    %604 = vmatpush1.bf16.msra.mxu0 %v539
    %605 = vmatprep.subr.bf16.mxu0 %v542
    %606 = vmatpush1.bf16.msra.mxu0 %v541
    %607 = vmatprep.subr.bf16.mxu0 %v544
    %608 = vmatpush1.bf16.msra.mxu0 %v543
    %609 = vmatprep.subr.bf16.mxu0 %v546
    %610 = vmatpush1.bf16.msra.mxu0 %v545
    %611 = vmatprep.subr.bf16.mxu0 %v548
    %612 = vmatpush1.bf16.msra.mxu0 %v547
    %613 = vmatprep.subr.bf16.mxu0 %v550
    %614 = vmatpush1.bf16.msra.mxu0 %v549
    %615 = vmatprep.subr.bf16.mxu0 %v552
    %616 = vmatpush1.bf16.msra.mxu0 %v551
    %617 = vmatprep.subr.bf16.mxu0 %v554
    %618 = vmatpush1.bf16.msra.mxu0 %v553
    %619 = vmatprep.subr.bf16.mxu0 %v556
    %620 = vmatpush1.bf16.msra.mxu0 %v555
    %621 = vmatprep.subr.bf16.mxu0 %v558
    %622 = vmatpush1.bf16.msra.mxu0 %v557
    %623 = vmatprep.subr.bf16.mxu0 %v560
    %624 = vmatpush1.bf16.msra.mxu0 %v559
    %625 = vmatprep.subr.bf16.mxu0 %v562
    %626 = vmatpush1.bf16.msra.mxu0 %v561
    %627 = vmatprep.subr.bf16.mxu0 %v564
    %628 = vmatpush1.bf16.msra.mxu0 %v563
    %629 = vmatprep.subr.bf16.mxu0 %v566
    %630 = vmatpush1.bf16.msra.mxu0 %v565
    %631 = vmatprep.subr.bf16.mxu0 %v568
    %632 = vmatpush1.bf16.msra.mxu0 %v567
    %633 = vmatprep.subr.bf16.mxu0 %v570
    %634 = vmatpush1.bf16.msra.mxu0 %v569
    %635 = vmatprep.mubr.bf16.mxu0 %v412
    %636 = vmatmul.mubr.bf16.gmra.mrb[0].mxu0 %v411
    %v637 = vpop.f32.mrb[0].mxu0
    %v638 = vadd.f32 0.0, %v637
    %v639 = vpop.f32.mrb[0].mxu0
    %v640 = vadd.f32 0.0, %v639
    %v641 = vpop.f32.mrb[0].mxu0
    %v642 = vadd.f32 0.0, %v641
    %v643 = vpop.f32.mrb[0].mxu0
    %v644 = vadd.f32 0.0, %v643
    %645 = vmatprep.mubr.bf16.mxu0 %v414
    %646 = vmatmul.mubr.bf16.gmra.mrb[0].mxu0 %v413
    %v647 = vpop.f32.mrb[0].mxu0
    %v648 = vadd.f32 0.0, %v647
    %v649 = vpop.f32.mrb[0].mxu0
    %v650 = vadd.f32 0.0, %v649
    %v651 = vpop.f32.mrb[0].mxu0
    %v652 = vadd.f32 0.0, %v651
    %v653 = vpop.f32.mrb[0].mxu0
    %v654 = vadd.f32 0.0, %v653
    %655 = vmatprep.mubr.bf16.mxu0 %v416
    %656 = vmatmul.mubr.bf16.gmra.mrb[0].mxu0 %v415
    %v657 = vpop.f32.mrb[0].mxu0
    %v658 = vadd.f32 0.0, %v657
    %v659 = vpop.f32.mrb[0].mxu0
    %v660 = vadd.f32 0.0, %v659
    %v661 = vpop.f32.mrb[0].mxu0
    %v662 = vadd.f32 0.0, %v661
    %v663 = vpop.f32.mrb[0].mxu0
    %v664 = vadd.f32 0.0, %v663
    %665 = vmatprep.mubr.bf16.mxu0 %v418
    %666 = vmatmul.mubr.bf16.gmra.mrb[0].mxu0 %v417
    %v667 = vpop.f32.mrb[0].mxu0
    %v668 = vadd.f32 0.0, %v667
    %v669 = vpop.f32.mrb[0].mxu0
    %v670 = vadd.f32 0.0, %v669
    %v671 = vpop.f32.mrb[0].mxu0
    %v672 = vadd.f32 0.0, %v671
    %v673 = vpop.f32.mrb[0].mxu0
    %v674 = vadd.f32 0.0, %v673
    %675 = vmatprep.mubr.bf16.mxu0 %v420
    %676 = vmatmul.mubr.bf16.gmra.mrb[0].mxu0 %v419
    %v677 = vpop.f32.mrb[0].mxu0
    %v678 = vadd.f32 0.0, %v677
    %v679 = vpop.f32.mrb[0].mxu0
    %v680 = vadd.f32 0.0, %v679
    %v681 = vpop.f32.mrb[0].mxu0
    %v682 = vadd.f32 0.0, %v681
    %v683 = vpop.f32.mrb[0].mxu0
    %v684 = vadd.f32 0.0, %v683
    %685 = vmatprep.mubr.bf16.mxu0 %v422
    %686 = vmatmul.mubr.bf16.gmra.mrb[0].mxu0 %v421
    %v687 = vpop.f32.mrb[0].mxu0
    %v688 = vadd.f32 0.0, %v687
    %v689 = vpop.f32.mrb[0].mxu0
    %v690 = vadd.f32 0.0, %v689
    %v691 = vpop.f32.mrb[0].mxu0
    %v692 = vadd.f32 0.0, %v691
    %v693 = vpop.f32.mrb[0].mxu0
    %v694 = vadd.f32 0.0, %v693
    %695 = vmatprep.mubr.bf16.mxu0 %v424
    %696 = vmatmul.mubr.bf16.gmra.mrb[0].mxu0 %v423
    %v697 = vpop.f32.mrb[0].mxu0
    %v698 = vadd.f32 0.0, %v697
    %v699 = vpop.f32.mrb[0].mxu0
    %v700 = vadd.f32 0.0, %v699
    %v701 = vpop.f32.mrb[0].mxu0
    %v702 = vadd.f32 0.0, %v701
    %v703 = vpop.f32.mrb[0].mxu0
    %v704 = vadd.f32 0.0, %v703
    %705 = vmatprep.mubr.bf16.mxu0 %v426
    %706 = vmatmul.mubr.bf16.gmra.mrb[0].mxu0 %v425
    %v707 = vpop.f32.mrb[0].mxu0
    %v708 = vadd.f32 0.0, %v707
    %v709 = vpop.f32.mrb[0].mxu0
    %v710 = vadd.f32 0.0, %v709
    %v711 = vpop.f32.mrb[0].mxu0
    %v712 = vadd.f32 0.0, %v711
    %v713 = vpop.f32.mrb[0].mxu0
    %v714 = vadd.f32 0.0, %v713
    %715 = vdwg.mxu0
    %v732 = vunpack.c.l.b16 %v55
    %v733 = vunpack.c.h.b16 %v55
    %v734 = vunpack.c.l.b16 %v56
    %v735 = vunpack.c.h.b16 %v56
    %v736 = vunpack.c.l.b16 %v57
    %v737 = vunpack.c.h.b16 %v57
    %v738 = vunpack.c.l.b16 %v58
    %v739 = vunpack.c.h.b16 %v58
    %v740 = vunpack.c.l.b16 %v59
    %v741 = vunpack.c.h.b16 %v59
    %v742 = vunpack.c.l.b16 %v60
    %v743 = vunpack.c.h.b16 %v60
    %v744 = vunpack.c.l.b16 %v61
    %v745 = vunpack.c.h.b16 %v61
    %v746 = vunpack.c.l.b16 %v62
    %v747 = vunpack.c.h.b16 %v62
    %v748 = vunpack.c.l.b16 %v63
    %v749 = vunpack.c.h.b16 %v63
    %v750 = vunpack.c.l.b16 %v64
    %v751 = vunpack.c.h.b16 %v64
    %v752 = vunpack.c.l.b16 %v65
    %v753 = vunpack.c.h.b16 %v65
    %v754 = vunpack.c.l.b16 %v66
    %v755 = vunpack.c.h.b16 %v66
    %v756 = vunpack.c.l.b16 %v67
    %v757 = vunpack.c.h.b16 %v67
    %v758 = vunpack.c.l.b16 %v68
    %v759 = vunpack.c.h.b16 %v68
    %v760 = vunpack.c.l.b16 %v69
    %v761 = vunpack.c.h.b16 %v69
    %v762 = vunpack.c.l.b16 %v70
    %v763 = vunpack.c.h.b16 %v70
    %v764 = vpack.c.b16 %v734, %v732
    %v765 = vpack.c.b16 %v735, %v733
    %v766 = vpack.c.b16 %v738, %v736
    %v767 = vpack.c.b16 %v739, %v737
    %v768 = vpack.c.b16 %v742, %v740
    %v769 = vpack.c.b16 %v743, %v741
    %v770 = vpack.c.b16 %v746, %v744
    %v771 = vpack.c.b16 %v747, %v745
    %v772 = vpack.c.b16 %v750, %v748
    %v773 = vpack.c.b16 %v751, %v749
    %v774 = vpack.c.b16 %v754, %v752
    %v775 = vpack.c.b16 %v755, %v753
    %v776 = vpack.c.b16 %v758, %v756
    %v777 = vpack.c.b16 %v759, %v757
    %v778 = vpack.c.b16 %v762, %v760
    %v779 = vpack.c.b16 %v763, %v761
    %v828 = vunpack.c.l.b16 %v71
    %v829 = vunpack.c.h.b16 %v71
    %v830 = vunpack.c.l.b16 %v72
    %v831 = vunpack.c.h.b16 %v72
    %v832 = vunpack.c.l.b16 %v73
    %v833 = vunpack.c.h.b16 %v73
    %v834 = vunpack.c.l.b16 %v74
    %v835 = vunpack.c.h.b16 %v74
    %v836 = vunpack.c.l.b16 %v75
    %v837 = vunpack.c.h.b16 %v75
    %v838 = vunpack.c.l.b16 %v76
    %v839 = vunpack.c.h.b16 %v76
    %v840 = vunpack.c.l.b16 %v77
    %v841 = vunpack.c.h.b16 %v77
    %v842 = vunpack.c.l.b16 %v78
    %v843 = vunpack.c.h.b16 %v78
    %v844 = vunpack.c.l.b16 %v79
    %v845 = vunpack.c.h.b16 %v79
    %v846 = vunpack.c.l.b16 %v80
    %v847 = vunpack.c.h.b16 %v80
    %v848 = vunpack.c.l.b16 %v81
    %v849 = vunpack.c.h.b16 %v81
    %v850 = vunpack.c.l.b16 %v82
    %v851 = vunpack.c.h.b16 %v82
    %v852 = vunpack.c.l.b16 %v83
    %v853 = vunpack.c.h.b16 %v83
    %v854 = vunpack.c.l.b16 %v84
    %v855 = vunpack.c.h.b16 %v84
    %v856 = vunpack.c.l.b16 %v85
    %v857 = vunpack.c.h.b16 %v85
    %v858 = vunpack.c.l.b16 %v86
    %v859 = vunpack.c.h.b16 %v86
    %v860 = vunpack.c.l.b16 %v87
    %v861 = vunpack.c.h.b16 %v87
    %v862 = vunpack.c.l.b16 %v88
    %v863 = vunpack.c.h.b16 %v88
    %v864 = vunpack.c.l.b16 %v89
    %v865 = vunpack.c.h.b16 %v89
    %v866 = vunpack.c.l.b16 %v90
    %v867 = vunpack.c.h.b16 %v90
    %v868 = vunpack.c.l.b16 %v91
    %v869 = vunpack.c.h.b16 %v91
    %v870 = vunpack.c.l.b16 %v92
    %v871 = vunpack.c.h.b16 %v92
    %v872 = vunpack.c.l.b16 %v93
    %v873 = vunpack.c.h.b16 %v93
    %v874 = vunpack.c.l.b16 %v94
    %v875 = vunpack.c.h.b16 %v94
    %v876 = vunpack.c.l.b16 %v95
    %v877 = vunpack.c.h.b16 %v95
    %v878 = vunpack.c.l.b16 %v96
    %v879 = vunpack.c.h.b16 %v96
    %v880 = vunpack.c.l.b16 %v97
    %v881 = vunpack.c.h.b16 %v97
    %v882 = vunpack.c.l.b16 %v98
    %v883 = vunpack.c.h.b16 %v98
    %v884 = vunpack.c.l.b16 %v99
    %v885 = vunpack.c.h.b16 %v99
    %v886 = vunpack.c.l.b16 %v100
    %v887 = vunpack.c.h.b16 %v100
    %v888 = vunpack.c.l.b16 %v101
    %v889 = vunpack.c.h.b16 %v101
    %v890 = vunpack.c.l.b16 %v102
    %v891 = vunpack.c.h.b16 %v102
    %v892 = vpack.c.b16 %v830, %v828
    %v893 = vpack.c.b16 %v831, %v829
    %v894 = vpack.c.b16 %v834, %v832
    %v895 = vpack.c.b16 %v835, %v833
    %v896 = vpack.c.b16 %v838, %v836
    %v897 = vpack.c.b16 %v839, %v837
    %v898 = vpack.c.b16 %v842, %v840
    %v899 = vpack.c.b16 %v843, %v841
    %v900 = vpack.c.b16 %v846, %v844
    %v901 = vpack.c.b16 %v847, %v845
    %v902 = vpack.c.b16 %v850, %v848
    %v903 = vpack.c.b16 %v851, %v849
    %v904 = vpack.c.b16 %v854, %v852
    %v905 = vpack.c.b16 %v855, %v853
    %v906 = vpack.c.b16 %v858, %v856
    %v907 = vpack.c.b16 %v859, %v857
    %v908 = vpack.c.b16 %v862, %v860
    %v909 = vpack.c.b16 %v863, %v861
    %v910 = vpack.c.b16 %v866, %v864
    %v911 = vpack.c.b16 %v867, %v865
    %v912 = vpack.c.b16 %v870, %v868
    %v913 = vpack.c.b16 %v871, %v869
    %v914 = vpack.c.b16 %v874, %v872
    %v915 = vpack.c.b16 %v875, %v873
    %v916 = vpack.c.b16 %v878, %v876
    %v917 = vpack.c.b16 %v879, %v877
    %v918 = vpack.c.b16 %v882, %v880
    %v919 = vpack.c.b16 %v883, %v881
    %v920 = vpack.c.b16 %v886, %v884
    %v921 = vpack.c.b16 %v887, %v885
    %v922 = vpack.c.b16 %v890, %v888
    %v923 = vpack.c.b16 %v891, %v889
    %956 = vmatprep.subr.bf16.mxu0 %v893
    %957 = vmatpush1.bf16.msra.mxu0 %v892
    %958 = vmatprep.subr.bf16.mxu0 %v895
    %959 = vmatpush1.bf16.msra.mxu0 %v894
    %960 = vmatprep.subr.bf16.mxu0 %v897
    %961 = vmatpush1.bf16.msra.mxu0 %v896
    %962 = vmatprep.subr.bf16.mxu0 %v899
    %963 = vmatpush1.bf16.msra.mxu0 %v898
    %964 = vmatprep.subr.bf16.mxu0 %v901
    %965 = vmatpush1.bf16.msra.mxu0 %v900
    %966 = vmatprep.subr.bf16.mxu0 %v903
    %967 = vmatpush1.bf16.msra.mxu0 %v902
    %968 = vmatprep.subr.bf16.mxu0 %v905
    %969 = vmatpush1.bf16.msra.mxu0 %v904
    %970 = vmatprep.subr.bf16.mxu0 %v907
    %971 = vmatpush1.bf16.msra.mxu0 %v906
    %972 = vmatprep.subr.bf16.mxu0 %v909
    %973 = vmatpush1.bf16.msra.mxu0 %v908
    %974 = vmatprep.subr.bf16.mxu0 %v911
    %975 = vmatpush1.bf16.msra.mxu0 %v910
    %976 = vmatprep.subr.bf16.mxu0 %v913
    %977 = vmatpush1.bf16.msra.mxu0 %v912
    %978 = vmatprep.subr.bf16.mxu0 %v915
    %979 = vmatpush1.bf16.msra.mxu0 %v914
    %980 = vmatprep.subr.bf16.mxu0 %v917
    %981 = vmatpush1.bf16.msra.mxu0 %v916
    %982 = vmatprep.subr.bf16.mxu0 %v919
    %983 = vmatpush1.bf16.msra.mxu0 %v918
    %984 = vmatprep.subr.bf16.mxu0 %v921
    %985 = vmatpush1.bf16.msra.mxu0 %v920
    %986 = vmatprep.subr.bf16.mxu0 %v923
    %987 = vmatpush1.bf16.msra.mxu0 %v922
    %988 = vmatprep.mubr.bf16.mxu0 %v765
    %989 = vmatmul.mubr.bf16.gmra.mrb[0].mxu0 %v764
    %v990 = vpop.f32.mrb[0].mxu0
    %v991 = vadd.f32 %v638, %v990
    %v992 = vpop.f32.mrb[0].mxu0
    %v993 = vadd.f32 %v640, %v992
    %v994 = vpop.f32.mrb[0].mxu0
    %v995 = vadd.f32 %v642, %v994
    %v996 = vpop.f32.mrb[0].mxu0
    %v997 = vadd.f32 %v644, %v996
    %998 = vmatprep.mubr.bf16.mxu0 %v767
    %999 = vmatmul.mubr.bf16.gmra.mrb[0].mxu0 %v766
    %v1000 = vpop.f32.mrb[0].mxu0
    %v1001 = vadd.f32 %v648, %v1000
    %v1002 = vpop.f32.mrb[0].mxu0
    %v1003 = vadd.f32 %v650, %v1002
    %v1004 = vpop.f32.mrb[0].mxu0
    %v1005 = vadd.f32 %v652, %v1004
    %v1006 = vpop.f32.mrb[0].mxu0
    %v1007 = vadd.f32 %v654, %v1006
    %1008 = vmatprep.mubr.bf16.mxu0 %v769
    %1009 = vmatmul.mubr.bf16.gmra.mrb[0].mxu0 %v768
    %v1010 = vpop.f32.mrb[0].mxu0
    %v1011 = vadd.f32 %v658, %v1010
    %v1012 = vpop.f32.mrb[0].mxu0
    %v1013 = vadd.f32 %v660, %v1012
    %v1014 = vpop.f32.mrb[0].mxu0
    %v1015 = vadd.f32 %v662, %v1014
    %v1016 = vpop.f32.mrb[0].mxu0
    %v1017 = vadd.f32 %v664, %v1016
    %1018 = vmatprep.mubr.bf16.mxu0 %v771
    %1019 = vmatmul.mubr.bf16.gmra.mrb[0].mxu0 %v770
    %v1020 = vpop.f32.mrb[0].mxu0
    %v1021 = vadd.f32 %v668, %v1020
    %v1022 = vpop.f32.mrb[0].mxu0
    %v1023 = vadd.f32 %v670, %v1022
    %v1024 = vpop.f32.mrb[0].mxu0
    %v1025 = vadd.f32 %v672, %v1024
    %v1026 = vpop.f32.mrb[0].mxu0
    %v1027 = vadd.f32 %v674, %v1026
    %1028 = vmatprep.mubr.bf16.mxu0 %v773
    %1029 = vmatmul.mubr.bf16.gmra.mrb[0].mxu0 %v772
    %v1030 = vpop.f32.mrb[0].mxu0
    %v1031 = vadd.f32 %v678, %v1030
    %v1032 = vpop.f32.mrb[0].mxu0
    %v1033 = vadd.f32 %v680, %v1032
    %v1034 = vpop.f32.mrb[0].mxu0
    %v1035 = vadd.f32 %v682, %v1034
    %v1036 = vpop.f32.mrb[0].mxu0
    %v1037 = vadd.f32 %v684, %v1036
    %1038 = vmatprep.mubr.bf16.mxu0 %v775
    %1039 = vmatmul.mubr.bf16.gmra.mrb[0].mxu0 %v774
    %v1040 = vpop.f32.mrb[0].mxu0
    %v1041 = vadd.f32 %v688, %v1040
    %v1042 = vpop.f32.mrb[0].mxu0
    %v1043 = vadd.f32 %v690, %v1042
    %v1044 = vpop.f32.mrb[0].mxu0
    %v1045 = vadd.f32 %v692, %v1044
    %v1046 = vpop.f32.mrb[0].mxu0
    %v1047 = vadd.f32 %v694, %v1046
    %1048 = vmatprep.mubr.bf16.mxu0 %v777
    %1049 = vmatmul.mubr.bf16.gmra.mrb[0].mxu0 %v776
    %v1050 = vpop.f32.mrb[0].mxu0
    %v1051 = vadd.f32 %v698, %v1050
    %v1052 = vpop.f32.mrb[0].mxu0
    %v1053 = vadd.f32 %v700, %v1052
    %v1054 = vpop.f32.mrb[0].mxu0
    %v1055 = vadd.f32 %v702, %v1054
    %v1056 = vpop.f32.mrb[0].mxu0
    %v1057 = vadd.f32 %v704, %v1056
    %1058 = vmatprep.mubr.bf16.mxu0 %v779
    %1059 = vmatmul.mubr.bf16.gmra.mrb[0].mxu0 %v778
    %v1060 = vpop.f32.mrb[0].mxu0
    %v1061 = vadd.f32 %v708, %v1060
    %v1062 = vpop.f32.mrb[0].mxu0
    %v1063 = vadd.f32 %v710, %v1062
    %v1064 = vpop.f32.mrb[0].mxu0
    %v1065 = vadd.f32 %v712, %v1064
    %v1066 = vpop.f32.mrb[0].mxu0
    %v1067 = vadd.f32 %v714, %v1066
    %1068 = vdwg.mxu0
    %v1069 = vld [vmem:[%s0] sm:$0xee]
    %v1070 = vld [vmem:[%s0 + $0x10] sm:$0xee]
    %v1071 = vld [vmem:[%s0 + $0x20] sm:$0xee]
    %v1072 = vld [vmem:[%s0 + $0x30] sm:$0xee]
    %v1073 = vld [vmem:[%s0 + $0x40] sm:$0xee]
    %v1074 = vld [vmem:[%s0 + $0x50] sm:$0xee]
    %v1075 = vld [vmem:[%s0 + $0x60] sm:$0xee]
    %v1076 = vld [vmem:[%s0 + $0x70] sm:$0xee]
    %v1077 = vld [vmem:[%s0 + $0xa0] sm:$0xee]
    %v1078 = vld [vmem:[%s0 + $0xb0] sm:$0xee]
    %v1079 = vld [vmem:[%s0 + $0xc0] sm:$0xee]
    %v1080 = vld [vmem:[%s0 + $0xd0] sm:$0xee]
    %v1081 = vld [vmem:[%s0 + $0xe0] sm:$0xee]
    %v1082 = vld [vmem:[%s0 + $0xf0] sm:$0xee]
    %v1083 = vld [vmem:[%s0 + $0x100] sm:$0xee]
    %v1084 = vld [vmem:[%s0 + $0x110] sm:$0xee]
    %vm1117 = vcmask 1042432
    %vm1118 = vcmask 1046532
    %vm1119 = vmor %vm1117, %vm1118
    %v1120 = vrot.slane %v1069, 5
    %v1121 = vrot.slane %v1120, 4
    %v1122 = vrot.slane %v103, 5
    %v1123 = vsel %vm1119, %v1121, %v1122
    %v1124 = vrot.slane %v1070, 5
    %v1125 = vrot.slane %v1124, 4
    %v1126 = vrot.slane %v104, 5
    %v1127 = vsel %vm1119, %v1125, %v1126
    %v1128 = vrot.slane %v1071, 5
    %v1129 = vrot.slane %v1128, 4
    %v1130 = vrot.slane %v105, 5
    %v1131 = vsel %vm1119, %v1129, %v1130
    %v1132 = vrot.slane %v1072, 5
    %v1133 = vrot.slane %v1132, 4
    %v1134 = vrot.slane %v106, 5
    %v1135 = vsel %vm1119, %v1133, %v1134
    %v1136 = vrot.slane %v1073, 5
    %v1137 = vrot.slane %v1136, 4
    %v1138 = vrot.slane %v107, 5
    %v1139 = vsel %vm1119, %v1137, %v1138
    %v1140 = vrot.slane %v1074, 5
    %v1141 = vrot.slane %v1140, 4
    %v1142 = vrot.slane %v108, 5
    %v1143 = vsel %vm1119, %v1141, %v1142
    %v1144 = vrot.slane %v1075, 5
    %v1145 = vrot.slane %v1144, 4
    %v1146 = vrot.slane %v109, 5
    %v1147 = vsel %vm1119, %v1145, %v1146
    %v1148 = vrot.slane %v1076, 5
    %v1149 = vrot.slane %v1148, 4
    %v1150 = vrot.slane %v110, 5
    %v1151 = vsel %vm1119, %v1149, %v1150
    %v1152 = vrot.slane %v1077, 5
    %v1153 = vrot.slane %v1152, 4
    %v1154 = vrot.slane %v111, 5
    %v1155 = vsel %vm1119, %v1153, %v1154
    %v1156 = vrot.slane %v1078, 5
    %v1157 = vrot.slane %v1156, 4
    %v1158 = vrot.slane %v112, 5
    %v1159 = vsel %vm1119, %v1157, %v1158
    %v1160 = vrot.slane %v1079, 5
    %v1161 = vrot.slane %v1160, 4
    %v1162 = vrot.slane %v113, 5
    %v1163 = vsel %vm1119, %v1161, %v1162
    %v1164 = vrot.slane %v1080, 5
    %v1165 = vrot.slane %v1164, 4
    %v1166 = vrot.slane %v114, 5
    %v1167 = vsel %vm1119, %v1165, %v1166
    %v1168 = vrot.slane %v1081, 5
    %v1169 = vrot.slane %v1168, 4
    %v1170 = vrot.slane %v115, 5
    %v1171 = vsel %vm1119, %v1169, %v1170
    %v1172 = vrot.slane %v1082, 5
    %v1173 = vrot.slane %v1172, 4
    %v1174 = vrot.slane %v116, 5
    %v1175 = vsel %vm1119, %v1173, %v1174
    %v1176 = vrot.slane %v1083, 5
    %v1177 = vrot.slane %v1176, 4
    %v1178 = vrot.slane %v117, 5
    %v1179 = vsel %vm1119, %v1177, %v1178
    %v1180 = vrot.slane %v1084, 5
    %v1181 = vrot.slane %v1180, 4
    %v1182 = vrot.slane %v118, 5
    %v1183 = vsel %vm1119, %v1181, %v1182
    %s1184 = scalar_lea.vmem [#allocation2], 512
    %v1185 = vld [vmem:[%s1184] sm:$0xff]
    %v1186 = vld [vmem:[%s1184 + $0x8] sm:$0xff]
    %v1187 = vld [vmem:[%s1184 + $0x10] sm:$0xff]
    %v1188 = vld [vmem:[%s1184 + $0x18] sm:$0xff]
    %v1189 = vld [vmem:[%s1184 + $0x20] sm:$0xff]
    %v1190 = vld [vmem:[%s1184 + $0x28] sm:$0xff]
    %v1191 = vld [vmem:[%s1184 + $0x30] sm:$0xff]
    %v1192 = vld [vmem:[%s1184 + $0x38] sm:$0xff]
    %v1193 = vld [vmem:[%s1184 + $0x40] sm:$0xff]
    %v1194 = vld [vmem:[%s1184 + $0x48] sm:$0xff]
    %v1195 = vld [vmem:[%s1184 + $0x50] sm:$0xff]
    %v1196 = vld [vmem:[%s1184 + $0x58] sm:$0xff]
    %v1197 = vld [vmem:[%s1184 + $0x60] sm:$0xff]
    %v1198 = vld [vmem:[%s1184 + $0x68] sm:$0xff]
    %v1199 = vld [vmem:[%s1184 + $0x70] sm:$0xff]
    %v1200 = vld [vmem:[%s1184 + $0x78] sm:$0xff]
    %v1201 = vld [vmem:[%s1184 + $0x80] sm:$0xff]
    %v1202 = vld [vmem:[%s1184 + $0x88] sm:$0xff]
    %v1203 = vld [vmem:[%s1184 + $0x90] sm:$0xff]
    %v1204 = vld [vmem:[%s1184 + $0x98] sm:$0xff]
    %v1205 = vld [vmem:[%s1184 + $0xa0] sm:$0xff]
    %v1206 = vld [vmem:[%s1184 + $0xa8] sm:$0xff]
    %v1207 = vld [vmem:[%s1184 + $0xb0] sm:$0xff]
    %v1208 = vld [vmem:[%s1184 + $0xb8] sm:$0xff]
    %v1209 = vld [vmem:[%s1184 + $0xc0] sm:$0xff]
    %v1210 = vld [vmem:[%s1184 + $0xc8] sm:$0xff]
    %v1211 = vld [vmem:[%s1184 + $0xd0] sm:$0xff]
    %v1212 = vld [vmem:[%s1184 + $0xd8] sm:$0xff]
    %v1213 = vld [vmem:[%s1184 + $0xe0] sm:$0xff]
    %v1214 = vld [vmem:[%s1184 + $0xe8] sm:$0xff]
    %v1215 = vld [vmem:[%s1184 + $0xf0] sm:$0xff]
    %v1216 = vld [vmem:[%s1184 + $0xf8] sm:$0xff]
    %v1217 = vunpack.c.l.b16 %v1123
    %v1218 = vunpack.c.h.b16 %v1123
    %v1219 = vunpack.c.l.b16 %v1127
    %v1220 = vunpack.c.h.b16 %v1127
    %v1221 = vunpack.c.l.b16 %v1131
    %v1222 = vunpack.c.h.b16 %v1131
    %v1223 = vunpack.c.l.b16 %v1135
    %v1224 = vunpack.c.h.b16 %v1135
    %v1225 = vunpack.c.l.b16 %v1139
    %v1226 = vunpack.c.h.b16 %v1139
    %v1227 = vunpack.c.l.b16 %v1143
    %v1228 = vunpack.c.h.b16 %v1143
    %v1229 = vunpack.c.l.b16 %v1147
    %v1230 = vunpack.c.h.b16 %v1147
    %v1231 = vunpack.c.l.b16 %v1151
    %v1232 = vunpack.c.h.b16 %v1151
    %v1233 = vunpack.c.l.b16 %v1155
    %v1234 = vunpack.c.h.b16 %v1155
    %v1235 = vunpack.c.l.b16 %v1159
    %v1236 = vunpack.c.h.b16 %v1159
    %v1237 = vunpack.c.l.b16 %v1163
    %v1238 = vunpack.c.h.b16 %v1163
    %v1239 = vunpack.c.l.b16 %v1167
    %v1240 = vunpack.c.h.b16 %v1167
    %v1241 = vunpack.c.l.b16 %v1171
    %v1242 = vunpack.c.h.b16 %v1171
    %v1243 = vunpack.c.l.b16 %v1175
    %v1244 = vunpack.c.h.b16 %v1175
    %v1245 = vunpack.c.l.b16 %v1179
    %v1246 = vunpack.c.h.b16 %v1179
    %v1247 = vunpack.c.l.b16 %v1183
    %v1248 = vunpack.c.h.b16 %v1183
    %v1249 = vpack.c.b16 %v1219, %v1217
    %v1250 = vpack.c.b16 %v1220, %v1218
    %v1251 = vpack.c.b16 %v1223, %v1221
    %v1252 = vpack.c.b16 %v1224, %v1222
    %v1253 = vpack.c.b16 %v1227, %v1225
    %v1254 = vpack.c.b16 %v1228, %v1226
    %v1255 = vpack.c.b16 %v1231, %v1229
    %v1256 = vpack.c.b16 %v1232, %v1230
    %v1257 = vpack.c.b16 %v1235, %v1233
    %v1258 = vpack.c.b16 %v1236, %v1234
    %v1259 = vpack.c.b16 %v1239, %v1237
    %v1260 = vpack.c.b16 %v1240, %v1238
    %v1261 = vpack.c.b16 %v1243, %v1241
    %v1262 = vpack.c.b16 %v1244, %v1242
    %v1263 = vpack.c.b16 %v1247, %v1245
    %v1264 = vpack.c.b16 %v1248, %v1246
    %v1313 = vunpack.c.l.b16 %v1185
    %v1314 = vunpack.c.h.b16 %v1185
    %v1315 = vunpack.c.l.b16 %v1186
    %v1316 = vunpack.c.h.b16 %v1186
    %v1317 = vunpack.c.l.b16 %v1187
    %v1318 = vunpack.c.h.b16 %v1187
    %v1319 = vunpack.c.l.b16 %v1188
    %v1320 = vunpack.c.h.b16 %v1188
    %v1321 = vunpack.c.l.b16 %v1189
    %v1322 = vunpack.c.h.b16 %v1189
    %v1323 = vunpack.c.l.b16 %v1190
    %v1324 = vunpack.c.h.b16 %v1190
    %v1325 = vunpack.c.l.b16 %v1191
    %v1326 = vunpack.c.h.b16 %v1191
    %v1327 = vunpack.c.l.b16 %v1192
    %v1328 = vunpack.c.h.b16 %v1192
    %v1329 = vunpack.c.l.b16 %v1193
    %v1330 = vunpack.c.h.b16 %v1193
    %v1331 = vunpack.c.l.b16 %v1194
    %v1332 = vunpack.c.h.b16 %v1194
    %v1333 = vunpack.c.l.b16 %v1195
    %v1334 = vunpack.c.h.b16 %v1195
    %v1335 = vunpack.c.l.b16 %v1196
    %v1336 = vunpack.c.h.b16 %v1196
    %v1337 = vunpack.c.l.b16 %v1197
    %v1338 = vunpack.c.h.b16 %v1197
    %v1339 = vunpack.c.l.b16 %v1198
    %v1340 = vunpack.c.h.b16 %v1198
    %v1341 = vunpack.c.l.b16 %v1199
    %v1342 = vunpack.c.h.b16 %v1199
    %v1343 = vunpack.c.l.b16 %v1200
    %v1344 = vunpack.c.h.b16 %v1200
    %v1345 = vunpack.c.l.b16 %v1201
    %v1346 = vunpack.c.h.b16 %v1201
    %v1347 = vunpack.c.l.b16 %v1202
    %v1348 = vunpack.c.h.b16 %v1202
    %v1349 = vunpack.c.l.b16 %v1203
    %v1350 = vunpack.c.h.b16 %v1203
    %v1351 = vunpack.c.l.b16 %v1204
    %v1352 = vunpack.c.h.b16 %v1204
    %v1353 = vunpack.c.l.b16 %v1205
    %v1354 = vunpack.c.h.b16 %v1205
    %v1355 = vunpack.c.l.b16 %v1206
    %v1356 = vunpack.c.h.b16 %v1206
    %v1357 = vunpack.c.l.b16 %v1207
    %v1358 = vunpack.c.h.b16 %v1207
    %v1359 = vunpack.c.l.b16 %v1208
    %v1360 = vunpack.c.h.b16 %v1208
    %v1361 = vunpack.c.l.b16 %v1209
    %v1362 = vunpack.c.h.b16 %v1209
    %v1363 = vunpack.c.l.b16 %v1210
    %v1364 = vunpack.c.h.b16 %v1210
    %v1365 = vunpack.c.l.b16 %v1211
    %v1366 = vunpack.c.h.b16 %v1211
    %v1367 = vunpack.c.l.b16 %v1212
    %v1368 = vunpack.c.h.b16 %v1212
    %v1369 = vunpack.c.l.b16 %v1213
    %v1370 = vunpack.c.h.b16 %v1213
    %v1371 = vunpack.c.l.b16 %v1214
    %v1372 = vunpack.c.h.b16 %v1214
    %v1373 = vunpack.c.l.b16 %v1215
    %v1374 = vunpack.c.h.b16 %v1215
    %v1375 = vunpack.c.l.b16 %v1216
    %v1376 = vunpack.c.h.b16 %v1216
    %v1377 = vpack.c.b16 %v1315, %v1313
    %v1378 = vpack.c.b16 %v1316, %v1314
    %v1379 = vpack.c.b16 %v1319, %v1317
    %v1380 = vpack.c.b16 %v1320, %v1318
    %v1381 = vpack.c.b16 %v1323, %v1321
    %v1382 = vpack.c.b16 %v1324, %v1322
    %v1383 = vpack.c.b16 %v1327, %v1325
    %v1384 = vpack.c.b16 %v1328, %v1326
    %v1385 = vpack.c.b16 %v1331, %v1329
    %v1386 = vpack.c.b16 %v1332, %v1330
    %v1387 = vpack.c.b16 %v1335, %v1333
    %v1388 = vpack.c.b16 %v1336, %v1334
    %v1389 = vpack.c.b16 %v1339, %v1337
    %v1390 = vpack.c.b16 %v1340, %v1338
    %v1391 = vpack.c.b16 %v1343, %v1341
    %v1392 = vpack.c.b16 %v1344, %v1342
    %v1393 = vpack.c.b16 %v1347, %v1345
    %v1394 = vpack.c.b16 %v1348, %v1346
    %v1395 = vpack.c.b16 %v1351, %v1349
    %v1396 = vpack.c.b16 %v1352, %v1350
    %v1397 = vpack.c.b16 %v1355, %v1353
    %v1398 = vpack.c.b16 %v1356, %v1354
    %v1399 = vpack.c.b16 %v1359, %v1357
    %v1400 = vpack.c.b16 %v1360, %v1358
    %v1401 = vpack.c.b16 %v1363, %v1361
    %v1402 = vpack.c.b16 %v1364, %v1362
    %v1403 = vpack.c.b16 %v1367, %v1365
    %v1404 = vpack.c.b16 %v1368, %v1366
    %v1405 = vpack.c.b16 %v1371, %v1369
    %v1406 = vpack.c.b16 %v1372, %v1370
    %v1407 = vpack.c.b16 %v1375, %v1373
    %v1408 = vpack.c.b16 %v1376, %v1374
    %1441 = vmatprep.subr.bf16.mxu0 %v1378
    %1442 = vmatpush1.bf16.msra.mxu0 %v1377
    %1443 = vmatprep.subr.bf16.mxu0 %v1380
    %1444 = vmatpush1.bf16.msra.mxu0 %v1379
    %1445 = vmatprep.subr.bf16.mxu0 %v1382
    %1446 = vmatpush1.bf16.msra.mxu0 %v1381
    %1447 = vmatprep.subr.bf16.mxu0 %v1384
    %1448 = vmatpush1.bf16.msra.mxu0 %v1383
    %1449 = vmatprep.subr.bf16.mxu0 %v1386
    %1450 = vmatpush1.bf16.msra.mxu0 %v1385
    %1451 = vmatprep.subr.bf16.mxu0 %v1388
    %1452 = vmatpush1.bf16.msra.mxu0 %v1387
    %1453 = vmatprep.subr.bf16.mxu0 %v1390
    %1454 = vmatpush1.bf16.msra.mxu0 %v1389
    %1455 = vmatprep.subr.bf16.mxu0 %v1392
    %1456 = vmatpush1.bf16.msra.mxu0 %v1391
    %1457 = vmatprep.subr.bf16.mxu0 %v1394
    %1458 = vmatpush1.bf16.msra.mxu0 %v1393
    %1459 = vmatprep.subr.bf16.mxu0 %v1396
    %1460 = vmatpush1.bf16.msra.mxu0 %v1395
    %1461 = vmatprep.subr.bf16.mxu0 %v1398
    %1462 = vmatpush1.bf16.msra.mxu0 %v1397
    %1463 = vmatprep.subr.bf16.mxu0 %v1400
    %1464 = vmatpush1.bf16.msra.mxu0 %v1399
    %1465 = vmatprep.subr.bf16.mxu0 %v1402
    %1466 = vmatpush1.bf16.msra.mxu0 %v1401
    %1467 = vmatprep.subr.bf16.mxu0 %v1404
    %1468 = vmatpush1.bf16.msra.mxu0 %v1403
    %1469 = vmatprep.subr.bf16.mxu0 %v1406
    %1470 = vmatpush1.bf16.msra.mxu0 %v1405
    %1471 = vmatprep.subr.bf16.mxu0 %v1408
    %1472 = vmatpush1.bf16.msra.mxu0 %v1407
    %1473 = vmatprep.mubr.bf16.mxu0 %v1250
    %1474 = vmatmul.mubr.bf16.gmra.mrb[0].mxu0 %v1249
    %v1475 = vpop.f32.mrb[0].mxu0
    %v1476 = vadd.f32 0.0, %v1475
    %v1477 = vpop.f32.mrb[0].mxu0
    %v1478 = vadd.f32 0.0, %v1477
    %v1479 = vpop.f32.mrb[0].mxu0
    %v1480 = vadd.f32 0.0, %v1479
    %v1481 = vpop.f32.mrb[0].mxu0
    %v1482 = vadd.f32 0.0, %v1481
    %1483 = vmatprep.mubr.bf16.mxu0 %v1252
    %1484 = vmatmul.mubr.bf16.gmra.mrb[0].mxu0 %v1251
    %v1485 = vpop.f32.mrb[0].mxu0
    %v1486 = vadd.f32 0.0, %v1485
    %v1487 = vpop.f32.mrb[0].mxu0
    %v1488 = vadd.f32 0.0, %v1487
    %v1489 = vpop.f32.mrb[0].mxu0
    %v1490 = vadd.f32 0.0, %v1489
    %v1491 = vpop.f32.mrb[0].mxu0
    %v1492 = vadd.f32 0.0, %v1491
    %1493 = vmatprep.mubr.bf16.mxu0 %v1254
    %1494 = vmatmul.mubr.bf16.gmra.mrb[0].mxu0 %v1253
    %v1495 = vpop.f32.mrb[0].mxu0
    %v1496 = vadd.f32 0.0, %v1495
    %v1497 = vpop.f32.mrb[0].mxu0
    %v1498 = vadd.f32 0.0, %v1497
    %v1499 = vpop.f32.mrb[0].mxu0
    %v1500 = vadd.f32 0.0, %v1499
    %v1501 = vpop.f32.mrb[0].mxu0
    %v1502 = vadd.f32 0.0, %v1501
    %1503 = vmatprep.mubr.bf16.mxu0 %v1256
    %1504 = vmatmul.mubr.bf16.gmra.mrb[0].mxu0 %v1255
    %v1505 = vpop.f32.mrb[0].mxu0
    %v1506 = vadd.f32 0.0, %v1505
    %v1507 = vpop.f32.mrb[0].mxu0
    %v1508 = vadd.f32 0.0, %v1507
    %v1509 = vpop.f32.mrb[0].mxu0
    %v1510 = vadd.f32 0.0, %v1509
    %v1511 = vpop.f32.mrb[0].mxu0
    %v1512 = vadd.f32 0.0, %v1511
    %1513 = vmatprep.mubr.bf16.mxu0 %v1258
    %1514 = vmatmul.mubr.bf16.gmra.mrb[0].mxu0 %v1257
    %v1515 = vpop.f32.mrb[0].mxu0
    %v1516 = vadd.f32 0.0, %v1515
    %v1517 = vpop.f32.mrb[0].mxu0
    %v1518 = vadd.f32 0.0, %v1517
    %v1519 = vpop.f32.mrb[0].mxu0
    %v1520 = vadd.f32 0.0, %v1519
    %v1521 = vpop.f32.mrb[0].mxu0
    %v1522 = vadd.f32 0.0, %v1521
    %1523 = vmatprep.mubr.bf16.mxu0 %v1260
    %1524 = vmatmul.mubr.bf16.gmra.mrb[0].mxu0 %v1259
    %v1525 = vpop.f32.mrb[0].mxu0
    %v1526 = vadd.f32 0.0, %v1525
    %v1527 = vpop.f32.mrb[0].mxu0
    %v1528 = vadd.f32 0.0, %v1527
    %v1529 = vpop.f32.mrb[0].mxu0
    %v1530 = vadd.f32 0.0, %v1529
    %v1531 = vpop.f32.mrb[0].mxu0
    %v1532 = vadd.f32 0.0, %v1531
    %1533 = vmatprep.mubr.bf16.mxu0 %v1262
    %1534 = vmatmul.mubr.bf16.gmra.mrb[0].mxu0 %v1261
    %v1535 = vpop.f32.mrb[0].mxu0
    %v1536 = vadd.f32 0.0, %v1535
    %v1537 = vpop.f32.mrb[0].mxu0
    %v1538 = vadd.f32 0.0, %v1537
    %v1539 = vpop.f32.mrb[0].mxu0
    %v1540 = vadd.f32 0.0, %v1539
    %v1541 = vpop.f32.mrb[0].mxu0
    %v1542 = vadd.f32 0.0, %v1541
    %1543 = vmatprep.mubr.bf16.mxu0 %v1264
    %1544 = vmatmul.mubr.bf16.gmra.mrb[0].mxu0 %v1263
    %v1545 = vpop.f32.mrb[0].mxu0
    %v1546 = vadd.f32 0.0, %v1545
    %v1547 = vpop.f32.mrb[0].mxu0
    %v1548 = vadd.f32 0.0, %v1547
    %v1549 = vpop.f32.mrb[0].mxu0
    %v1550 = vadd.f32 0.0, %v1549
    %v1551 = vpop.f32.mrb[0].mxu0
    %v1552 = vadd.f32 0.0, %v1551
    %1553 = vdwg.mxu0
    %v1554 = vadd.f32 %v991, %v1476
    %v1555 = vadd.f32 %v993, %v1478
    %v1556 = vadd.f32 %v995, %v1480
    %v1557 = vadd.f32 %v997, %v1482
    %v1558 = vadd.f32 %v1001, %v1486
    %v1559 = vadd.f32 %v1003, %v1488
    %v1560 = vadd.f32 %v1005, %v1490
    %v1561 = vadd.f32 %v1007, %v1492
    %v1562 = vadd.f32 %v1011, %v1496
    %v1563 = vadd.f32 %v1013, %v1498
    %v1564 = vadd.f32 %v1015, %v1500
    %v1565 = vadd.f32 %v1017, %v1502
    %v1566 = vadd.f32 %v1021, %v1506
    %v1567 = vadd.f32 %v1023, %v1508
    %v1568 = vadd.f32 %v1025, %v1510
    %v1569 = vadd.f32 %v1027, %v1512
    %v1570 = vadd.f32 %v1031, %v1516
    %v1571 = vadd.f32 %v1033, %v1518
    %v1572 = vadd.f32 %v1035, %v1520
    %v1573 = vadd.f32 %v1037, %v1522
    %v1574 = vadd.f32 %v1041, %v1526
    %v1575 = vadd.f32 %v1043, %v1528
    %v1576 = vadd.f32 %v1045, %v1530
    %v1577 = vadd.f32 %v1047, %v1532
    %v1578 = vadd.f32 %v1051, %v1536
    %v1579 = vadd.f32 %v1053, %v1538
    %v1580 = vadd.f32 %v1055, %v1540
    %v1581 = vadd.f32 %v1057, %v1542
    %v1582 = vadd.f32 %v1061, %v1546
    %v1583 = vadd.f32 %v1063, %v1548
    %v1584 = vadd.f32 %v1065, %v1550
    %v1585 = vadd.f32 %v1067, %v1552
    %s1586 = scalar_lea.vmem %s0, 16
    %v1587 = vld [vmem:[%s1586] sm:$0xff]
    %v1588 = vld [vmem:[%s1586 + $0x10] sm:$0xff]
    %v1589 = vld [vmem:[%s1586 + $0x20] sm:$0xff]
    %v1590 = vld [vmem:[%s1586 + $0x30] sm:$0xff]
    %v1591 = vld [vmem:[%s1586 + $0x40] sm:$0xff]
    %v1592 = vld [vmem:[%s1586 + $0x50] sm:$0xff]
    %v1593 = vld [vmem:[%s1586 + $0x60] sm:$0xff]
    %v1594 = vld [vmem:[%s1586 + $0x70] sm:$0xff]
    %v1595 = vld [vmem:[%s1586 + $0xa0] sm:$0xff]
    %v1596 = vld [vmem:[%s1586 + $0xb0] sm:$0xff]
    %v1597 = vld [vmem:[%s1586 + $0xc0] sm:$0xff]
    %v1598 = vld [vmem:[%s1586 + $0xd0] sm:$0xff]
    %v1599 = vld [vmem:[%s1586 + $0xe0] sm:$0xff]
    %v1600 = vld [vmem:[%s1586 + $0xf0] sm:$0xff]
    %v1601 = vld [vmem:[%s1586 + $0x100] sm:$0xff]
    %v1602 = vld [vmem:[%s1586 + $0x110] sm:$0xff]
    %s1603 = scalar_lea.vmem [#allocation2], 768
    %v1604 = vld [vmem:[%s1603] sm:$0xff]
    %v1605 = vld [vmem:[%s1603 + $0x8] sm:$0xff]
    %v1606 = vld [vmem:[%s1603 + $0x10] sm:$0xff]
    %v1607 = vld [vmem:[%s1603 + $0x18] sm:$0xff]
    %v1608 = vld [vmem:[%s1603 + $0x20] sm:$0xff]
    %v1609 = vld [vmem:[%s1603 + $0x28] sm:$0xff]
    %v1610 = vld [vmem:[%s1603 + $0x30] sm:$0xff]
    %v1611 = vld [vmem:[%s1603 + $0x38] sm:$0xff]
    %v1612 = vld [vmem:[%s1603 + $0x40] sm:$0xff]
    %v1613 = vld [vmem:[%s1603 + $0x48] sm:$0xff]
    %v1614 = vld [vmem:[%s1603 + $0x50] sm:$0xff]
    %v1615 = vld [vmem:[%s1603 + $0x58] sm:$0xff]
    %v1616 = vld [vmem:[%s1603 + $0x60] sm:$0xff]
    %v1617 = vld [vmem:[%s1603 + $0x68] sm:$0xff]
    %v1618 = vld [vmem:[%s1603 + $0x70] sm:$0xff]
    %v1619 = vld [vmem:[%s1603 + $0x78] sm:$0xff]
    %v1620 = vld [vmem:[%s1603 + $0x80] sm:$0xff]
    %v1621 = vld [vmem:[%s1603 + $0x88] sm:$0xff]
    %v1622 = vld [vmem:[%s1603 + $0x90] sm:$0xff]
    %v1623 = vld [vmem:[%s1603 + $0x98] sm:$0xff]
    %v1624 = vld [vmem:[%s1603 + $0xa0] sm:$0xff]
    %v1625 = vld [vmem:[%s1603 + $0xa8] sm:$0xff]
    %v1626 = vld [vmem:[%s1603 + $0xb0] sm:$0xff]
    %v1627 = vld [vmem:[%s1603 + $0xb8] sm:$0xff]
    %v1628 = vld [vmem:[%s1603 + $0xc0] sm:$0xff]
    %v1629 = vld [vmem:[%s1603 + $0xc8] sm:$0xff]
    %v1630 = vld [vmem:[%s1603 + $0xd0] sm:$0xff]
    %v1631 = vld [vmem:[%s1603 + $0xd8] sm:$0xff]
    %v1632 = vld [vmem:[%s1603 + $0xe0] sm:$0xff]
    %v1633 = vld [vmem:[%s1603 + $0xe8] sm:$0xff]
    %v1634 = vld [vmem:[%s1603 + $0xf0] sm:$0xff]
    %v1635 = vld [vmem:[%s1603 + $0xf8] sm:$0xff]
    %v1652 = vunpack.c.l.b16 %v1587
    %v1653 = vunpack.c.h.b16 %v1587
    %v1654 = vunpack.c.l.b16 %v1588
    %v1655 = vunpack.c.h.b16 %v1588
    %v1656 = vunpack.c.l.b16 %v1589
    %v1657 = vunpack.c.h.b16 %v1589
    %v1658 = vunpack.c.l.b16 %v1590
    %v1659 = vunpack.c.h.b16 %v1590
    %v1660 = vunpack.c.l.b16 %v1591
    %v1661 = vunpack.c.h.b16 %v1591
    %v1662 = vunpack.c.l.b16 %v1592
    %v1663 = vunpack.c.h.b16 %v1592
    %v1664 = vunpack.c.l.b16 %v1593
    %v1665 = vunpack.c.h.b16 %v1593
    %v1666 = vunpack.c.l.b16 %v1594
    %v1667 = vunpack.c.h.b16 %v1594
    %v1668 = vunpack.c.l.b16 %v1595
    %v1669 = vunpack.c.h.b16 %v1595
    %v1670 = vunpack.c.l.b16 %v1596
    %v1671 = vunpack.c.h.b16 %v1596
    %v1672 = vunpack.c.l.b16 %v1597
    %v1673 = vunpack.c.h.b16 %v1597
    %v1674 = vunpack.c.l.b16 %v1598
    %v1675 = vunpack.c.h.b16 %v1598
    %v1676 = vunpack.c.l.b16 %v1599
    %v1677 = vunpack.c.h.b16 %v1599
    %v1678 = vunpack.c.l.b16 %v1600
    %v1679 = vunpack.c.h.b16 %v1600
    %v1680 = vunpack.c.l.b16 %v1601
    %v1681 = vunpack.c.h.b16 %v1601
    %v1682 = vunpack.c.l.b16 %v1602
    %v1683 = vunpack.c.h.b16 %v1602
    %v1684 = vpack.c.b16 %v1654, %v1652
    %v1685 = vpack.c.b16 %v1655, %v1653
    %v1686 = vpack.c.b16 %v1658, %v1656
    %v1687 = vpack.c.b16 %v1659, %v1657
    %v1688 = vpack.c.b16 %v1662, %v1660
    %v1689 = vpack.c.b16 %v1663, %v1661
    %v1690 = vpack.c.b16 %v1666, %v1664
    %v1691 = vpack.c.b16 %v1667, %v1665
    %v1692 = vpack.c.b16 %v1670, %v1668
    %v1693 = vpack.c.b16 %v1671, %v1669
    %v1694 = vpack.c.b16 %v1674, %v1672
    %v1695 = vpack.c.b16 %v1675, %v1673
    %v1696 = vpack.c.b16 %v1678, %v1676
    %v1697 = vpack.c.b16 %v1679, %v1677
    %v1698 = vpack.c.b16 %v1682, %v1680
    %v1699 = vpack.c.b16 %v1683, %v1681
    %v1748 = vunpack.c.l.b16 %v1604
    %v1749 = vunpack.c.h.b16 %v1604
    %v1750 = vunpack.c.l.b16 %v1605
    %v1751 = vunpack.c.h.b16 %v1605
    %v1752 = vunpack.c.l.b16 %v1606
    %v1753 = vunpack.c.h.b16 %v1606
    %v1754 = vunpack.c.l.b16 %v1607
    %v1755 = vunpack.c.h.b16 %v1607
    %v1756 = vunpack.c.l.b16 %v1608
    %v1757 = vunpack.c.h.b16 %v1608
    %v1758 = vunpack.c.l.b16 %v1609
    %v1759 = vunpack.c.h.b16 %v1609
    %v1760 = vunpack.c.l.b16 %v1610
    %v1761 = vunpack.c.h.b16 %v1610
    %v1762 = vunpack.c.l.b16 %v1611
    %v1763 = vunpack.c.h.b16 %v1611
    %v1764 = vunpack.c.l.b16 %v1612
    %v1765 = vunpack.c.h.b16 %v1612
    %v1766 = vunpack.c.l.b16 %v1613
    %v1767 = vunpack.c.h.b16 %v1613
    %v1768 = vunpack.c.l.b16 %v1614
    %v1769 = vunpack.c.h.b16 %v1614
    %v1770 = vunpack.c.l.b16 %v1615
    %v1771 = vunpack.c.h.b16 %v1615
    %v1772 = vunpack.c.l.b16 %v1616
    %v1773 = vunpack.c.h.b16 %v1616
    %v1774 = vunpack.c.l.b16 %v1617
    %v1775 = vunpack.c.h.b16 %v1617
    %v1776 = vunpack.c.l.b16 %v1618
    %v1777 = vunpack.c.h.b16 %v1618
    %v1778 = vunpack.c.l.b16 %v1619
    %v1779 = vunpack.c.h.b16 %v1619
    %v1780 = vunpack.c.l.b16 %v1620
    %v1781 = vunpack.c.h.b16 %v1620
    %v1782 = vunpack.c.l.b16 %v1621
    %v1783 = vunpack.c.h.b16 %v1621
    %v1784 = vunpack.c.l.b16 %v1622
    %v1785 = vunpack.c.h.b16 %v1622
    %v1786 = vunpack.c.l.b16 %v1623
    %v1787 = vunpack.c.h.b16 %v1623
    %v1788 = vunpack.c.l.b16 %v1624
    %v1789 = vunpack.c.h.b16 %v1624
    %v1790 = vunpack.c.l.b16 %v1625
    %v1791 = vunpack.c.h.b16 %v1625
    %v1792 = vunpack.c.l.b16 %v1626
    %v1793 = vunpack.c.h.b16 %v1626
    %v1794 = vunpack.c.l.b16 %v1627
    %v1795 = vunpack.c.h.b16 %v1627
    %v1796 = vunpack.c.l.b16 %v1628
    %v1797 = vunpack.c.h.b16 %v1628
    %v1798 = vunpack.c.l.b16 %v1629
    %v1799 = vunpack.c.h.b16 %v1629
    %v1800 = vunpack.c.l.b16 %v1630
    %v1801 = vunpack.c.h.b16 %v1630
    %v1802 = vunpack.c.l.b16 %v1631
    %v1803 = vunpack.c.h.b16 %v1631
    %v1804 = vunpack.c.l.b16 %v1632
    %v1805 = vunpack.c.h.b16 %v1632
    %v1806 = vunpack.c.l.b16 %v1633
    %v1807 = vunpack.c.h.b16 %v1633
    %v1808 = vunpack.c.l.b16 %v1634
    %v1809 = vunpack.c.h.b16 %v1634
    %v1810 = vunpack.c.l.b16 %v1635
    %v1811 = vunpack.c.h.b16 %v1635
    %v1812 = vpack.c.b16 %v1750, %v1748
    %v1813 = vpack.c.b16 %v1751, %v1749
    %v1814 = vpack.c.b16 %v1754, %v1752
    %v1815 = vpack.c.b16 %v1755, %v1753
    %v1816 = vpack.c.b16 %v1758, %v1756
    %v1817 = vpack.c.b16 %v1759, %v1757
    %v1818 = vpack.c.b16 %v1762, %v1760
    %v1819 = vpack.c.b16 %v1763, %v1761
    %v1820 = vpack.c.b16 %v1766, %v1764
    %v1821 = vpack.c.b16 %v1767, %v1765
    %v1822 = vpack.c.b16 %v1770, %v1768
    %v1823 = vpack.c.b16 %v1771, %v1769
    %v1824 = vpack.c.b16 %v1774, %v1772
    %v1825 = vpack.c.b16 %v1775, %v1773
    %v1826 = vpack.c.b16 %v1778, %v1776
    %v1827 = vpack.c.b16 %v1779, %v1777
    %v1828 = vpack.c.b16 %v1782, %v1780
    %v1829 = vpack.c.b16 %v1783, %v1781
    %v1830 = vpack.c.b16 %v1786, %v1784
    %v1831 = vpack.c.b16 %v1787, %v1785
    %v1832 = vpack.c.b16 %v1790, %v1788
    %v1833 = vpack.c.b16 %v1791, %v1789
    %v1834 = vpack.c.b16 %v1794, %v1792
    %v1835 = vpack.c.b16 %v1795, %v1793
    %v1836 = vpack.c.b16 %v1798, %v1796
    %v1837 = vpack.c.b16 %v1799, %v1797
    %v1838 = vpack.c.b16 %v1802, %v1800
    %v1839 = vpack.c.b16 %v1803, %v1801
    %v1840 = vpack.c.b16 %v1806, %v1804
    %v1841 = vpack.c.b16 %v1807, %v1805
    %v1842 = vpack.c.b16 %v1810, %v1808
    %v1843 = vpack.c.b16 %v1811, %v1809
    %1876 = vmatprep.subr.bf16.mxu0 %v1813
    %1877 = vmatpush1.bf16.msra.mxu0 %v1812
    %1878 = vmatprep.subr.bf16.mxu0 %v1815
    %1879 = vmatpush1.bf16.msra.mxu0 %v1814
    %1880 = vmatprep.subr.bf16.mxu0 %v1817
    %1881 = vmatpush1.bf16.msra.mxu0 %v1816
    %1882 = vmatprep.subr.bf16.mxu0 %v1819
    %1883 = vmatpush1.bf16.msra.mxu0 %v1818
    %1884 = vmatprep.subr.bf16.mxu0 %v1821
    %1885 = vmatpush1.bf16.msra.mxu0 %v1820
    %1886 = vmatprep.subr.bf16.mxu0 %v1823
    %1887 = vmatpush1.bf16.msra.mxu0 %v1822
    %1888 = vmatprep.subr.bf16.mxu0 %v1825
    %1889 = vmatpush1.bf16.msra.mxu0 %v1824
    %1890 = vmatprep.subr.bf16.mxu0 %v1827
    %1891 = vmatpush1.bf16.msra.mxu0 %v1826
    %1892 = vmatprep.subr.bf16.mxu0 %v1829
    %1893 = vmatpush1.bf16.msra.mxu0 %v1828
    %1894 = vmatprep.subr.bf16.mxu0 %v1831
    %1895 = vmatpush1.bf16.msra.mxu0 %v1830
    %1896 = vmatprep.subr.bf16.mxu0 %v1833
    %1897 = vmatpush1.bf16.msra.mxu0 %v1832
    %1898 = vmatprep.subr.bf16.mxu0 %v1835
    %1899 = vmatpush1.bf16.msra.mxu0 %v1834
    %1900 = vmatprep.subr.bf16.mxu0 %v1837
    %1901 = vmatpush1.bf16.msra.mxu0 %v1836
    %1902 = vmatprep.subr.bf16.mxu0 %v1839
    %1903 = vmatpush1.bf16.msra.mxu0 %v1838
    %1904 = vmatprep.subr.bf16.mxu0 %v1841
    %1905 = vmatpush1.bf16.msra.mxu0 %v1840
    %1906 = vmatprep.subr.bf16.mxu0 %v1843
    %1907 = vmatpush1.bf16.msra.mxu0 %v1842
    %1908 = vmatprep.mubr.bf16.mxu0 %v1685
    %1909 = vmatmul.mubr.bf16.gmra.mrb[0].mxu0 %v1684
    %v1910 = vpop.f32.mrb[0].mxu0
    %v1911 = vadd.f32 0.0, %v1910
    %v1912 = vpop.f32.mrb[0].mxu0
    %v1913 = vadd.f32 0.0, %v1912
    %v1914 = vpop.f32.mrb[0].mxu0
    %v1915 = vadd.f32 0.0, %v1914
    %v1916 = vpop.f32.mrb[0].mxu0
    %v1917 = vadd.f32 0.0, %v1916
    %1918 = vmatprep.mubr.bf16.mxu0 %v1687
    %1919 = vmatmul.mubr.bf16.gmra.mrb[0].mxu0 %v1686
    %v1920 = vpop.f32.mrb[0].mxu0
    %v1921 = vadd.f32 0.0, %v1920
    %v1922 = vpop.f32.mrb[0].mxu0
    %v1923 = vadd.f32 0.0, %v1922
    %v1924 = vpop.f32.mrb[0].mxu0
    %v1925 = vadd.f32 0.0, %v1924
    %v1926 = vpop.f32.mrb[0].mxu0
    %v1927 = vadd.f32 0.0, %v1926
    %1928 = vmatprep.mubr.bf16.mxu0 %v1689
    %1929 = vmatmul.mubr.bf16.gmra.mrb[0].mxu0 %v1688
    %v1930 = vpop.f32.mrb[0].mxu0
    %v1931 = vadd.f32 0.0, %v1930
    %v1932 = vpop.f32.mrb[0].mxu0
    %v1933 = vadd.f32 0.0, %v1932
    %v1934 = vpop.f32.mrb[0].mxu0
    %v1935 = vadd.f32 0.0, %v1934
    %v1936 = vpop.f32.mrb[0].mxu0
    %v1937 = vadd.f32 0.0, %v1936
    %1938 = vmatprep.mubr.bf16.mxu0 %v1691
    %1939 = vmatmul.mubr.bf16.gmra.mrb[0].mxu0 %v1690
    %v1940 = vpop.f32.mrb[0].mxu0
    %v1941 = vadd.f32 0.0, %v1940
    %v1942 = vpop.f32.mrb[0].mxu0
    %v1943 = vadd.f32 0.0, %v1942
    %v1944 = vpop.f32.mrb[0].mxu0
    %v1945 = vadd.f32 0.0, %v1944
    %v1946 = vpop.f32.mrb[0].mxu0
    %v1947 = vadd.f32 0.0, %v1946
    %1948 = vmatprep.mubr.bf16.mxu0 %v1693
    %1949 = vmatmul.mubr.bf16.gmra.mrb[0].mxu0 %v1692
    %v1950 = vpop.f32.mrb[0].mxu0
    %v1951 = vadd.f32 0.0, %v1950
    %v1952 = vpop.f32.mrb[0].mxu0
    %v1953 = vadd.f32 0.0, %v1952
    %v1954 = vpop.f32.mrb[0].mxu0
    %v1955 = vadd.f32 0.0, %v1954
    %v1956 = vpop.f32.mrb[0].mxu0
    %v1957 = vadd.f32 0.0, %v1956
    %1958 = vmatprep.mubr.bf16.mxu0 %v1695
    %1959 = vmatmul.mubr.bf16.gmra.mrb[0].mxu0 %v1694
    %v1960 = vpop.f32.mrb[0].mxu0
    %v1961 = vadd.f32 0.0, %v1960
    %v1962 = vpop.f32.mrb[0].mxu0
    %v1963 = vadd.f32 0.0, %v1962
    %v1964 = vpop.f32.mrb[0].mxu0
    %v1965 = vadd.f32 0.0, %v1964
    %v1966 = vpop.f32.mrb[0].mxu0
    %v1967 = vadd.f32 0.0, %v1966
    %1968 = vmatprep.mubr.bf16.mxu0 %v1697
    %1969 = vmatmul.mubr.bf16.gmra.mrb[0].mxu0 %v1696
    %v1970 = vpop.f32.mrb[0].mxu0
    %v1971 = vadd.f32 0.0, %v1970
    %v1972 = vpop.f32.mrb[0].mxu0
    %v1973 = vadd.f32 0.0, %v1972
    %v1974 = vpop.f32.mrb[0].mxu0
    %v1975 = vadd.f32 0.0, %v1974
    %v1976 = vpop.f32.mrb[0].mxu0
    %v1977 = vadd.f32 0.0, %v1976
    %1978 = vmatprep.mubr.bf16.mxu0 %v1699
    %1979 = vmatmul.mubr.bf16.gmra.mrb[0].mxu0 %v1698
    %v1980 = vpop.f32.mrb[0].mxu0
    %v1981 = vadd.f32 0.0, %v1980
    %v1982 = vpop.f32.mrb[0].mxu0
    %v1983 = vadd.f32 0.0, %v1982
    %v1984 = vpop.f32.mrb[0].mxu0
    %v1985 = vadd.f32 0.0, %v1984
    %v1986 = vpop.f32.mrb[0].mxu0
    %v1987 = vadd.f32 0.0, %v1986
    %1988 = vdwg.mxu0
    %v1989 = vadd.f32 %v1554, %v1911
    %v1990 = vadd.f32 %v1555, %v1913
    %v1991 = vadd.f32 %v1556, %v1915
    %v1992 = vadd.f32 %v1557, %v1917
    %v1993 = vadd.f32 %v1558, %v1921
    %v1994 = vadd.f32 %v1559, %v1923
    %v1995 = vadd.f32 %v1560, %v1925
    %v1996 = vadd.f32 %v1561, %v1927
    %v1997 = vadd.f32 %v1562, %v1931
    %v1998 = vadd.f32 %v1563, %v1933
    %v1999 = vadd.f32 %v1564, %v1935
    %v2000 = vadd.f32 %v1565, %v1937
    %v2001 = vadd.f32 %v1566, %v1941
    %v2002 = vadd.f32 %v1567, %v1943
    %v2003 = vadd.f32 %v1568, %v1945
    %v2004 = vadd.f32 %v1569, %v1947
    %v2005 = vadd.f32 %v1570, %v1951
    %v2006 = vadd.f32 %v1571, %v1953
    %v2007 = vadd.f32 %v1572, %v1955
    %v2008 = vadd.f32 %v1573, %v1957
    %v2009 = vadd.f32 %v1574, %v1961
    %v2010 = vadd.f32 %v1575, %v1963
    %v2011 = vadd.f32 %v1576, %v1965
    %v2012 = vadd.f32 %v1577, %v1967
    %v2013 = vadd.f32 %v1578, %v1971
    %v2014 = vadd.f32 %v1579, %v1973
    %v2015 = vadd.f32 %v1580, %v1975
    %v2016 = vadd.f32 %v1581, %v1977
    %v2017 = vadd.f32 %v1582, %v1981
    %v2018 = vadd.f32 %v1583, %v1983
    %v2019 = vadd.f32 %v1584, %v1985
    %v2020 = vadd.f32 %v1585, %v1987
    %v2021 = vld [vmem:[%s1586] sm:$0xff]
    %v2022 = vld [vmem:[%s1586 + $0x8] sm:$0x11]
    %v2023 = vld [vmem:[%s1586 + $0x10] sm:$0xff]
    %v2024 = vld [vmem:[%s1586 + $0x18] sm:$0x11]
    %v2025 = vld [vmem:[%s1586 + $0x20] sm:$0xff]
    %v2026 = vld [vmem:[%s1586 + $0x28] sm:$0x11]
    %v2027 = vld [vmem:[%s1586 + $0x30] sm:$0xff]
    %v2028 = vld [vmem:[%s1586 + $0x38] sm:$0x11]
    %v2029 = vld [vmem:[%s1586 + $0x40] sm:$0xff]
    %v2030 = vld [vmem:[%s1586 + $0x48] sm:$0x11]
    %v2031 = vld [vmem:[%s1586 + $0x50] sm:$0xff]
    %v2032 = vld [vmem:[%s1586 + $0x58] sm:$0x11]
    %v2033 = vld [vmem:[%s1586 + $0x60] sm:$0xff]
    %v2034 = vld [vmem:[%s1586 + $0x68] sm:$0x11]
    %v2035 = vld [vmem:[%s1586 + $0x70] sm:$0xff]
    %v2036 = vld [vmem:[%s1586 + $0x78] sm:$0x11]
    %v2037 = vld [vmem:[%s1586 + $0xa0] sm:$0xff]
    %v2038 = vld [vmem:[%s1586 + $0xa8] sm:$0x11]
    %v2039 = vld [vmem:[%s1586 + $0xb0] sm:$0xff]
    %v2040 = vld [vmem:[%s1586 + $0xb8] sm:$0x11]
    %v2041 = vld [vmem:[%s1586 + $0xc0] sm:$0xff]
    %v2042 = vld [vmem:[%s1586 + $0xc8] sm:$0x11]
    %v2043 = vld [vmem:[%s1586 + $0xd0] sm:$0xff]
    %v2044 = vld [vmem:[%s1586 + $0xd8] sm:$0x11]
    %v2045 = vld [vmem:[%s1586 + $0xe0] sm:$0xff]
    %v2046 = vld [vmem:[%s1586 + $0xe8] sm:$0x11]
    %v2047 = vld [vmem:[%s1586 + $0xf0] sm:$0xff]
    %v2048 = vld [vmem:[%s1586 + $0xf8] sm:$0x11]
    %v2049 = vld [vmem:[%s1586 + $0x100] sm:$0xff]
    %v2050 = vld [vmem:[%s1586 + $0x108] sm:$0x11]
    %v2051 = vld [vmem:[%s1586 + $0x110] sm:$0xff]
    %v2052 = vld [vmem:[%s1586 + $0x118] sm:$0x11]
    %v2054 = vshrl.u32 %v2021, 16
    %v2056 = vrot.slane %v2054, 4
    %v2057 = vshll.u32 %v2021, 16
    %v2059 = vrot.slane %v2057, 5
    %v2060 = vor.u32 %v2056, %v2059
    %v2061 = vrot.slane %v2060, 4
    %v2063 = vshll.u32 %v2022, 16
    %v2065 = vrot.slane %v2063, 5
    %v2066 = vsel %vm121, %v2061, %v2065
    %v2068 = vshrl.u32 %v2023, 16
    %v2070 = vrot.slane %v2068, 4
    %v2071 = vshll.u32 %v2023, 16
    %v2073 = vrot.slane %v2071, 5
    %v2074 = vor.u32 %v2070, %v2073
    %v2075 = vrot.slane %v2074, 4
    %v2077 = vshll.u32 %v2024, 16
    %v2079 = vrot.slane %v2077, 5
    %v2080 = vsel %vm121, %v2075, %v2079
    %v2082 = vshrl.u32 %v2025, 16
    %v2084 = vrot.slane %v2082, 4
    %v2085 = vshll.u32 %v2025, 16
    %v2087 = vrot.slane %v2085, 5
    %v2088 = vor.u32 %v2084, %v2087
    %v2089 = vrot.slane %v2088, 4
    %v2091 = vshll.u32 %v2026, 16
    %v2093 = vrot.slane %v2091, 5
    %v2094 = vsel %vm121, %v2089, %v2093
    %v2096 = vshrl.u32 %v2027, 16
    %v2098 = vrot.slane %v2096, 4
    %v2099 = vshll.u32 %v2027, 16
    %v2101 = vrot.slane %v2099, 5
    %v2102 = vor.u32 %v2098, %v2101
    %v2103 = vrot.slane %v2102, 4
    %v2105 = vshll.u32 %v2028, 16
    %v2107 = vrot.slane %v2105, 5
    %v2108 = vsel %vm121, %v2103, %v2107
    %v2110 = vshrl.u32 %v2029, 16
    %v2112 = vrot.slane %v2110, 4
    %v2113 = vshll.u32 %v2029, 16
    %v2115 = vrot.slane %v2113, 5
    %v2116 = vor.u32 %v2112, %v2115
    %v2117 = vrot.slane %v2116, 4
    %v2119 = vshll.u32 %v2030, 16
    %v2121 = vrot.slane %v2119, 5
    %v2122 = vsel %vm121, %v2117, %v2121
    %v2124 = vshrl.u32 %v2031, 16
    %v2126 = vrot.slane %v2124, 4
    %v2127 = vshll.u32 %v2031, 16
    %v2129 = vrot.slane %v2127, 5
    %v2130 = vor.u32 %v2126, %v2129
    %v2131 = vrot.slane %v2130, 4
    %v2133 = vshll.u32 %v2032, 16
    %v2135 = vrot.slane %v2133, 5
    %v2136 = vsel %vm121, %v2131, %v2135
    %v2138 = vshrl.u32 %v2033, 16
    %v2140 = vrot.slane %v2138, 4
    %v2141 = vshll.u32 %v2033, 16
    %v2143 = vrot.slane %v2141, 5
    %v2144 = vor.u32 %v2140, %v2143
    %v2145 = vrot.slane %v2144, 4
    %v2147 = vshll.u32 %v2034, 16
    %v2149 = vrot.slane %v2147, 5
    %v2150 = vsel %vm121, %v2145, %v2149
    %v2152 = vshrl.u32 %v2035, 16
    %v2154 = vrot.slane %v2152, 4
    %v2155 = vshll.u32 %v2035, 16
    %v2157 = vrot.slane %v2155, 5
    %v2158 = vor.u32 %v2154, %v2157
    %v2159 = vrot.slane %v2158, 4
    %v2161 = vshll.u32 %v2036, 16
    %v2163 = vrot.slane %v2161, 5
    %v2164 = vsel %vm121, %v2159, %v2163
    %v2166 = vshrl.u32 %v2037, 16
    %v2168 = vrot.slane %v2166, 4
    %v2169 = vshll.u32 %v2037, 16
    %v2171 = vrot.slane %v2169, 5
    %v2172 = vor.u32 %v2168, %v2171
    %v2173 = vrot.slane %v2172, 4
    %v2175 = vshll.u32 %v2038, 16
    %v2177 = vrot.slane %v2175, 5
    %v2178 = vsel %vm121, %v2173, %v2177
    %v2180 = vshrl.u32 %v2039, 16
    %v2182 = vrot.slane %v2180, 4
    %v2183 = vshll.u32 %v2039, 16
    %v2185 = vrot.slane %v2183, 5
    %v2186 = vor.u32 %v2182, %v2185
    %v2187 = vrot.slane %v2186, 4
    %v2189 = vshll.u32 %v2040, 16
    %v2191 = vrot.slane %v2189, 5
    %v2192 = vsel %vm121, %v2187, %v2191
    %v2194 = vshrl.u32 %v2041, 16
    %v2196 = vrot.slane %v2194, 4
    %v2197 = vshll.u32 %v2041, 16
    %v2199 = vrot.slane %v2197, 5
    %v2200 = vor.u32 %v2196, %v2199
    %v2201 = vrot.slane %v2200, 4
    %v2203 = vshll.u32 %v2042, 16
    %v2205 = vrot.slane %v2203, 5
    %v2206 = vsel %vm121, %v2201, %v2205
    %v2208 = vshrl.u32 %v2043, 16
    %v2210 = vrot.slane %v2208, 4
    %v2211 = vshll.u32 %v2043, 16
    %v2213 = vrot.slane %v2211, 5
    %v2214 = vor.u32 %v2210, %v2213
    %v2215 = vrot.slane %v2214, 4
    %v2217 = vshll.u32 %v2044, 16
    %v2219 = vrot.slane %v2217, 5
    %v2220 = vsel %vm121, %v2215, %v2219
    %v2222 = vshrl.u32 %v2045, 16
    %v2224 = vrot.slane %v2222, 4
    %v2225 = vshll.u32 %v2045, 16
    %v2227 = vrot.slane %v2225, 5
    %v2228 = vor.u32 %v2224, %v2227
    %v2229 = vrot.slane %v2228, 4
    %v2231 = vshll.u32 %v2046, 16
    %v2233 = vrot.slane %v2231, 5
    %v2234 = vsel %vm121, %v2229, %v2233
    %v2236 = vshrl.u32 %v2047, 16
    %v2238 = vrot.slane %v2236, 4
    %v2239 = vshll.u32 %v2047, 16
    %v2241 = vrot.slane %v2239, 5
    %v2242 = vor.u32 %v2238, %v2241
    %v2243 = vrot.slane %v2242, 4
    %v2245 = vshll.u32 %v2048, 16
    %v2247 = vrot.slane %v2245, 5
    %v2248 = vsel %vm121, %v2243, %v2247
    %v2250 = vshrl.u32 %v2049, 16
    %v2252 = vrot.slane %v2250, 4
    %v2253 = vshll.u32 %v2049, 16
    %v2255 = vrot.slane %v2253, 5
    %v2256 = vor.u32 %v2252, %v2255
    %v2257 = vrot.slane %v2256, 4
    %v2259 = vshll.u32 %v2050, 16
    %v2261 = vrot.slane %v2259, 5
    %v2262 = vsel %vm121, %v2257, %v2261
    %v2264 = vshrl.u32 %v2051, 16
    %v2266 = vrot.slane %v2264, 4
    %v2267 = vshll.u32 %v2051, 16
    %v2269 = vrot.slane %v2267, 5
    %v2270 = vor.u32 %v2266, %v2269
    %v2271 = vrot.slane %v2270, 4
    %v2273 = vshll.u32 %v2052, 16
    %v2275 = vrot.slane %v2273, 5
    %v2276 = vsel %vm121, %v2271, %v2275
    %s2277 = scalar_lea.vmem [#allocation2], 1024
    %v2278 = vld [vmem:[%s2277] sm:$0xff]
    %v2279 = vld [vmem:[%s2277 + $0x8] sm:$0xff]
    %v2280 = vld [vmem:[%s2277 + $0x10] sm:$0xff]
    %v2281 = vld [vmem:[%s2277 + $0x18] sm:$0xff]
    %v2282 = vld [vmem:[%s2277 + $0x20] sm:$0xff]
    %v2283 = vld [vmem:[%s2277 + $0x28] sm:$0xff]
    %v2284 = vld [vmem:[%s2277 + $0x30] sm:$0xff]
    %v2285 = vld [vmem:[%s2277 + $0x38] sm:$0xff]
    %v2286 = vld [vmem:[%s2277 + $0x40] sm:$0xff]
    %v2287 = vld [vmem:[%s2277 + $0x48] sm:$0xff]
    %v2288 = vld [vmem:[%s2277 + $0x50] sm:$0xff]
    %v2289 = vld [vmem:[%s2277 + $0x58] sm:$0xff]
    %v2290 = vld [vmem:[%s2277 + $0x60] sm:$0xff]
    %v2291 = vld [vmem:[%s2277 + $0x68] sm:$0xff]
    %v2292 = vld [vmem:[%s2277 + $0x70] sm:$0xff]
    %v2293 = vld [vmem:[%s2277 + $0x78] sm:$0xff]
    %v2294 = vld [vmem:[%s2277 + $0x80] sm:$0xff]
    %v2295 = vld [vmem:[%s2277 + $0x88] sm:$0xff]
    %v2296 = vld [vmem:[%s2277 + $0x90] sm:$0xff]
    %v2297 = vld [vmem:[%s2277 + $0x98] sm:$0xff]
    %v2298 = vld [vmem:[%s2277 + $0xa0] sm:$0xff]
    %v2299 = vld [vmem:[%s2277 + $0xa8] sm:$0xff]
    %v2300 = vld [vmem:[%s2277 + $0xb0] sm:$0xff]
    %v2301 = vld [vmem:[%s2277 + $0xb8] sm:$0xff]
    %v2302 = vld [vmem:[%s2277 + $0xc0] sm:$0xff]
    %v2303 = vld [vmem:[%s2277 + $0xc8] sm:$0xff]
    %v2304 = vld [vmem:[%s2277 + $0xd0] sm:$0xff]
    %v2305 = vld [vmem:[%s2277 + $0xd8] sm:$0xff]
    %v2306 = vld [vmem:[%s2277 + $0xe0] sm:$0xff]
    %v2307 = vld [vmem:[%s2277 + $0xe8] sm:$0xff]
    %v2308 = vld [vmem:[%s2277 + $0xf0] sm:$0xff]
    %v2309 = vld [vmem:[%s2277 + $0xf8] sm:$0xff]
    %v2310 = vunpack.c.l.b16 %v2066
    %v2311 = vunpack.c.h.b16 %v2066
    %v2312 = vunpack.c.l.b16 %v2080
    %v2313 = vunpack.c.h.b16 %v2080
    %v2314 = vunpack.c.l.b16 %v2094
    %v2315 = vunpack.c.h.b16 %v2094
    %v2316 = vunpack.c.l.b16 %v2108
    %v2317 = vunpack.c.h.b16 %v2108
    %v2318 = vunpack.c.l.b16 %v2122
    %v2319 = vunpack.c.h.b16 %v2122
    %v2320 = vunpack.c.l.b16 %v2136
    %v2321 = vunpack.c.h.b16 %v2136
    %v2322 = vunpack.c.l.b16 %v2150
    %v2323 = vunpack.c.h.b16 %v2150
    %v2324 = vunpack.c.l.b16 %v2164
    %v2325 = vunpack.c.h.b16 %v2164
    %v2326 = vunpack.c.l.b16 %v2178
    %v2327 = vunpack.c.h.b16 %v2178
    %v2328 = vunpack.c.l.b16 %v2192
    %v2329 = vunpack.c.h.b16 %v2192
    %v2330 = vunpack.c.l.b16 %v2206
    %v2331 = vunpack.c.h.b16 %v2206
    %v2332 = vunpack.c.l.b16 %v2220
    %v2333 = vunpack.c.h.b16 %v2220
    %v2334 = vunpack.c.l.b16 %v2234
    %v2335 = vunpack.c.h.b16 %v2234
    %v2336 = vunpack.c.l.b16 %v2248
    %v2337 = vunpack.c.h.b16 %v2248
    %v2338 = vunpack.c.l.b16 %v2262
    %v2339 = vunpack.c.h.b16 %v2262
    %v2340 = vunpack.c.l.b16 %v2276
    %v2341 = vunpack.c.h.b16 %v2276
    %v2342 = vpack.c.b16 %v2312, %v2310
    %v2343 = vpack.c.b16 %v2313, %v2311
    %v2344 = vpack.c.b16 %v2316, %v2314
    %v2345 = vpack.c.b16 %v2317, %v2315
    %v2346 = vpack.c.b16 %v2320, %v2318
    %v2347 = vpack.c.b16 %v2321, %v2319
    %v2348 = vpack.c.b16 %v2324, %v2322
    %v2349 = vpack.c.b16 %v2325, %v2323
    %v2350 = vpack.c.b16 %v2328, %v2326
    %v2351 = vpack.c.b16 %v2329, %v2327
    %v2352 = vpack.c.b16 %v2332, %v2330
    %v2353 = vpack.c.b16 %v2333, %v2331
    %v2354 = vpack.c.b16 %v2336, %v2334
    %v2355 = vpack.c.b16 %v2337, %v2335
    %v2356 = vpack.c.b16 %v2340, %v2338
    %v2357 = vpack.c.b16 %v2341, %v2339
    %v2406 = vunpack.c.l.b16 %v2278
    %v2407 = vunpack.c.h.b16 %v2278
    %v2408 = vunpack.c.l.b16 %v2279
    %v2409 = vunpack.c.h.b16 %v2279
    %v2410 = vunpack.c.l.b16 %v2280
    %v2411 = vunpack.c.h.b16 %v2280
    %v2412 = vunpack.c.l.b16 %v2281
    %v2413 = vunpack.c.h.b16 %v2281
    %v2414 = vunpack.c.l.b16 %v2282
    %v2415 = vunpack.c.h.b16 %v2282
    %v2416 = vunpack.c.l.b16 %v2283
    %v2417 = vunpack.c.h.b16 %v2283
    %v2418 = vunpack.c.l.b16 %v2284
    %v2419 = vunpack.c.h.b16 %v2284
    %v2420 = vunpack.c.l.b16 %v2285
    %v2421 = vunpack.c.h.b16 %v2285
    %v2422 = vunpack.c.l.b16 %v2286
    %v2423 = vunpack.c.h.b16 %v2286
    %v2424 = vunpack.c.l.b16 %v2287
    %v2425 = vunpack.c.h.b16 %v2287
    %v2426 = vunpack.c.l.b16 %v2288
    %v2427 = vunpack.c.h.b16 %v2288
    %v2428 = vunpack.c.l.b16 %v2289
    %v2429 = vunpack.c.h.b16 %v2289
    %v2430 = vunpack.c.l.b16 %v2290
    %v2431 = vunpack.c.h.b16 %v2290
    %v2432 = vunpack.c.l.b16 %v2291
    %v2433 = vunpack.c.h.b16 %v2291
    %v2434 = vunpack.c.l.b16 %v2292
    %v2435 = vunpack.c.h.b16 %v2292
    %v2436 = vunpack.c.l.b16 %v2293
    %v2437 = vunpack.c.h.b16 %v2293
    %v2438 = vunpack.c.l.b16 %v2294
    %v2439 = vunpack.c.h.b16 %v2294
    %v2440 = vunpack.c.l.b16 %v2295
    %v2441 = vunpack.c.h.b16 %v2295
    %v2442 = vunpack.c.l.b16 %v2296
    %v2443 = vunpack.c.h.b16 %v2296
    %v2444 = vunpack.c.l.b16 %v2297
    %v2445 = vunpack.c.h.b16 %v2297
    %v2446 = vunpack.c.l.b16 %v2298
    %v2447 = vunpack.c.h.b16 %v2298
    %v2448 = vunpack.c.l.b16 %v2299
    %v2449 = vunpack.c.h.b16 %v2299
    %v2450 = vunpack.c.l.b16 %v2300
    %v2451 = vunpack.c.h.b16 %v2300
    %v2452 = vunpack.c.l.b16 %v2301
    %v2453 = vunpack.c.h.b16 %v2301
    %v2454 = vunpack.c.l.b16 %v2302
    %v2455 = vunpack.c.h.b16 %v2302
    %v2456 = vunpack.c.l.b16 %v2303
    %v2457 = vunpack.c.h.b16 %v2303
    %v2458 = vunpack.c.l.b16 %v2304
    %v2459 = vunpack.c.h.b16 %v2304
    %v2460 = vunpack.c.l.b16 %v2305
    %v2461 = vunpack.c.h.b16 %v2305
    %v2462 = vunpack.c.l.b16 %v2306
    %v2463 = vunpack.c.h.b16 %v2306
    %v2464 = vunpack.c.l.b16 %v2307
    %v2465 = vunpack.c.h.b16 %v2307
    %v2466 = vunpack.c.l.b16 %v2308
    %v2467 = vunpack.c.h.b16 %v2308
    %v2468 = vunpack.c.l.b16 %v2309
    %v2469 = vunpack.c.h.b16 %v2309
    %v2470 = vpack.c.b16 %v2408, %v2406
    %v2471 = vpack.c.b16 %v2409, %v2407
    %v2472 = vpack.c.b16 %v2412, %v2410
    %v2473 = vpack.c.b16 %v2413, %v2411
    %v2474 = vpack.c.b16 %v2416, %v2414
    %v2475 = vpack.c.b16 %v2417, %v2415
    %v2476 = vpack.c.b16 %v2420, %v2418
    %v2477 = vpack.c.b16 %v2421, %v2419
    %v2478 = vpack.c.b16 %v2424, %v2422
    %v2479 = vpack.c.b16 %v2425, %v2423
    %v2480 = vpack.c.b16 %v2428, %v2426
    %v2481 = vpack.c.b16 %v2429, %v2427
    %v2482 = vpack.c.b16 %v2432, %v2430
    %v2483 = vpack.c.b16 %v2433, %v2431
    %v2484 = vpack.c.b16 %v2436, %v2434
    %v2485 = vpack.c.b16 %v2437, %v2435
    %v2486 = vpack.c.b16 %v2440, %v2438
    %v2487 = vpack.c.b16 %v2441, %v2439
    %v2488 = vpack.c.b16 %v2444, %v2442
    %v2489 = vpack.c.b16 %v2445, %v2443
    %v2490 = vpack.c.b16 %v2448, %v2446
    %v2491 = vpack.c.b16 %v2449, %v2447
    %v2492 = vpack.c.b16 %v2452, %v2450
    %v2493 = vpack.c.b16 %v2453, %v2451
    %v2494 = vpack.c.b16 %v2456, %v2454
    %v2495 = vpack.c.b16 %v2457, %v2455
    %v2496 = vpack.c.b16 %v2460, %v2458
    %v2497 = vpack.c.b16 %v2461, %v2459
    %v2498 = vpack.c.b16 %v2464, %v2462
    %v2499 = vpack.c.b16 %v2465, %v2463
    %v2500 = vpack.c.b16 %v2468, %v2466
    %v2501 = vpack.c.b16 %v2469, %v2467
    %2534 = vmatprep.subr.bf16.mxu0 %v2471
    %2535 = vmatpush1.bf16.msra.mxu0 %v2470
    %2536 = vmatprep.subr.bf16.mxu0 %v2473
    %2537 = vmatpush1.bf16.msra.mxu0 %v2472
    %2538 = vmatprep.subr.bf16.mxu0 %v2475
    %2539 = vmatpush1.bf16.msra.mxu0 %v2474
    %2540 = vmatprep.subr.bf16.mxu0 %v2477
    %2541 = vmatpush1.bf16.msra.mxu0 %v2476
    %2542 = vmatprep.subr.bf16.mxu0 %v2479
    %2543 = vmatpush1.bf16.msra.mxu0 %v2478
    %2544 = vmatprep.subr.bf16.mxu0 %v2481
    %2545 = vmatpush1.bf16.msra.mxu0 %v2480
    %2546 = vmatprep.subr.bf16.mxu0 %v2483
    %2547 = vmatpush1.bf16.msra.mxu0 %v2482
    %2548 = vmatprep.subr.bf16.mxu0 %v2485
    %2549 = vmatpush1.bf16.msra.mxu0 %v2484
    %2550 = vmatprep.subr.bf16.mxu0 %v2487
    %2551 = vmatpush1.bf16.msra.mxu0 %v2486
    %2552 = vmatprep.subr.bf16.mxu0 %v2489
    %2553 = vmatpush1.bf16.msra.mxu0 %v2488
    %2554 = vmatprep.subr.bf16.mxu0 %v2491
    %2555 = vmatpush1.bf16.msra.mxu0 %v2490
    %2556 = vmatprep.subr.bf16.mxu0 %v2493
    %2557 = vmatpush1.bf16.msra.mxu0 %v2492
    %2558 = vmatprep.subr.bf16.mxu0 %v2495
    %2559 = vmatpush1.bf16.msra.mxu0 %v2494
    %2560 = vmatprep.subr.bf16.mxu0 %v2497
    %2561 = vmatpush1.bf16.msra.mxu0 %v2496
    %2562 = vmatprep.subr.bf16.mxu0 %v2499
    %2563 = vmatpush1.bf16.msra.mxu0 %v2498
    %2564 = vmatprep.subr.bf16.mxu0 %v2501
    %2565 = vmatpush1.bf16.msra.mxu0 %v2500
    %2566 = vmatprep.mubr.bf16.mxu0 %v2343
    %2567 = vmatmul.mubr.bf16.gmra.mrb[0].mxu0 %v2342
    %v2568 = vpop.f32.mrb[0].mxu0
    %v2569 = vadd.f32 0.0, %v2568
    %v2570 = vpop.f32.mrb[0].mxu0
    %v2571 = vadd.f32 0.0, %v2570
    %v2572 = vpop.f32.mrb[0].mxu0
    %v2573 = vadd.f32 0.0, %v2572
    %v2574 = vpop.f32.mrb[0].mxu0
    %v2575 = vadd.f32 0.0, %v2574
    %2576 = vmatprep.mubr.bf16.mxu0 %v2345
    %2577 = vmatmul.mubr.bf16.gmra.mrb[0].mxu0 %v2344
    %v2578 = vpop.f32.mrb[0].mxu0
    %v2579 = vadd.f32 0.0, %v2578
    %v2580 = vpop.f32.mrb[0].mxu0
    %v2581 = vadd.f32 0.0, %v2580
    %v2582 = vpop.f32.mrb[0].mxu0
    %v2583 = vadd.f32 0.0, %v2582
    %v2584 = vpop.f32.mrb[0].mxu0
    %v2585 = vadd.f32 0.0, %v2584
    %2586 = vmatprep.mubr.bf16.mxu0 %v2347
    %2587 = vmatmul.mubr.bf16.gmra.mrb[0].mxu0 %v2346
    %v2588 = vpop.f32.mrb[0].mxu0
    %v2589 = vadd.f32 0.0, %v2588
    %v2590 = vpop.f32.mrb[0].mxu0
    %v2591 = vadd.f32 0.0, %v2590
    %v2592 = vpop.f32.mrb[0].mxu0
    %v2593 = vadd.f32 0.0, %v2592
    %v2594 = vpop.f32.mrb[0].mxu0
    %v2595 = vadd.f32 0.0, %v2594
    %2596 = vmatprep.mubr.bf16.mxu0 %v2349
    %2597 = vmatmul.mubr.bf16.gmra.mrb[0].mxu0 %v2348
    %v2598 = vpop.f32.mrb[0].mxu0
    %v2599 = vadd.f32 0.0, %v2598
    %v2600 = vpop.f32.mrb[0].mxu0
    %v2601 = vadd.f32 0.0, %v2600
    %v2602 = vpop.f32.mrb[0].mxu0
    %v2603 = vadd.f32 0.0, %v2602
    %v2604 = vpop.f32.mrb[0].mxu0
    %v2605 = vadd.f32 0.0, %v2604
    %2606 = vmatprep.mubr.bf16.mxu0 %v2351
    %2607 = vmatmul.mubr.bf16.gmra.mrb[0].mxu0 %v2350
    %v2608 = vpop.f32.mrb[0].mxu0
    %v2609 = vadd.f32 0.0, %v2608
    %v2610 = vpop.f32.mrb[0].mxu0
    %v2611 = vadd.f32 0.0, %v2610
    %v2612 = vpop.f32.mrb[0].mxu0
    %v2613 = vadd.f32 0.0, %v2612
    %v2614 = vpop.f32.mrb[0].mxu0
    %v2615 = vadd.f32 0.0, %v2614
    %2616 = vmatprep.mubr.bf16.mxu0 %v2353
    %2617 = vmatmul.mubr.bf16.gmra.mrb[0].mxu0 %v2352
    %v2618 = vpop.f32.mrb[0].mxu0
    %v2619 = vadd.f32 0.0, %v2618
    %v2620 = vpop.f32.mrb[0].mxu0
    %v2621 = vadd.f32 0.0, %v2620
    %v2622 = vpop.f32.mrb[0].mxu0
    %v2623 = vadd.f32 0.0, %v2622
    %v2624 = vpop.f32.mrb[0].mxu0
    %v2625 = vadd.f32 0.0, %v2624
    %2626 = vmatprep.mubr.bf16.mxu0 %v2355
    %2627 = vmatmul.mubr.bf16.gmra.mrb[0].mxu0 %v2354
    %v2628 = vpop.f32.mrb[0].mxu0
    %v2629 = vadd.f32 0.0, %v2628
    %v2630 = vpop.f32.mrb[0].mxu0
    %v2631 = vadd.f32 0.0, %v2630
    %v2632 = vpop.f32.mrb[0].mxu0
    %v2633 = vadd.f32 0.0, %v2632
    %v2634 = vpop.f32.mrb[0].mxu0
    %v2635 = vadd.f32 0.0, %v2634
    %2636 = vmatprep.mubr.bf16.mxu0 %v2357
    %2637 = vmatmul.mubr.bf16.gmra.mrb[0].mxu0 %v2356
    %v2638 = vpop.f32.mrb[0].mxu0
    %v2639 = vadd.f32 0.0, %v2638
    %v2640 = vpop.f32.mrb[0].mxu0
    %v2641 = vadd.f32 0.0, %v2640
    %v2642 = vpop.f32.mrb[0].mxu0
    %v2643 = vadd.f32 0.0, %v2642
    %v2644 = vpop.f32.mrb[0].mxu0
    %v2645 = vadd.f32 0.0, %v2644
    %2646 = vdwg.mxu0
    %v2647 = vadd.f32 %v1989, %v2569
    %v2648 = vadd.f32 %v1990, %v2571
    %v2649 = vadd.f32 %v1991, %v2573
    %v2650 = vadd.f32 %v1992, %v2575
    %v2651 = vadd.f32 %v1993, %v2579
    %v2652 = vadd.f32 %v1994, %v2581
    %v2653 = vadd.f32 %v1995, %v2583
    %v2654 = vadd.f32 %v1996, %v2585
    %v2655 = vadd.f32 %v1997, %v2589
    %v2656 = vadd.f32 %v1998, %v2591
    %v2657 = vadd.f32 %v1999, %v2593
    %v2658 = vadd.f32 %v2000, %v2595
    %v2659 = vadd.f32 %v2001, %v2599
    %v2660 = vadd.f32 %v2002, %v2601
    %v2661 = vadd.f32 %v2003, %v2603
    %v2662 = vadd.f32 %v2004, %v2605
    %v2663 = vadd.f32 %v2005, %v2609
    %v2664 = vadd.f32 %v2006, %v2611
    %v2665 = vadd.f32 %v2007, %v2613
    %v2666 = vadd.f32 %v2008, %v2615
    %v2667 = vadd.f32 %v2009, %v2619
    %v2668 = vadd.f32 %v2010, %v2621
    %v2669 = vadd.f32 %v2011, %v2623
    %v2670 = vadd.f32 %v2012, %v2625
    %v2671 = vadd.f32 %v2013, %v2629
    %v2672 = vadd.f32 %v2014, %v2631
    %v2673 = vadd.f32 %v2015, %v2633
    %v2674 = vadd.f32 %v2016, %v2635
    %v2675 = vadd.f32 %v2017, %v2639
    %v2676 = vadd.f32 %v2018, %v2641
    %v2677 = vadd.f32 %v2019, %v2643
    %v2678 = vadd.f32 %v2020, %v2645
    %v2679 = vld [vmem:[%s1586] sm:$0xee]
    %v2680 = vld [vmem:[%s1586 + $0x10] sm:$0xee]
    %v2681 = vld [vmem:[%s1586 + $0x20] sm:$0xee]
    %v2682 = vld [vmem:[%s1586 + $0x30] sm:$0xee]
    %v2683 = vld [vmem:[%s1586 + $0x40] sm:$0xee]
    %v2684 = vld [vmem:[%s1586 + $0x50] sm:$0xee]
    %v2685 = vld [vmem:[%s1586 + $0x60] sm:$0xee]
    %v2686 = vld [vmem:[%s1586 + $0x70] sm:$0xee]
    %v2687 = vld [vmem:[%s1586 + $0xa0] sm:$0xee]
    %v2688 = vld [vmem:[%s1586 + $0xb0] sm:$0xee]
    %v2689 = vld [vmem:[%s1586 + $0xc0] sm:$0xee]
    %v2690 = vld [vmem:[%s1586 + $0xd0] sm:$0xee]
    %v2691 = vld [vmem:[%s1586 + $0xe0] sm:$0xee]
    %v2692 = vld [vmem:[%s1586 + $0xf0] sm:$0xee]
    %v2693 = vld [vmem:[%s1586 + $0x100] sm:$0xee]
    %v2694 = vld [vmem:[%s1586 + $0x110] sm:$0xee]
    %v2727 = vrot.slane %v2679, 5
    %v2728 = vrot.slane %v2727, 4
    %v2729 = vrot.slane %v2022, 5
    %v2730 = vsel %vm1119, %v2728, %v2729
    %v2731 = vrot.slane %v2680, 5
    %v2732 = vrot.slane %v2731, 4
    %v2733 = vrot.slane %v2024, 5
    %v2734 = vsel %vm1119, %v2732, %v2733
    %v2735 = vrot.slane %v2681, 5
    %v2736 = vrot.slane %v2735, 4
    %v2737 = vrot.slane %v2026, 5
    %v2738 = vsel %vm1119, %v2736, %v2737
    %v2739 = vrot.slane %v2682, 5
    %v2740 = vrot.slane %v2739, 4
    %v2741 = vrot.slane %v2028, 5
    %v2742 = vsel %vm1119, %v2740, %v2741
    %v2743 = vrot.slane %v2683, 5
    %v2744 = vrot.slane %v2743, 4
    %v2745 = vrot.slane %v2030, 5
    %v2746 = vsel %vm1119, %v2744, %v2745
    %v2747 = vrot.slane %v2684, 5
    %v2748 = vrot.slane %v2747, 4
    %v2749 = vrot.slane %v2032, 5
    %v2750 = vsel %vm1119, %v2748, %v2749
    %v2751 = vrot.slane %v2685, 5
    %v2752 = vrot.slane %v2751, 4
    %v2753 = vrot.slane %v2034, 5
    %v2754 = vsel %vm1119, %v2752, %v2753
    %v2755 = vrot.slane %v2686, 5
    %v2756 = vrot.slane %v2755, 4
    %v2757 = vrot.slane %v2036, 5
    %v2758 = vsel %vm1119, %v2756, %v2757
    %v2759 = vrot.slane %v2687, 5
    %v2760 = vrot.slane %v2759, 4
    %v2761 = vrot.slane %v2038, 5
    %v2762 = vsel %vm1119, %v2760, %v2761
    %v2763 = vrot.slane %v2688, 5
    %v2764 = vrot.slane %v2763, 4
    %v2765 = vrot.slane %v2040, 5
    %v2766 = vsel %vm1119, %v2764, %v2765
    %v2767 = vrot.slane %v2689, 5
    %v2768 = vrot.slane %v2767, 4
    %v2769 = vrot.slane %v2042, 5
    %v2770 = vsel %vm1119, %v2768, %v2769
    %v2771 = vrot.slane %v2690, 5
    %v2772 = vrot.slane %v2771, 4
    %v2773 = vrot.slane %v2044, 5
    %v2774 = vsel %vm1119, %v2772, %v2773
    %v2775 = vrot.slane %v2691, 5
    %v2776 = vrot.slane %v2775, 4
    %v2777 = vrot.slane %v2046, 5
    %v2778 = vsel %vm1119, %v2776, %v2777
    %v2779 = vrot.slane %v2692, 5
    %v2780 = vrot.slane %v2779, 4
    %v2781 = vrot.slane %v2048, 5
    %v2782 = vsel %vm1119, %v2780, %v2781
    %v2783 = vrot.slane %v2693, 5
    %v2784 = vrot.slane %v2783, 4
    %v2785 = vrot.slane %v2050, 5
    %v2786 = vsel %vm1119, %v2784, %v2785
    %v2787 = vrot.slane %v2694, 5
    %v2788 = vrot.slane %v2787, 4
    %v2789 = vrot.slane %v2052, 5
    %v2790 = vsel %vm1119, %v2788, %v2789
    %s2791 = scalar_lea.vmem [#allocation2], 1280
    %v2792 = vld [vmem:[%s2791] sm:$0xff]
    %v2793 = vld [vmem:[%s2791 + $0x8] sm:$0xff]
    %v2794 = vld [vmem:[%s2791 + $0x10] sm:$0xff]
    %v2795 = vld [vmem:[%s2791 + $0x18] sm:$0xff]
    %v2796 = vld [vmem:[%s2791 + $0x20] sm:$0xff]
    %v2797 = vld [vmem:[%s2791 + $0x28] sm:$0xff]
    %v2798 = vld [vmem:[%s2791 + $0x30] sm:$0xff]
    %v2799 = vld [vmem:[%s2791 + $0x38] sm:$0xff]
    %v2800 = vld [vmem:[%s2791 + $0x40] sm:$0xff]
    %v2801 = vld [vmem:[%s2791 + $0x48] sm:$0xff]
    %v2802 = vld [vmem:[%s2791 + $0x50] sm:$0xff]
    %v2803 = vld [vmem:[%s2791 + $0x58] sm:$0xff]
    %v2804 = vld [vmem:[%s2791 + $0x60] sm:$0xff]
    %v2805 = vld [vmem:[%s2791 + $0x68] sm:$0xff]
    %v2806 = vld [vmem:[%s2791 + $0x70] sm:$0xff]
    %v2807 = vld [vmem:[%s2791 + $0x78] sm:$0xff]
    %v2808 = vld [vmem:[%s2791 + $0x80] sm:$0xff]
    %v2809 = vld [vmem:[%s2791 + $0x88] sm:$0xff]
    %v2810 = vld [vmem:[%s2791 + $0x90] sm:$0xff]
    %v2811 = vld [vmem:[%s2791 + $0x98] sm:$0xff]
    %v2812 = vld [vmem:[%s2791 + $0xa0] sm:$0xff]
    %v2813 = vld [vmem:[%s2791 + $0xa8] sm:$0xff]
    %v2814 = vld [vmem:[%s2791 + $0xb0] sm:$0xff]
    %v2815 = vld [vmem:[%s2791 + $0xb8] sm:$0xff]
    %v2816 = vld [vmem:[%s2791 + $0xc0] sm:$0xff]
    %v2817 = vld [vmem:[%s2791 + $0xc8] sm:$0xff]
    %v2818 = vld [vmem:[%s2791 + $0xd0] sm:$0xff]
    %v2819 = vld [vmem:[%s2791 + $0xd8] sm:$0xff]
    %v2820 = vld [vmem:[%s2791 + $0xe0] sm:$0xff]
    %v2821 = vld [vmem:[%s2791 + $0xe8] sm:$0xff]
    %v2822 = vld [vmem:[%s2791 + $0xf0] sm:$0xff]
    %v2823 = vld [vmem:[%s2791 + $0xf8] sm:$0xff]
    %v2824 = vunpack.c.l.b16 %v2730
    %v2825 = vunpack.c.h.b16 %v2730
    %v2826 = vunpack.c.l.b16 %v2734
    %v2827 = vunpack.c.h.b16 %v2734
    %v2828 = vunpack.c.l.b16 %v2738
    %v2829 = vunpack.c.h.b16 %v2738
    %v2830 = vunpack.c.l.b16 %v2742
    %v2831 = vunpack.c.h.b16 %v2742
    %v2832 = vunpack.c.l.b16 %v2746
    %v2833 = vunpack.c.h.b16 %v2746
    %v2834 = vunpack.c.l.b16 %v2750
    %v2835 = vunpack.c.h.b16 %v2750
    %v2836 = vunpack.c.l.b16 %v2754
    %v2837 = vunpack.c.h.b16 %v2754
    %v2838 = vunpack.c.l.b16 %v2758
    %v2839 = vunpack.c.h.b16 %v2758
    %v2840 = vunpack.c.l.b16 %v2762
    %v2841 = vunpack.c.h.b16 %v2762
    %v2842 = vunpack.c.l.b16 %v2766
    %v2843 = vunpack.c.h.b16 %v2766
    %v2844 = vunpack.c.l.b16 %v2770
    %v2845 = vunpack.c.h.b16 %v2770
    %v2846 = vunpack.c.l.b16 %v2774
    %v2847 = vunpack.c.h.b16 %v2774
    %v2848 = vunpack.c.l.b16 %v2778
    %v2849 = vunpack.c.h.b16 %v2778
    %v2850 = vunpack.c.l.b16 %v2782
    %v2851 = vunpack.c.h.b16 %v2782
    %v2852 = vunpack.c.l.b16 %v2786
    %v2853 = vunpack.c.h.b16 %v2786
    %v2854 = vunpack.c.l.b16 %v2790
    %v2855 = vunpack.c.h.b16 %v2790
    %v2856 = vpack.c.b16 %v2826, %v2824
    %v2857 = vpack.c.b16 %v2827, %v2825
    %v2858 = vpack.c.b16 %v2830, %v2828
    %v2859 = vpack.c.b16 %v2831, %v2829
    %v2860 = vpack.c.b16 %v2834, %v2832
    %v2861 = vpack.c.b16 %v2835, %v2833
    %v2862 = vpack.c.b16 %v2838, %v2836
    %v2863 = vpack.c.b16 %v2839, %v2837
    %v2864 = vpack.c.b16 %v2842, %v2840
    %v2865 = vpack.c.b16 %v2843, %v2841
    %v2866 = vpack.c.b16 %v2846, %v2844
    %v2867 = vpack.c.b16 %v2847, %v2845
    %v2868 = vpack.c.b16 %v2850, %v2848
    %v2869 = vpack.c.b16 %v2851, %v2849
    %v2870 = vpack.c.b16 %v2854, %v2852
    %v2871 = vpack.c.b16 %v2855, %v2853
    %v2920 = vunpack.c.l.b16 %v2792
    %v2921 = vunpack.c.h.b16 %v2792
    %v2922 = vunpack.c.l.b16 %v2793
    %v2923 = vunpack.c.h.b16 %v2793
    %v2924 = vunpack.c.l.b16 %v2794
    %v2925 = vunpack.c.h.b16 %v2794
    %v2926 = vunpack.c.l.b16 %v2795
    %v2927 = vunpack.c.h.b16 %v2795
    %v2928 = vunpack.c.l.b16 %v2796
    %v2929 = vunpack.c.h.b16 %v2796
    %v2930 = vunpack.c.l.b16 %v2797
    %v2931 = vunpack.c.h.b16 %v2797
    %v2932 = vunpack.c.l.b16 %v2798
    %v2933 = vunpack.c.h.b16 %v2798
    %v2934 = vunpack.c.l.b16 %v2799
    %v2935 = vunpack.c.h.b16 %v2799
    %v2936 = vunpack.c.l.b16 %v2800
    %v2937 = vunpack.c.h.b16 %v2800
    %v2938 = vunpack.c.l.b16 %v2801
    %v2939 = vunpack.c.h.b16 %v2801
    %v2940 = vunpack.c.l.b16 %v2802
    %v2941 = vunpack.c.h.b16 %v2802
    %v2942 = vunpack.c.l.b16 %v2803
    %v2943 = vunpack.c.h.b16 %v2803
    %v2944 = vunpack.c.l.b16 %v2804
    %v2945 = vunpack.c.h.b16 %v2804
    %v2946 = vunpack.c.l.b16 %v2805
    %v2947 = vunpack.c.h.b16 %v2805
    %v2948 = vunpack.c.l.b16 %v2806
    %v2949 = vunpack.c.h.b16 %v2806
    %v2950 = vunpack.c.l.b16 %v2807
    %v2951 = vunpack.c.h.b16 %v2807
    %v2952 = vunpack.c.l.b16 %v2808
    %v2953 = vunpack.c.h.b16 %v2808
    %v2954 = vunpack.c.l.b16 %v2809
    %v2955 = vunpack.c.h.b16 %v2809
    %v2956 = vunpack.c.l.b16 %v2810
    %v2957 = vunpack.c.h.b16 %v2810
    %v2958 = vunpack.c.l.b16 %v2811
    %v2959 = vunpack.c.h.b16 %v2811
    %v2960 = vunpack.c.l.b16 %v2812
    %v2961 = vunpack.c.h.b16 %v2812
    %v2962 = vunpack.c.l.b16 %v2813
    %v2963 = vunpack.c.h.b16 %v2813
    %v2964 = vunpack.c.l.b16 %v2814
    %v2965 = vunpack.c.h.b16 %v2814
    %v2966 = vunpack.c.l.b16 %v2815
    %v2967 = vunpack.c.h.b16 %v2815
    %v2968 = vunpack.c.l.b16 %v2816
    %v2969 = vunpack.c.h.b16 %v2816
    %v2970 = vunpack.c.l.b16 %v2817
    %v2971 = vunpack.c.h.b16 %v2817
    %v2972 = vunpack.c.l.b16 %v2818
    %v2973 = vunpack.c.h.b16 %v2818
    %v2974 = vunpack.c.l.b16 %v2819
    %v2975 = vunpack.c.h.b16 %v2819
    %v2976 = vunpack.c.l.b16 %v2820
    %v2977 = vunpack.c.h.b16 %v2820
    %v2978 = vunpack.c.l.b16 %v2821
    %v2979 = vunpack.c.h.b16 %v2821
    %v2980 = vunpack.c.l.b16 %v2822
    %v2981 = vunpack.c.h.b16 %v2822
    %v2982 = vunpack.c.l.b16 %v2823
    %v2983 = vunpack.c.h.b16 %v2823
    %v2984 = vpack.c.b16 %v2922, %v2920
    %v2985 = vpack.c.b16 %v2923, %v2921
    %v2986 = vpack.c.b16 %v2926, %v2924
    %v2987 = vpack.c.b16 %v2927, %v2925
    %v2988 = vpack.c.b16 %v2930, %v2928
    %v2989 = vpack.c.b16 %v2931, %v2929
    %v2990 = vpack.c.b16 %v2934, %v2932
    %v2991 = vpack.c.b16 %v2935, %v2933
    %v2992 = vpack.c.b16 %v2938, %v2936
    %v2993 = vpack.c.b16 %v2939, %v2937
    %v2994 = vpack.c.b16 %v2942, %v2940
    %v2995 = vpack.c.b16 %v2943, %v2941
    %v2996 = vpack.c.b16 %v2946, %v2944
    %v2997 = vpack.c.b16 %v2947, %v2945
    %v2998 = vpack.c.b16 %v2950, %v2948
    %v2999 = vpack.c.b16 %v2951, %v2949
    %v3000 = vpack.c.b16 %v2954, %v2952
    %v3001 = vpack.c.b16 %v2955, %v2953
    %v3002 = vpack.c.b16 %v2958, %v2956
    %v3003 = vpack.c.b16 %v2959, %v2957
    %v3004 = vpack.c.b16 %v2962, %v2960
    %v3005 = vpack.c.b16 %v2963, %v2961
    %v3006 = vpack.c.b16 %v2966, %v2964
    %v3007 = vpack.c.b16 %v2967, %v2965
    %v3008 = vpack.c.b16 %v2970, %v2968
    %v3009 = vpack.c.b16 %v2971, %v2969
    %v3010 = vpack.c.b16 %v2974, %v2972
    %v3011 = vpack.c.b16 %v2975, %v2973
    %v3012 = vpack.c.b16 %v2978, %v2976
    %v3013 = vpack.c.b16 %v2979, %v2977
    %v3014 = vpack.c.b16 %v2982, %v2980
    %v3015 = vpack.c.b16 %v2983, %v2981
    %3048 = vmatprep.subr.bf16.mxu0 %v2985
    %3049 = vmatpush1.bf16.msra.mxu0 %v2984
    %3050 = vmatprep.subr.bf16.mxu0 %v2987
    %3051 = vmatpush1.bf16.msra.mxu0 %v2986
    %3052 = vmatprep.subr.bf16.mxu0 %v2989
    %3053 = vmatpush1.bf16.msra.mxu0 %v2988
    %3054 = vmatprep.subr.bf16.mxu0 %v2991
    %3055 = vmatpush1.bf16.msra.mxu0 %v2990
    %3056 = vmatprep.subr.bf16.mxu0 %v2993
    %3057 = vmatpush1.bf16.msra.mxu0 %v2992
    %3058 = vmatprep.subr.bf16.mxu0 %v2995
    %3059 = vmatpush1.bf16.msra.mxu0 %v2994
    %3060 = vmatprep.subr.bf16.mxu0 %v2997
    %3061 = vmatpush1.bf16.msra.mxu0 %v2996
    %3062 = vmatprep.subr.bf16.mxu0 %v2999
    %3063 = vmatpush1.bf16.msra.mxu0 %v2998
    %3064 = vmatprep.subr.bf16.mxu0 %v3001
    %3065 = vmatpush1.bf16.msra.mxu0 %v3000
    %3066 = vmatprep.subr.bf16.mxu0 %v3003
    %3067 = vmatpush1.bf16.msra.mxu0 %v3002
    %3068 = vmatprep.subr.bf16.mxu0 %v3005
    %3069 = vmatpush1.bf16.msra.mxu0 %v3004
    %3070 = vmatprep.subr.bf16.mxu0 %v3007
    %3071 = vmatpush1.bf16.msra.mxu0 %v3006
    %3072 = vmatprep.subr.bf16.mxu0 %v3009
    %3073 = vmatpush1.bf16.msra.mxu0 %v3008
    %3074 = vmatprep.subr.bf16.mxu0 %v3011
    %3075 = vmatpush1.bf16.msra.mxu0 %v3010
    %3076 = vmatprep.subr.bf16.mxu0 %v3013
    %3077 = vmatpush1.bf16.msra.mxu0 %v3012
    %3078 = vmatprep.subr.bf16.mxu0 %v3015
    %3079 = vmatpush1.bf16.msra.mxu0 %v3014
    %3080 = vmatprep.mubr.bf16.mxu0 %v2857
    %3081 = vmatmul.mubr.bf16.gmra.mrb[0].mxu0 %v2856
    %v3082 = vpop.f32.mrb[0].mxu0
    %v3083 = vadd.f32 0.0, %v3082
    %v3084 = vpop.f32.mrb[0].mxu0
    %v3085 = vadd.f32 0.0, %v3084
    %v3086 = vpop.f32.mrb[0].mxu0
    %v3087 = vadd.f32 0.0, %v3086
    %v3088 = vpop.f32.mrb[0].mxu0
    %v3089 = vadd.f32 0.0, %v3088
    %3090 = vmatprep.mubr.bf16.mxu0 %v2859
    %3091 = vmatmul.mubr.bf16.gmra.mrb[0].mxu0 %v2858
    %v3092 = vpop.f32.mrb[0].mxu0
    %v3093 = vadd.f32 0.0, %v3092
    %v3094 = vpop.f32.mrb[0].mxu0
    %v3095 = vadd.f32 0.0, %v3094
    %v3096 = vpop.f32.mrb[0].mxu0
    %v3097 = vadd.f32 0.0, %v3096
    %v3098 = vpop.f32.mrb[0].mxu0
    %v3099 = vadd.f32 0.0, %v3098
    %3100 = vmatprep.mubr.bf16.mxu0 %v2861
    %3101 = vmatmul.mubr.bf16.gmra.mrb[0].mxu0 %v2860
    %v3102 = vpop.f32.mrb[0].mxu0
    %v3103 = vadd.f32 0.0, %v3102
    %v3104 = vpop.f32.mrb[0].mxu0
    %v3105 = vadd.f32 0.0, %v3104
    %v3106 = vpop.f32.mrb[0].mxu0
    %v3107 = vadd.f32 0.0, %v3106
    %v3108 = vpop.f32.mrb[0].mxu0
    %v3109 = vadd.f32 0.0, %v3108
    %3110 = vmatprep.mubr.bf16.mxu0 %v2863
    %3111 = vmatmul.mubr.bf16.gmra.mrb[0].mxu0 %v2862
    %v3112 = vpop.f32.mrb[0].mxu0
    %v3113 = vadd.f32 0.0, %v3112
    %v3114 = vpop.f32.mrb[0].mxu0
    %v3115 = vadd.f32 0.0, %v3114
    %v3116 = vpop.f32.mrb[0].mxu0
    %v3117 = vadd.f32 0.0, %v3116
    %v3118 = vpop.f32.mrb[0].mxu0
    %v3119 = vadd.f32 0.0, %v3118
    %3120 = vmatprep.mubr.bf16.mxu0 %v2865
    %3121 = vmatmul.mubr.bf16.gmra.mrb[0].mxu0 %v2864
    %v3122 = vpop.f32.mrb[0].mxu0
    %v3123 = vadd.f32 0.0, %v3122
    %v3124 = vpop.f32.mrb[0].mxu0
    %v3125 = vadd.f32 0.0, %v3124
    %v3126 = vpop.f32.mrb[0].mxu0
    %v3127 = vadd.f32 0.0, %v3126
    %v3128 = vpop.f32.mrb[0].mxu0
    %v3129 = vadd.f32 0.0, %v3128
    %3130 = vmatprep.mubr.bf16.mxu0 %v2867
    %3131 = vmatmul.mubr.bf16.gmra.mrb[0].mxu0 %v2866
    %v3132 = vpop.f32.mrb[0].mxu0
    %v3133 = vadd.f32 0.0, %v3132
    %v3134 = vpop.f32.mrb[0].mxu0
    %v3135 = vadd.f32 0.0, %v3134
    %v3136 = vpop.f32.mrb[0].mxu0
    %v3137 = vadd.f32 0.0, %v3136
    %v3138 = vpop.f32.mrb[0].mxu0
    %v3139 = vadd.f32 0.0, %v3138
    %3140 = vmatprep.mubr.bf16.mxu0 %v2869
    %3141 = vmatmul.mubr.bf16.gmra.mrb[0].mxu0 %v2868
    %v3142 = vpop.f32.mrb[0].mxu0
    %v3143 = vadd.f32 0.0, %v3142
    %v3144 = vpop.f32.mrb[0].mxu0
    %v3145 = vadd.f32 0.0, %v3144
    %v3146 = vpop.f32.mrb[0].mxu0
    %v3147 = vadd.f32 0.0, %v3146
    %v3148 = vpop.f32.mrb[0].mxu0
    %v3149 = vadd.f32 0.0, %v3148
    %3150 = vmatprep.mubr.bf16.mxu0 %v2871
    %3151 = vmatmul.mubr.bf16.gmra.mrb[0].mxu0 %v2870
    %v3152 = vpop.f32.mrb[0].mxu0
    %v3153 = vadd.f32 0.0, %v3152
    %v3154 = vpop.f32.mrb[0].mxu0
    %v3155 = vadd.f32 0.0, %v3154
    %v3156 = vpop.f32.mrb[0].mxu0
    %v3157 = vadd.f32 0.0, %v3156
    %v3158 = vpop.f32.mrb[0].mxu0
    %v3159 = vadd.f32 0.0, %v3158
    %3160 = vdwg.mxu0
    %v3161 = vadd.f32 %v2647, %v3083
    %v3162 = vadd.f32 %v2648, %v3085
    %v3163 = vadd.f32 %v2649, %v3087
    %v3164 = vadd.f32 %v2650, %v3089
    %v3165 = vadd.f32 %v2651, %v3093
    %v3166 = vadd.f32 %v2652, %v3095
    %v3167 = vadd.f32 %v2653, %v3097
    %v3168 = vadd.f32 %v2654, %v3099
    %v3169 = vadd.f32 %v2655, %v3103
    %v3170 = vadd.f32 %v2656, %v3105
    %v3171 = vadd.f32 %v2657, %v3107
    %v3172 = vadd.f32 %v2658, %v3109
    %v3173 = vadd.f32 %v2659, %v3113
    %v3174 = vadd.f32 %v2660, %v3115
    %v3175 = vadd.f32 %v2661, %v3117
    %v3176 = vadd.f32 %v2662, %v3119
    %v3177 = vadd.f32 %v2663, %v3123
    %v3178 = vadd.f32 %v2664, %v3125
    %v3179 = vadd.f32 %v2665, %v3127
    %v3180 = vadd.f32 %v2666, %v3129
    %v3181 = vadd.f32 %v2667, %v3133
    %v3182 = vadd.f32 %v2668, %v3135
    %v3183 = vadd.f32 %v2669, %v3137
    %v3184 = vadd.f32 %v2670, %v3139
    %v3185 = vadd.f32 %v2671, %v3143
    %v3186 = vadd.f32 %v2672, %v3145
    %v3187 = vadd.f32 %v2673, %v3147
    %v3188 = vadd.f32 %v2674, %v3149
    %v3189 = vadd.f32 %v2675, %v3153
    %v3190 = vadd.f32 %v2676, %v3155
    %v3191 = vadd.f32 %v2677, %v3157
    %v3192 = vadd.f32 %v2678, %v3159
    %s3193 = scalar_lea.vmem %s0, 32
    %v3194 = vld [vmem:[%s3193] sm:$0xff]
    %v3195 = vld [vmem:[%s3193 + $0x10] sm:$0xff]
    %v3196 = vld [vmem:[%s3193 + $0x20] sm:$0xff]
    %v3197 = vld [vmem:[%s3193 + $0x30] sm:$0xff]
    %v3198 = vld [vmem:[%s3193 + $0x40] sm:$0xff]
    %v3199 = vld [vmem:[%s3193 + $0x50] sm:$0xff]
    %v3200 = vld [vmem:[%s3193 + $0x60] sm:$0xff]
    %v3201 = vld [vmem:[%s3193 + $0x70] sm:$0xff]
    %v3202 = vld [vmem:[%s3193 + $0xa0] sm:$0xff]
    %v3203 = vld [vmem:[%s3193 + $0xb0] sm:$0xff]
    %v3204 = vld [vmem:[%s3193 + $0xc0] sm:$0xff]
    %v3205 = vld [vmem:[%s3193 + $0xd0] sm:$0xff]
    %v3206 = vld [vmem:[%s3193 + $0xe0] sm:$0xff]
    %v3207 = vld [vmem:[%s3193 + $0xf0] sm:$0xff]
    %v3208 = vld [vmem:[%s3193 + $0x100] sm:$0xff]
    %v3209 = vld [vmem:[%s3193 + $0x110] sm:$0xff]
    %s3210 = scalar_lea.vmem [#allocation2], 1536
    %v3211 = vld [vmem:[%s3210] sm:$0xff]
    %v3212 = vld [vmem:[%s3210 + $0x8] sm:$0xff]
    %v3213 = vld [vmem:[%s3210 + $0x10] sm:$0xff]
    %v3214 = vld [vmem:[%s3210 + $0x18] sm:$0xff]
    %v3215 = vld [vmem:[%s3210 + $0x20] sm:$0xff]
    %v3216 = vld [vmem:[%s3210 + $0x28] sm:$0xff]
    %v3217 = vld [vmem:[%s3210 + $0x30] sm:$0xff]
    %v3218 = vld [vmem:[%s3210 + $0x38] sm:$0xff]
    %v3219 = vld [vmem:[%s3210 + $0x40] sm:$0xff]
    %v3220 = vld [vmem:[%s3210 + $0x48] sm:$0xff]
    %v3221 = vld [vmem:[%s3210 + $0x50] sm:$0xff]
    %v3222 = vld [vmem:[%s3210 + $0x58] sm:$0xff]
    %v3223 = vld [vmem:[%s3210 + $0x60] sm:$0xff]
    %v3224 = vld [vmem:[%s3210 + $0x68] sm:$0xff]
    %v3225 = vld [vmem:[%s3210 + $0x70] sm:$0xff]
    %v3226 = vld [vmem:[%s3210 + $0x78] sm:$0xff]
    %v3227 = vld [vmem:[%s3210 + $0x80] sm:$0xff]
    %v3228 = vld [vmem:[%s3210 + $0x88] sm:$0xff]
    %v3229 = vld [vmem:[%s3210 + $0x90] sm:$0xff]
    %v3230 = vld [vmem:[%s3210 + $0x98] sm:$0xff]
    %v3231 = vld [vmem:[%s3210 + $0xa0] sm:$0xff]
    %v3232 = vld [vmem:[%s3210 + $0xa8] sm:$0xff]
    %v3233 = vld [vmem:[%s3210 + $0xb0] sm:$0xff]
    %v3234 = vld [vmem:[%s3210 + $0xb8] sm:$0xff]
    %v3235 = vld [vmem:[%s3210 + $0xc0] sm:$0xff]
    %v3236 = vld [vmem:[%s3210 + $0xc8] sm:$0xff]
    %v3237 = vld [vmem:[%s3210 + $0xd0] sm:$0xff]
    %v3238 = vld [vmem:[%s3210 + $0xd8] sm:$0xff]
    %v3239 = vld [vmem:[%s3210 + $0xe0] sm:$0xff]
    %v3240 = vld [vmem:[%s3210 + $0xe8] sm:$0xff]
    %v3241 = vld [vmem:[%s3210 + $0xf0] sm:$0xff]
    %v3242 = vld [vmem:[%s3210 + $0xf8] sm:$0xff]
    %v3259 = vunpack.c.l.b16 %v3194
    %v3260 = vunpack.c.h.b16 %v3194
    %v3261 = vunpack.c.l.b16 %v3195
    %v3262 = vunpack.c.h.b16 %v3195
    %v3263 = vunpack.c.l.b16 %v3196
    %v3264 = vunpack.c.h.b16 %v3196
    %v3265 = vunpack.c.l.b16 %v3197
    %v3266 = vunpack.c.h.b16 %v3197
    %v3267 = vunpack.c.l.b16 %v3198
    %v3268 = vunpack.c.h.b16 %v3198
    %v3269 = vunpack.c.l.b16 %v3199
    %v3270 = vunpack.c.h.b16 %v3199
    %v3271 = vunpack.c.l.b16 %v3200
    %v3272 = vunpack.c.h.b16 %v3200
    %v3273 = vunpack.c.l.b16 %v3201
    %v3274 = vunpack.c.h.b16 %v3201
    %v3275 = vunpack.c.l.b16 %v3202
    %v3276 = vunpack.c.h.b16 %v3202
    %v3277 = vunpack.c.l.b16 %v3203
    %v3278 = vunpack.c.h.b16 %v3203
    %v3279 = vunpack.c.l.b16 %v3204
    %v3280 = vunpack.c.h.b16 %v3204
    %v3281 = vunpack.c.l.b16 %v3205
    %v3282 = vunpack.c.h.b16 %v3205
    %v3283 = vunpack.c.l.b16 %v3206
    %v3284 = vunpack.c.h.b16 %v3206
    %v3285 = vunpack.c.l.b16 %v3207
    %v3286 = vunpack.c.h.b16 %v3207
    %v3287 = vunpack.c.l.b16 %v3208
    %v3288 = vunpack.c.h.b16 %v3208
    %v3289 = vunpack.c.l.b16 %v3209
    %v3290 = vunpack.c.h.b16 %v3209
    %v3291 = vpack.c.b16 %v3261, %v3259
    %v3292 = vpack.c.b16 %v3262, %v3260
    %v3293 = vpack.c.b16 %v3265, %v3263
    %v3294 = vpack.c.b16 %v3266, %v3264
    %v3295 = vpack.c.b16 %v3269, %v3267
    %v3296 = vpack.c.b16 %v3270, %v3268
    %v3297 = vpack.c.b16 %v3273, %v3271
    %v3298 = vpack.c.b16 %v3274, %v3272
    %v3299 = vpack.c.b16 %v3277, %v3275
    %v3300 = vpack.c.b16 %v3278, %v3276
    %v3301 = vpack.c.b16 %v3281, %v3279
    %v3302 = vpack.c.b16 %v3282, %v3280
    %v3303 = vpack.c.b16 %v3285, %v3283
    %v3304 = vpack.c.b16 %v3286, %v3284
    %v3305 = vpack.c.b16 %v3289, %v3287
    %v3306 = vpack.c.b16 %v3290, %v3288
    %v3355 = vunpack.c.l.b16 %v3211
    %v3356 = vunpack.c.h.b16 %v3211
    %v3357 = vunpack.c.l.b16 %v3212
    %v3358 = vunpack.c.h.b16 %v3212
    %v3359 = vunpack.c.l.b16 %v3213
    %v3360 = vunpack.c.h.b16 %v3213
    %v3361 = vunpack.c.l.b16 %v3214
    %v3362 = vunpack.c.h.b16 %v3214
    %v3363 = vunpack.c.l.b16 %v3215
    %v3364 = vunpack.c.h.b16 %v3215
    %v3365 = vunpack.c.l.b16 %v3216
    %v3366 = vunpack.c.h.b16 %v3216
    %v3367 = vunpack.c.l.b16 %v3217
    %v3368 = vunpack.c.h.b16 %v3217
    %v3369 = vunpack.c.l.b16 %v3218
    %v3370 = vunpack.c.h.b16 %v3218
    %v3371 = vunpack.c.l.b16 %v3219
    %v3372 = vunpack.c.h.b16 %v3219
    %v3373 = vunpack.c.l.b16 %v3220
    %v3374 = vunpack.c.h.b16 %v3220
    %v3375 = vunpack.c.l.b16 %v3221
    %v3376 = vunpack.c.h.b16 %v3221
    %v3377 = vunpack.c.l.b16 %v3222
    %v3378 = vunpack.c.h.b16 %v3222
    %v3379 = vunpack.c.l.b16 %v3223
    %v3380 = vunpack.c.h.b16 %v3223
    %v3381 = vunpack.c.l.b16 %v3224
    %v3382 = vunpack.c.h.b16 %v3224
    %v3383 = vunpack.c.l.b16 %v3225
    %v3384 = vunpack.c.h.b16 %v3225
    %v3385 = vunpack.c.l.b16 %v3226
    %v3386 = vunpack.c.h.b16 %v3226
    %v3387 = vunpack.c.l.b16 %v3227
    %v3388 = vunpack.c.h.b16 %v3227
    %v3389 = vunpack.c.l.b16 %v3228
    %v3390 = vunpack.c.h.b16 %v3228
    %v3391 = vunpack.c.l.b16 %v3229
    %v3392 = vunpack.c.h.b16 %v3229
    %v3393 = vunpack.c.l.b16 %v3230
    %v3394 = vunpack.c.h.b16 %v3230
    %v3395 = vunpack.c.l.b16 %v3231
    %v3396 = vunpack.c.h.b16 %v3231
    %v3397 = vunpack.c.l.b16 %v3232
    %v3398 = vunpack.c.h.b16 %v3232
    %v3399 = vunpack.c.l.b16 %v3233
    %v3400 = vunpack.c.h.b16 %v3233
    %v3401 = vunpack.c.l.b16 %v3234
    %v3402 = vunpack.c.h.b16 %v3234
    %v3403 = vunpack.c.l.b16 %v3235
    %v3404 = vunpack.c.h.b16 %v3235
    %v3405 = vunpack.c.l.b16 %v3236
    %v3406 = vunpack.c.h.b16 %v3236
    %v3407 = vunpack.c.l.b16 %v3237
    %v3408 = vunpack.c.h.b16 %v3237
    %v3409 = vunpack.c.l.b16 %v3238
    %v3410 = vunpack.c.h.b16 %v3238
    %v3411 = vunpack.c.l.b16 %v3239
    %v3412 = vunpack.c.h.b16 %v3239
    %v3413 = vunpack.c.l.b16 %v3240
    %v3414 = vunpack.c.h.b16 %v3240
    %v3415 = vunpack.c.l.b16 %v3241
    %v3416 = vunpack.c.h.b16 %v3241
    %v3417 = vunpack.c.l.b16 %v3242
    %v3418 = vunpack.c.h.b16 %v3242
    %v3419 = vpack.c.b16 %v3357, %v3355
    %v3420 = vpack.c.b16 %v3358, %v3356
    %v3421 = vpack.c.b16 %v3361, %v3359
    %v3422 = vpack.c.b16 %v3362, %v3360
    %v3423 = vpack.c.b16 %v3365, %v3363
    %v3424 = vpack.c.b16 %v3366, %v3364
    %v3425 = vpack.c.b16 %v3369, %v3367
    %v3426 = vpack.c.b16 %v3370, %v3368
    %v3427 = vpack.c.b16 %v3373, %v3371
    %v3428 = vpack.c.b16 %v3374, %v3372
    %v3429 = vpack.c.b16 %v3377, %v3375
    %v3430 = vpack.c.b16 %v3378, %v3376
    %v3431 = vpack.c.b16 %v3381, %v3379
    %v3432 = vpack.c.b16 %v3382, %v3380
    %v3433 = vpack.c.b16 %v3385, %v3383
    %v3434 = vpack.c.b16 %v3386, %v3384
    %v3435 = vpack.c.b16 %v3389, %v3387
    %v3436 = vpack.c.b16 %v3390, %v3388
    %v3437 = vpack.c.b16 %v3393, %v3391
    %v3438 = vpack.c.b16 %v3394, %v3392
    %v3439 = vpack.c.b16 %v3397, %v3395
    %v3440 = vpack.c.b16 %v3398, %v3396
    %v3441 = vpack.c.b16 %v3401, %v3399
    %v3442 = vpack.c.b16 %v3402, %v3400
    %v3443 = vpack.c.b16 %v3405, %v3403
    %v3444 = vpack.c.b16 %v3406, %v3404
    %v3445 = vpack.c.b16 %v3409, %v3407
    %v3446 = vpack.c.b16 %v3410, %v3408
    %v3447 = vpack.c.b16 %v3413, %v3411
    %v3448 = vpack.c.b16 %v3414, %v3412
    %v3449 = vpack.c.b16 %v3417, %v3415
    %v3450 = vpack.c.b16 %v3418, %v3416
    %3483 = vmatprep.subr.bf16.mxu0 %v3420
    %3484 = vmatpush1.bf16.msra.mxu0 %v3419
    %3485 = vmatprep.subr.bf16.mxu0 %v3422
    %3486 = vmatpush1.bf16.msra.mxu0 %v3421
    %3487 = vmatprep.subr.bf16.mxu0 %v3424
    %3488 = vmatpush1.bf16.msra.mxu0 %v3423
    %3489 = vmatprep.subr.bf16.mxu0 %v3426
    %3490 = vmatpush1.bf16.msra.mxu0 %v3425
    %3491 = vmatprep.subr.bf16.mxu0 %v3428
    %3492 = vmatpush1.bf16.msra.mxu0 %v3427
    %3493 = vmatprep.subr.bf16.mxu0 %v3430
    %3494 = vmatpush1.bf16.msra.mxu0 %v3429
    %3495 = vmatprep.subr.bf16.mxu0 %v3432
    %3496 = vmatpush1.bf16.msra.mxu0 %v3431
    %3497 = vmatprep.subr.bf16.mxu0 %v3434
    %3498 = vmatpush1.bf16.msra.mxu0 %v3433
    %3499 = vmatprep.subr.bf16.mxu0 %v3436
    %3500 = vmatpush1.bf16.msra.mxu0 %v3435
    %3501 = vmatprep.subr.bf16.mxu0 %v3438
    %3502 = vmatpush1.bf16.msra.mxu0 %v3437
    %3503 = vmatprep.subr.bf16.mxu0 %v3440
    %3504 = vmatpush1.bf16.msra.mxu0 %v3439
    %3505 = vmatprep.subr.bf16.mxu0 %v3442
    %3506 = vmatpush1.bf16.msra.mxu0 %v3441
    %3507 = vmatprep.subr.bf16.mxu0 %v3444
    %3508 = vmatpush1.bf16.msra.mxu0 %v3443
    %3509 = vmatprep.subr.bf16.mxu0 %v3446
    %3510 = vmatpush1.bf16.msra.mxu0 %v3445
    %3511 = vmatprep.subr.bf16.mxu0 %v3448
    %3512 = vmatpush1.bf16.msra.mxu0 %v3447
    %3513 = vmatprep.subr.bf16.mxu0 %v3450
    %3514 = vmatpush1.bf16.msra.mxu0 %v3449
    %3515 = vmatprep.mubr.bf16.mxu0 %v3292
    %3516 = vmatmul.mubr.bf16.gmra.mrb[0].mxu0 %v3291
    %v3517 = vpop.f32.mrb[0].mxu0
    %v3518 = vadd.f32 0.0, %v3517
    %v3519 = vpop.f32.mrb[0].mxu0
    %v3520 = vadd.f32 0.0, %v3519
    %v3521 = vpop.f32.mrb[0].mxu0
    %v3522 = vadd.f32 0.0, %v3521
    %v3523 = vpop.f32.mrb[0].mxu0
    %v3524 = vadd.f32 0.0, %v3523
    %3525 = vmatprep.mubr.bf16.mxu0 %v3294
    %3526 = vmatmul.mubr.bf16.gmra.mrb[0].mxu0 %v3293
    %v3527 = vpop.f32.mrb[0].mxu0
    %v3528 = vadd.f32 0.0, %v3527
    %v3529 = vpop.f32.mrb[0].mxu0
    %v3530 = vadd.f32 0.0, %v3529
    %v3531 = vpop.f32.mrb[0].mxu0
    %v3532 = vadd.f32 0.0, %v3531
    %v3533 = vpop.f32.mrb[0].mxu0
    %v3534 = vadd.f32 0.0, %v3533
    %3535 = vmatprep.mubr.bf16.mxu0 %v3296
    %3536 = vmatmul.mubr.bf16.gmra.mrb[0].mxu0 %v3295
    %v3537 = vpop.f32.mrb[0].mxu0
    %v3538 = vadd.f32 0.0, %v3537
    %v3539 = vpop.f32.mrb[0].mxu0
    %v3540 = vadd.f32 0.0, %v3539
    %v3541 = vpop.f32.mrb[0].mxu0
    %v3542 = vadd.f32 0.0, %v3541
    %v3543 = vpop.f32.mrb[0].mxu0
    %v3544 = vadd.f32 0.0, %v3543
    %3545 = vmatprep.mubr.bf16.mxu0 %v3298
    %3546 = vmatmul.mubr.bf16.gmra.mrb[0].mxu0 %v3297
    %v3547 = vpop.f32.mrb[0].mxu0
    %v3548 = vadd.f32 0.0, %v3547
    %v3549 = vpop.f32.mrb[0].mxu0
    %v3550 = vadd.f32 0.0, %v3549
    %v3551 = vpop.f32.mrb[0].mxu0
    %v3552 = vadd.f32 0.0, %v3551
    %v3553 = vpop.f32.mrb[0].mxu0
    %v3554 = vadd.f32 0.0, %v3553
    %3555 = vmatprep.mubr.bf16.mxu0 %v3300
    %3556 = vmatmul.mubr.bf16.gmra.mrb[0].mxu0 %v3299
    %v3557 = vpop.f32.mrb[0].mxu0
    %v3558 = vadd.f32 0.0, %v3557
    %v3559 = vpop.f32.mrb[0].mxu0
    %v3560 = vadd.f32 0.0, %v3559
    %v3561 = vpop.f32.mrb[0].mxu0
    %v3562 = vadd.f32 0.0, %v3561
    %v3563 = vpop.f32.mrb[0].mxu0
    %v3564 = vadd.f32 0.0, %v3563
    %3565 = vmatprep.mubr.bf16.mxu0 %v3302
    %3566 = vmatmul.mubr.bf16.gmra.mrb[0].mxu0 %v3301
    %v3567 = vpop.f32.mrb[0].mxu0
    %v3568 = vadd.f32 0.0, %v3567
    %v3569 = vpop.f32.mrb[0].mxu0
    %v3570 = vadd.f32 0.0, %v3569
    %v3571 = vpop.f32.mrb[0].mxu0
    %v3572 = vadd.f32 0.0, %v3571
    %v3573 = vpop.f32.mrb[0].mxu0
    %v3574 = vadd.f32 0.0, %v3573
    %3575 = vmatprep.mubr.bf16.mxu0 %v3304
    %3576 = vmatmul.mubr.bf16.gmra.mrb[0].mxu0 %v3303
    %v3577 = vpop.f32.mrb[0].mxu0
    %v3578 = vadd.f32 0.0, %v3577
    %v3579 = vpop.f32.mrb[0].mxu0
    %v3580 = vadd.f32 0.0, %v3579
    %v3581 = vpop.f32.mrb[0].mxu0
    %v3582 = vadd.f32 0.0, %v3581
    %v3583 = vpop.f32.mrb[0].mxu0
    %v3584 = vadd.f32 0.0, %v3583
    %3585 = vmatprep.mubr.bf16.mxu0 %v3306
    %3586 = vmatmul.mubr.bf16.gmra.mrb[0].mxu0 %v3305
    %v3587 = vpop.f32.mrb[0].mxu0
    %v3588 = vadd.f32 0.0, %v3587
    %v3589 = vpop.f32.mrb[0].mxu0
    %v3590 = vadd.f32 0.0, %v3589
    %v3591 = vpop.f32.mrb[0].mxu0
    %v3592 = vadd.f32 0.0, %v3591
    %v3593 = vpop.f32.mrb[0].mxu0
    %v3594 = vadd.f32 0.0, %v3593
    %3595 = vdwg.mxu0
    %v3596 = vadd.f32 %v3161, %v3518
    %v3597 = vadd.f32 %v3162, %v3520
    %v3598 = vadd.f32 %v3163, %v3522
    %v3599 = vadd.f32 %v3164, %v3524
    %v3600 = vadd.f32 %v3165, %v3528
    %v3601 = vadd.f32 %v3166, %v3530
    %v3602 = vadd.f32 %v3167, %v3532
    %v3603 = vadd.f32 %v3168, %v3534
    %v3604 = vadd.f32 %v3169, %v3538
    %v3605 = vadd.f32 %v3170, %v3540
    %v3606 = vadd.f32 %v3171, %v3542
    %v3607 = vadd.f32 %v3172, %v3544
    %v3608 = vadd.f32 %v3173, %v3548
    %v3609 = vadd.f32 %v3174, %v3550
    %v3610 = vadd.f32 %v3175, %v3552
    %v3611 = vadd.f32 %v3176, %v3554
    %v3612 = vadd.f32 %v3177, %v3558
    %v3613 = vadd.f32 %v3178, %v3560
    %v3614 = vadd.f32 %v3179, %v3562
    %v3615 = vadd.f32 %v3180, %v3564
    %v3616 = vadd.f32 %v3181, %v3568
    %v3617 = vadd.f32 %v3182, %v3570
    %v3618 = vadd.f32 %v3183, %v3572
    %v3619 = vadd.f32 %v3184, %v3574
    %v3620 = vadd.f32 %v3185, %v3578
    %v3621 = vadd.f32 %v3186, %v3580
    %v3622 = vadd.f32 %v3187, %v3582
    %v3623 = vadd.f32 %v3188, %v3584
    %v3624 = vadd.f32 %v3189, %v3588
    %v3625 = vadd.f32 %v3190, %v3590
    %v3626 = vadd.f32 %v3191, %v3592
    %v3627 = vadd.f32 %v3192, %v3594
    %v3628 = vld [vmem:[%s3193] sm:$0xff]
    %v3629 = vld [vmem:[%s3193 + $0x8] sm:$0x11]
    %v3630 = vld [vmem:[%s3193 + $0x10] sm:$0xff]
    %v3631 = vld [vmem:[%s3193 + $0x18] sm:$0x11]
    %v3632 = vld [vmem:[%s3193 + $0x20] sm:$0xff]
    %v3633 = vld [vmem:[%s3193 + $0x28] sm:$0x11]
    %v3634 = vld [vmem:[%s3193 + $0x30] sm:$0xff]
    %v3635 = vld [vmem:[%s3193 + $0x38] sm:$0x11]
    %v3636 = vld [vmem:[%s3193 + $0x40] sm:$0xff]
    %v3637 = vld [vmem:[%s3193 + $0x48] sm:$0x11]
    %v3638 = vld [vmem:[%s3193 + $0x50] sm:$0xff]
    %v3639 = vld [vmem:[%s3193 + $0x58] sm:$0x11]
    %v3640 = vld [vmem:[%s3193 + $0x60] sm:$0xff]
    %v3641 = vld [vmem:[%s3193 + $0x68] sm:$0x11]
    %v3642 = vld [vmem:[%s3193 + $0x70] sm:$0xff]
    %v3643 = vld [vmem:[%s3193 + $0x78] sm:$0x11]
    %v3644 = vld [vmem:[%s3193 + $0xa0] sm:$0xff]
    %v3645 = vld [vmem:[%s3193 + $0xa8] sm:$0x11]
    %v3646 = vld [vmem:[%s3193 + $0xb0] sm:$0xff]
    %v3647 = vld [vmem:[%s3193 + $0xb8] sm:$0x11]
    %v3648 = vld [vmem:[%s3193 + $0xc0] sm:$0xff]
    %v3649 = vld [vmem:[%s3193 + $0xc8] sm:$0x11]
    %v3650 = vld [vmem:[%s3193 + $0xd0] sm:$0xff]
    %v3651 = vld [vmem:[%s3193 + $0xd8] sm:$0x11]
    %v3652 = vld [vmem:[%s3193 + $0xe0] sm:$0xff]
    %v3653 = vld [vmem:[%s3193 + $0xe8] sm:$0x11]
    %v3654 = vld [vmem:[%s3193 + $0xf0] sm:$0xff]
    %v3655 = vld [vmem:[%s3193 + $0xf8] sm:$0x11]
    %v3656 = vld [vmem:[%s3193 + $0x100] sm:$0xff]
    %v3657 = vld [vmem:[%s3193 + $0x108] sm:$0x11]
    %v3658 = vld [vmem:[%s3193 + $0x110] sm:$0xff]
    %v3659 = vld [vmem:[%s3193 + $0x118] sm:$0x11]
    %v3661 = vshrl.u32 %v3628, 16
    %v3663 = vrot.slane %v3661, 4
    %v3664 = vshll.u32 %v3628, 16
    %v3666 = vrot.slane %v3664, 5
    %v3667 = vor.u32 %v3663, %v3666
    %v3668 = vrot.slane %v3667, 4
    %v3670 = vshll.u32 %v3629, 16
    %v3672 = vrot.slane %v3670, 5
    %v3673 = vsel %vm121, %v3668, %v3672
    %v3675 = vshrl.u32 %v3630, 16
    %v3677 = vrot.slane %v3675, 4
    %v3678 = vshll.u32 %v3630, 16
    %v3680 = vrot.slane %v3678, 5
    %v3681 = vor.u32 %v3677, %v3680
    %v3682 = vrot.slane %v3681, 4
    %v3684 = vshll.u32 %v3631, 16
    %v3686 = vrot.slane %v3684, 5
    %v3687 = vsel %vm121, %v3682, %v3686
    %v3689 = vshrl.u32 %v3632, 16
    %v3691 = vrot.slane %v3689, 4
    %v3692 = vshll.u32 %v3632, 16
    %v3694 = vrot.slane %v3692, 5
    %v3695 = vor.u32 %v3691, %v3694
    %v3696 = vrot.slane %v3695, 4
    %v3698 = vshll.u32 %v3633, 16
    %v3700 = vrot.slane %v3698, 5
    %v3701 = vsel %vm121, %v3696, %v3700
    %v3703 = vshrl.u32 %v3634, 16
    %v3705 = vrot.slane %v3703, 4
    %v3706 = vshll.u32 %v3634, 16
    %v3708 = vrot.slane %v3706, 5
    %v3709 = vor.u32 %v3705, %v3708
    %v3710 = vrot.slane %v3709, 4
    %v3712 = vshll.u32 %v3635, 16
    %v3714 = vrot.slane %v3712, 5
    %v3715 = vsel %vm121, %v3710, %v3714
    %v3717 = vshrl.u32 %v3636, 16
    %v3719 = vrot.slane %v3717, 4
    %v3720 = vshll.u32 %v3636, 16
    %v3722 = vrot.slane %v3720, 5
    %v3723 = vor.u32 %v3719, %v3722
    %v3724 = vrot.slane %v3723, 4
    %v3726 = vshll.u32 %v3637, 16
    %v3728 = vrot.slane %v3726, 5
    %v3729 = vsel %vm121, %v3724, %v3728
    %v3731 = vshrl.u32 %v3638, 16
    %v3733 = vrot.slane %v3731, 4
    %v3734 = vshll.u32 %v3638, 16
    %v3736 = vrot.slane %v3734, 5
    %v3737 = vor.u32 %v3733, %v3736
    %v3738 = vrot.slane %v3737, 4
    %v3740 = vshll.u32 %v3639, 16
    %v3742 = vrot.slane %v3740, 5
    %v3743 = vsel %vm121, %v3738, %v3742
    %v3745 = vshrl.u32 %v3640, 16
    %v3747 = vrot.slane %v3745, 4
    %v3748 = vshll.u32 %v3640, 16
    %v3750 = vrot.slane %v3748, 5
    %v3751 = vor.u32 %v3747, %v3750
    %v3752 = vrot.slane %v3751, 4
    %v3754 = vshll.u32 %v3641, 16
    %v3756 = vrot.slane %v3754, 5
    %v3757 = vsel %vm121, %v3752, %v3756
    %v3759 = vshrl.u32 %v3642, 16
    %v3761 = vrot.slane %v3759, 4
    %v3762 = vshll.u32 %v3642, 16
    %v3764 = vrot.slane %v3762, 5
    %v3765 = vor.u32 %v3761, %v3764
    %v3766 = vrot.slane %v3765, 4
    %v3768 = vshll.u32 %v3643, 16
    %v3770 = vrot.slane %v3768, 5
    %v3771 = vsel %vm121, %v3766, %v3770
    %v3773 = vshrl.u32 %v3644, 16
    %v3775 = vrot.slane %v3773, 4
    %v3776 = vshll.u32 %v3644, 16
    %v3778 = vrot.slane %v3776, 5
    %v3779 = vor.u32 %v3775, %v3778
    %v3780 = vrot.slane %v3779, 4
    %v3782 = vshll.u32 %v3645, 16
    %v3784 = vrot.slane %v3782, 5
    %v3785 = vsel %vm121, %v3780, %v3784
    %v3787 = vshrl.u32 %v3646, 16
    %v3789 = vrot.slane %v3787, 4
    %v3790 = vshll.u32 %v3646, 16
    %v3792 = vrot.slane %v3790, 5
    %v3793 = vor.u32 %v3789, %v3792
    %v3794 = vrot.slane %v3793, 4
    %v3796 = vshll.u32 %v3647, 16
    %v3798 = vrot.slane %v3796, 5
    %v3799 = vsel %vm121, %v3794, %v3798
    %v3801 = vshrl.u32 %v3648, 16
    %v3803 = vrot.slane %v3801, 4
    %v3804 = vshll.u32 %v3648, 16
    %v3806 = vrot.slane %v3804, 5
    %v3807 = vor.u32 %v3803, %v3806
    %v3808 = vrot.slane %v3807, 4
    %v3810 = vshll.u32 %v3649, 16
    %v3812 = vrot.slane %v3810, 5
    %v3813 = vsel %vm121, %v3808, %v3812
    %v3815 = vshrl.u32 %v3650, 16
    %v3817 = vrot.slane %v3815, 4
    %v3818 = vshll.u32 %v3650, 16
    %v3820 = vrot.slane %v3818, 5
    %v3821 = vor.u32 %v3817, %v3820
    %v3822 = vrot.slane %v3821, 4
    %v3824 = vshll.u32 %v3651, 16
    %v3826 = vrot.slane %v3824, 5
    %v3827 = vsel %vm121, %v3822, %v3826
    %v3829 = vshrl.u32 %v3652, 16
    %v3831 = vrot.slane %v3829, 4
    %v3832 = vshll.u32 %v3652, 16
    %v3834 = vrot.slane %v3832, 5
    %v3835 = vor.u32 %v3831, %v3834
    %v3836 = vrot.slane %v3835, 4
    %v3838 = vshll.u32 %v3653, 16
    %v3840 = vrot.slane %v3838, 5
    %v3841 = vsel %vm121, %v3836, %v3840
    %v3843 = vshrl.u32 %v3654, 16
    %v3845 = vrot.slane %v3843, 4
    %v3846 = vshll.u32 %v3654, 16
    %v3848 = vrot.slane %v3846, 5
    %v3849 = vor.u32 %v3845, %v3848
    %v3850 = vrot.slane %v3849, 4
    %v3852 = vshll.u32 %v3655, 16
    %v3854 = vrot.slane %v3852, 5
    %v3855 = vsel %vm121, %v3850, %v3854
    %v3857 = vshrl.u32 %v3656, 16
    %v3859 = vrot.slane %v3857, 4
    %v3860 = vshll.u32 %v3656, 16
    %v3862 = vrot.slane %v3860, 5
    %v3863 = vor.u32 %v3859, %v3862
    %v3864 = vrot.slane %v3863, 4
    %v3866 = vshll.u32 %v3657, 16
    %v3868 = vrot.slane %v3866, 5
    %v3869 = vsel %vm121, %v3864, %v3868
    %v3871 = vshrl.u32 %v3658, 16
    %v3873 = vrot.slane %v3871, 4
    %v3874 = vshll.u32 %v3658, 16
    %v3876 = vrot.slane %v3874, 5
    %v3877 = vor.u32 %v3873, %v3876
    %v3878 = vrot.slane %v3877, 4
    %v3880 = vshll.u32 %v3659, 16
    %v3882 = vrot.slane %v3880, 5
    %v3883 = vsel %vm121, %v3878, %v3882
    %s3884 = scalar_lea.vmem [#allocation2], 1792
    %v3885 = vld [vmem:[%s3884] sm:$0xff]
    %v3886 = vld [vmem:[%s3884 + $0x8] sm:$0xff]
    %v3887 = vld [vmem:[%s3884 + $0x10] sm:$0xff]
    %v3888 = vld [vmem:[%s3884 + $0x18] sm:$0xff]
    %v3889 = vld [vmem:[%s3884 + $0x20] sm:$0xff]
    %v3890 = vld [vmem:[%s3884 + $0x28] sm:$0xff]
    %v3891 = vld [vmem:[%s3884 + $0x30] sm:$0xff]
    %v3892 = vld [vmem:[%s3884 + $0x38] sm:$0xff]
    %v3893 = vld [vmem:[%s3884 + $0x40] sm:$0xff]
    %v3894 = vld [vmem:[%s3884 + $0x48] sm:$0xff]
    %v3895 = vld [vmem:[%s3884 + $0x50] sm:$0xff]
    %v3896 = vld [vmem:[%s3884 + $0x58] sm:$0xff]
    %v3897 = vld [vmem:[%s3884 + $0x60] sm:$0xff]
    %v3898 = vld [vmem:[%s3884 + $0x68] sm:$0xff]
    %v3899 = vld [vmem:[%s3884 + $0x70] sm:$0xff]
    %v3900 = vld [vmem:[%s3884 + $0x78] sm:$0xff]
    %v3901 = vld [vmem:[%s3884 + $0x80] sm:$0xff]
    %v3902 = vld [vmem:[%s3884 + $0x88] sm:$0xff]
    %v3903 = vld [vmem:[%s3884 + $0x90] sm:$0xff]
    %v3904 = vld [vmem:[%s3884 + $0x98] sm:$0xff]
    %v3905 = vld [vmem:[%s3884 + $0xa0] sm:$0xff]
    %v3906 = vld [vmem:[%s3884 + $0xa8] sm:$0xff]
    %v3907 = vld [vmem:[%s3884 + $0xb0] sm:$0xff]
    %v3908 = vld [vmem:[%s3884 + $0xb8] sm:$0xff]
    %v3909 = vld [vmem:[%s3884 + $0xc0] sm:$0xff]
    %v3910 = vld [vmem:[%s3884 + $0xc8] sm:$0xff]
    %v3911 = vld [vmem:[%s3884 + $0xd0] sm:$0xff]
    %v3912 = vld [vmem:[%s3884 + $0xd8] sm:$0xff]
    %v3913 = vld [vmem:[%s3884 + $0xe0] sm:$0xff]
    %v3914 = vld [vmem:[%s3884 + $0xe8] sm:$0xff]
    %v3915 = vld [vmem:[%s3884 + $0xf0] sm:$0xff]
    %v3916 = vld [vmem:[%s3884 + $0xf8] sm:$0xff]
    %v3917 = vunpack.c.l.b16 %v3673
    %v3918 = vunpack.c.h.b16 %v3673
    %v3919 = vunpack.c.l.b16 %v3687
    %v3920 = vunpack.c.h.b16 %v3687
    %v3921 = vunpack.c.l.b16 %v3701
    %v3922 = vunpack.c.h.b16 %v3701
    %v3923 = vunpack.c.l.b16 %v3715
    %v3924 = vunpack.c.h.b16 %v3715
    %v3925 = vunpack.c.l.b16 %v3729
    %v3926 = vunpack.c.h.b16 %v3729
    %v3927 = vunpack.c.l.b16 %v3743
    %v3928 = vunpack.c.h.b16 %v3743
    %v3929 = vunpack.c.l.b16 %v3757
    %v3930 = vunpack.c.h.b16 %v3757
    %v3931 = vunpack.c.l.b16 %v3771
    %v3932 = vunpack.c.h.b16 %v3771
    %v3933 = vunpack.c.l.b16 %v3785
    %v3934 = vunpack.c.h.b16 %v3785
    %v3935 = vunpack.c.l.b16 %v3799
    %v3936 = vunpack.c.h.b16 %v3799
    %v3937 = vunpack.c.l.b16 %v3813
    %v3938 = vunpack.c.h.b16 %v3813
    %v3939 = vunpack.c.l.b16 %v3827
    %v3940 = vunpack.c.h.b16 %v3827
    %v3941 = vunpack.c.l.b16 %v3841
    %v3942 = vunpack.c.h.b16 %v3841
    %v3943 = vunpack.c.l.b16 %v3855
    %v3944 = vunpack.c.h.b16 %v3855
    %v3945 = vunpack.c.l.b16 %v3869
    %v3946 = vunpack.c.h.b16 %v3869
    %v3947 = vunpack.c.l.b16 %v3883
    %v3948 = vunpack.c.h.b16 %v3883
    %v3949 = vpack.c.b16 %v3919, %v3917
    %v3950 = vpack.c.b16 %v3920, %v3918
    %v3951 = vpack.c.b16 %v3923, %v3921
    %v3952 = vpack.c.b16 %v3924, %v3922
    %v3953 = vpack.c.b16 %v3927, %v3925
    %v3954 = vpack.c.b16 %v3928, %v3926
    %v3955 = vpack.c.b16 %v3931, %v3929
    %v3956 = vpack.c.b16 %v3932, %v3930
    %v3957 = vpack.c.b16 %v3935, %v3933
    %v3958 = vpack.c.b16 %v3936, %v3934
    %v3959 = vpack.c.b16 %v3939, %v3937
    %v3960 = vpack.c.b16 %v3940, %v3938
    %v3961 = vpack.c.b16 %v3943, %v3941
    %v3962 = vpack.c.b16 %v3944, %v3942
    %v3963 = vpack.c.b16 %v3947, %v3945
    %v3964 = vpack.c.b16 %v3948, %v3946
    %v4013 = vunpack.c.l.b16 %v3885
    %v4014 = vunpack.c.h.b16 %v3885
    %v4015 = vunpack.c.l.b16 %v3886
    %v4016 = vunpack.c.h.b16 %v3886
    %v4017 = vunpack.c.l.b16 %v3887
    %v4018 = vunpack.c.h.b16 %v3887
    %v4019 = vunpack.c.l.b16 %v3888
    %v4020 = vunpack.c.h.b16 %v3888
    %v4021 = vunpack.c.l.b16 %v3889
    %v4022 = vunpack.c.h.b16 %v3889
    %v4023 = vunpack.c.l.b16 %v3890
    %v4024 = vunpack.c.h.b16 %v3890
    %v4025 = vunpack.c.l.b16 %v3891
    %v4026 = vunpack.c.h.b16 %v3891
    %v4027 = vunpack.c.l.b16 %v3892
    %v4028 = vunpack.c.h.b16 %v3892
    %v4029 = vunpack.c.l.b16 %v3893
    %v4030 = vunpack.c.h.b16 %v3893
    %v4031 = vunpack.c.l.b16 %v3894
    %v4032 = vunpack.c.h.b16 %v3894
    %v4033 = vunpack.c.l.b16 %v3895
    %v4034 = vunpack.c.h.b16 %v3895
    %v4035 = vunpack.c.l.b16 %v3896
    %v4036 = vunpack.c.h.b16 %v3896
    %v4037 = vunpack.c.l.b16 %v3897
    %v4038 = vunpack.c.h.b16 %v3897
    %v4039 = vunpack.c.l.b16 %v3898
    %v4040 = vunpack.c.h.b16 %v3898
    %v4041 = vunpack.c.l.b16 %v3899
    %v4042 = vunpack.c.h.b16 %v3899
    %v4043 = vunpack.c.l.b16 %v3900
    %v4044 = vunpack.c.h.b16 %v3900
    %v4045 = vunpack.c.l.b16 %v3901
    %v4046 = vunpack.c.h.b16 %v3901
    %v4047 = vunpack.c.l.b16 %v3902
    %v4048 = vunpack.c.h.b16 %v3902
    %v4049 = vunpack.c.l.b16 %v3903
    %v4050 = vunpack.c.h.b16 %v3903
    %v4051 = vunpack.c.l.b16 %v3904
    %v4052 = vunpack.c.h.b16 %v3904
    %v4053 = vunpack.c.l.b16 %v3905
    %v4054 = vunpack.c.h.b16 %v3905
    %v4055 = vunpack.c.l.b16 %v3906
    %v4056 = vunpack.c.h.b16 %v3906
    %v4057 = vunpack.c.l.b16 %v3907
    %v4058 = vunpack.c.h.b16 %v3907
    %v4059 = vunpack.c.l.b16 %v3908
    %v4060 = vunpack.c.h.b16 %v3908
    %v4061 = vunpack.c.l.b16 %v3909
    %v4062 = vunpack.c.h.b16 %v3909
    %v4063 = vunpack.c.l.b16 %v3910
    %v4064 = vunpack.c.h.b16 %v3910
    %v4065 = vunpack.c.l.b16 %v3911
    %v4066 = vunpack.c.h.b16 %v3911
    %v4067 = vunpack.c.l.b16 %v3912
    %v4068 = vunpack.c.h.b16 %v3912
    %v4069 = vunpack.c.l.b16 %v3913
    %v4070 = vunpack.c.h.b16 %v3913
    %v4071 = vunpack.c.l.b16 %v3914
    %v4072 = vunpack.c.h.b16 %v3914
    %v4073 = vunpack.c.l.b16 %v3915
    %v4074 = vunpack.c.h.b16 %v3915
    %v4075 = vunpack.c.l.b16 %v3916
    %v4076 = vunpack.c.h.b16 %v3916
    %v4077 = vpack.c.b16 %v4015, %v4013
    %v4078 = vpack.c.b16 %v4016, %v4014
    %v4079 = vpack.c.b16 %v4019, %v4017
    %v4080 = vpack.c.b16 %v4020, %v4018
    %v4081 = vpack.c.b16 %v4023, %v4021
    %v4082 = vpack.c.b16 %v4024, %v4022
    %v4083 = vpack.c.b16 %v4027, %v4025
    %v4084 = vpack.c.b16 %v4028, %v4026
    %v4085 = vpack.c.b16 %v4031, %v4029
    %v4086 = vpack.c.b16 %v4032, %v4030
    %v4087 = vpack.c.b16 %v4035, %v4033
    %v4088 = vpack.c.b16 %v4036, %v4034
    %v4089 = vpack.c.b16 %v4039, %v4037
    %v4090 = vpack.c.b16 %v4040, %v4038
    %v4091 = vpack.c.b16 %v4043, %v4041
    %v4092 = vpack.c.b16 %v4044, %v4042
    %v4093 = vpack.c.b16 %v4047, %v4045
    %v4094 = vpack.c.b16 %v4048, %v4046
    %v4095 = vpack.c.b16 %v4051, %v4049
    %v4096 = vpack.c.b16 %v4052, %v4050
    %v4097 = vpack.c.b16 %v4055, %v4053
    %v4098 = vpack.c.b16 %v4056, %v4054
    %v4099 = vpack.c.b16 %v4059, %v4057
    %v4100 = vpack.c.b16 %v4060, %v4058
    %v4101 = vpack.c.b16 %v4063, %v4061
    %v4102 = vpack.c.b16 %v4064, %v4062
    %v4103 = vpack.c.b16 %v4067, %v4065
    %v4104 = vpack.c.b16 %v4068, %v4066
    %v4105 = vpack.c.b16 %v4071, %v4069
    %v4106 = vpack.c.b16 %v4072, %v4070
    %v4107 = vpack.c.b16 %v4075, %v4073
    %v4108 = vpack.c.b16 %v4076, %v4074
    %4141 = vmatprep.subr.bf16.mxu0 %v4078
    %4142 = vmatpush1.bf16.msra.mxu0 %v4077
    %4143 = vmatprep.subr.bf16.mxu0 %v4080
    %4144 = vmatpush1.bf16.msra.mxu0 %v4079
    %4145 = vmatprep.subr.bf16.mxu0 %v4082
    %4146 = vmatpush1.bf16.msra.mxu0 %v4081
    %4147 = vmatprep.subr.bf16.mxu0 %v4084
    %4148 = vmatpush1.bf16.msra.mxu0 %v4083
    %4149 = vmatprep.subr.bf16.mxu0 %v4086
    %4150 = vmatpush1.bf16.msra.mxu0 %v4085
    %4151 = vmatprep.subr.bf16.mxu0 %v4088
    %4152 = vmatpush1.bf16.msra.mxu0 %v4087
    %4153 = vmatprep.subr.bf16.mxu0 %v4090
    %4154 = vmatpush1.bf16.msra.mxu0 %v4089
    %4155 = vmatprep.subr.bf16.mxu0 %v4092
    %4156 = vmatpush1.bf16.msra.mxu0 %v4091
    %4157 = vmatprep.subr.bf16.mxu0 %v4094
    %4158 = vmatpush1.bf16.msra.mxu0 %v4093
    %4159 = vmatprep.subr.bf16.mxu0 %v4096
    %4160 = vmatpush1.bf16.msra.mxu0 %v4095
    %4161 = vmatprep.subr.bf16.mxu0 %v4098
    %4162 = vmatpush1.bf16.msra.mxu0 %v4097
    %4163 = vmatprep.subr.bf16.mxu0 %v4100
    %4164 = vmatpush1.bf16.msra.mxu0 %v4099
    %4165 = vmatprep.subr.bf16.mxu0 %v4102
    %4166 = vmatpush1.bf16.msra.mxu0 %v4101
    %4167 = vmatprep.subr.bf16.mxu0 %v4104
    %4168 = vmatpush1.bf16.msra.mxu0 %v4103
    %4169 = vmatprep.subr.bf16.mxu0 %v4106
    %4170 = vmatpush1.bf16.msra.mxu0 %v4105
    %4171 = vmatprep.subr.bf16.mxu0 %v4108
    %4172 = vmatpush1.bf16.msra.mxu0 %v4107
    %4173 = vmatprep.mubr.bf16.mxu0 %v3950
    %4174 = vmatmul.mubr.bf16.gmra.mrb[0].mxu0 %v3949
    %v4175 = vpop.f32.mrb[0].mxu0
    %v4176 = vadd.f32 0.0, %v4175
    %v4177 = vpop.f32.mrb[0].mxu0
    %v4178 = vadd.f32 0.0, %v4177
    %v4179 = vpop.f32.mrb[0].mxu0
    %v4180 = vadd.f32 0.0, %v4179
    %v4181 = vpop.f32.mrb[0].mxu0
    %v4182 = vadd.f32 0.0, %v4181
    %4183 = vmatprep.mubr.bf16.mxu0 %v3952
    %4184 = vmatmul.mubr.bf16.gmra.mrb[0].mxu0 %v3951
    %v4185 = vpop.f32.mrb[0].mxu0
    %v4186 = vadd.f32 0.0, %v4185
    %v4187 = vpop.f32.mrb[0].mxu0
    %v4188 = vadd.f32 0.0, %v4187
    %v4189 = vpop.f32.mrb[0].mxu0
    %v4190 = vadd.f32 0.0, %v4189
    %v4191 = vpop.f32.mrb[0].mxu0
    %v4192 = vadd.f32 0.0, %v4191
    %4193 = vmatprep.mubr.bf16.mxu0 %v3954
    %4194 = vmatmul.mubr.bf16.gmra.mrb[0].mxu0 %v3953
    %v4195 = vpop.f32.mrb[0].mxu0
    %v4196 = vadd.f32 0.0, %v4195
    %v4197 = vpop.f32.mrb[0].mxu0
    %v4198 = vadd.f32 0.0, %v4197
    %v4199 = vpop.f32.mrb[0].mxu0
    %v4200 = vadd.f32 0.0, %v4199
    %v4201 = vpop.f32.mrb[0].mxu0
    %v4202 = vadd.f32 0.0, %v4201
    %4203 = vmatprep.mubr.bf16.mxu0 %v3956
    %4204 = vmatmul.mubr.bf16.gmra.mrb[0].mxu0 %v3955
    %v4205 = vpop.f32.mrb[0].mxu0
    %v4206 = vadd.f32 0.0, %v4205
    %v4207 = vpop.f32.mrb[0].mxu0
    %v4208 = vadd.f32 0.0, %v4207
    %v4209 = vpop.f32.mrb[0].mxu0
    %v4210 = vadd.f32 0.0, %v4209
    %v4211 = vpop.f32.mrb[0].mxu0
    %v4212 = vadd.f32 0.0, %v4211
    %4213 = vmatprep.mubr.bf16.mxu0 %v3958
    %4214 = vmatmul.mubr.bf16.gmra.mrb[0].mxu0 %v3957
    %v4215 = vpop.f32.mrb[0].mxu0
    %v4216 = vadd.f32 0.0, %v4215
    %v4217 = vpop.f32.mrb[0].mxu0
    %v4218 = vadd.f32 0.0, %v4217
    %v4219 = vpop.f32.mrb[0].mxu0
    %v4220 = vadd.f32 0.0, %v4219
    %v4221 = vpop.f32.mrb[0].mxu0
    %v4222 = vadd.f32 0.0, %v4221
    %4223 = vmatprep.mubr.bf16.mxu0 %v3960
    %4224 = vmatmul.mubr.bf16.gmra.mrb[0].mxu0 %v3959
    %v4225 = vpop.f32.mrb[0].mxu0
    %v4226 = vadd.f32 0.0, %v4225
    %v4227 = vpop.f32.mrb[0].mxu0
    %v4228 = vadd.f32 0.0, %v4227
    %v4229 = vpop.f32.mrb[0].mxu0
    %v4230 = vadd.f32 0.0, %v4229
    %v4231 = vpop.f32.mrb[0].mxu0
    %v4232 = vadd.f32 0.0, %v4231
    %4233 = vmatprep.mubr.bf16.mxu0 %v3962
    %4234 = vmatmul.mubr.bf16.gmra.mrb[0].mxu0 %v3961
    %v4235 = vpop.f32.mrb[0].mxu0
    %v4236 = vadd.f32 0.0, %v4235
    %v4237 = vpop.f32.mrb[0].mxu0
    %v4238 = vadd.f32 0.0, %v4237
    %v4239 = vpop.f32.mrb[0].mxu0
    %v4240 = vadd.f32 0.0, %v4239
    %v4241 = vpop.f32.mrb[0].mxu0
    %v4242 = vadd.f32 0.0, %v4241
    %4243 = vmatprep.mubr.bf16.mxu0 %v3964
    %4244 = vmatmul.mubr.bf16.gmra.mrb[0].mxu0 %v3963
    %v4245 = vpop.f32.mrb[0].mxu0
    %v4246 = vadd.f32 0.0, %v4245
    %v4247 = vpop.f32.mrb[0].mxu0
    %v4248 = vadd.f32 0.0, %v4247
    %v4249 = vpop.f32.mrb[0].mxu0
    %v4250 = vadd.f32 0.0, %v4249
    %v4251 = vpop.f32.mrb[0].mxu0
    %v4252 = vadd.f32 0.0, %v4251
    %4253 = vdwg.mxu0
    %v4254 = vadd.f32 %v3596, %v4176
    %v4255 = vadd.f32 %v3597, %v4178
    %v4256 = vadd.f32 %v3598, %v4180
    %v4257 = vadd.f32 %v3599, %v4182
    %v4258 = vadd.f32 %v3600, %v4186
    %v4259 = vadd.f32 %v3601, %v4188
    %v4260 = vadd.f32 %v3602, %v4190
    %v4261 = vadd.f32 %v3603, %v4192
    %v4262 = vadd.f32 %v3604, %v4196
    %v4263 = vadd.f32 %v3605, %v4198
    %v4264 = vadd.f32 %v3606, %v4200
    %v4265 = vadd.f32 %v3607, %v4202
    %v4266 = vadd.f32 %v3608, %v4206
    %v4267 = vadd.f32 %v3609, %v4208
    %v4268 = vadd.f32 %v3610, %v4210
    %v4269 = vadd.f32 %v3611, %v4212
    %v4270 = vadd.f32 %v3612, %v4216
    %v4271 = vadd.f32 %v3613, %v4218
    %v4272 = vadd.f32 %v3614, %v4220
    %v4273 = vadd.f32 %v3615, %v4222
    %v4274 = vadd.f32 %v3616, %v4226
    %v4275 = vadd.f32 %v3617, %v4228
    %v4276 = vadd.f32 %v3618, %v4230
    %v4277 = vadd.f32 %v3619, %v4232
    %v4278 = vadd.f32 %v3620, %v4236
    %v4279 = vadd.f32 %v3621, %v4238
    %v4280 = vadd.f32 %v3622, %v4240
    %v4281 = vadd.f32 %v3623, %v4242
    %v4282 = vadd.f32 %v3624, %v4246
    %v4283 = vadd.f32 %v3625, %v4248
    %v4284 = vadd.f32 %v3626, %v4250
    %v4285 = vadd.f32 %v3627, %v4252
    %v4286 = vld [vmem:[%s3193] sm:$0xee]
    %v4287 = vld [vmem:[%s3193 + $0x10] sm:$0xee]
    %v4288 = vld [vmem:[%s3193 + $0x20] sm:$0xee]
    %v4289 = vld [vmem:[%s3193 + $0x30] sm:$0xee]
    %v4290 = vld [vmem:[%s3193 + $0x40] sm:$0xee]
    %v4291 = vld [vmem:[%s3193 + $0x50] sm:$0xee]
    %v4292 = vld [vmem:[%s3193 + $0x60] sm:$0xee]
    %v4293 = vld [vmem:[%s3193 + $0x70] sm:$0xee]
    %v4294 = vld [vmem:[%s3193 + $0xa0] sm:$0xee]
    %v4295 = vld [vmem:[%s3193 + $0xb0] sm:$0xee]
    %v4296 = vld [vmem:[%s3193 + $0xc0] sm:$0xee]
    %v4297 = vld [vmem:[%s3193 + $0xd0] sm:$0xee]
    %v4298 = vld [vmem:[%s3193 + $0xe0] sm:$0xee]
    %v4299 = vld [vmem:[%s3193 + $0xf0] sm:$0xee]
    %v4300 = vld [vmem:[%s3193 + $0x100] sm:$0xee]
    %v4301 = vld [vmem:[%s3193 + $0x110] sm:$0xee]
    %v4334 = vrot.slane %v4286, 5
    %v4335 = vrot.slane %v4334, 4
    %v4336 = vrot.slane %v3629, 5
    %v4337 = vsel %vm1119, %v4335, %v4336
    %v4338 = vrot.slane %v4287, 5
    %v4339 = vrot.slane %v4338, 4
    %v4340 = vrot.slane %v3631, 5
    %v4341 = vsel %vm1119, %v4339, %v4340
    %v4342 = vrot.slane %v4288, 5
    %v4343 = vrot.slane %v4342, 4
    %v4344 = vrot.slane %v3633, 5
    %v4345 = vsel %vm1119, %v4343, %v4344
    %v4346 = vrot.slane %v4289, 5
    %v4347 = vrot.slane %v4346, 4
    %v4348 = vrot.slane %v3635, 5
    %v4349 = vsel %vm1119, %v4347, %v4348
    %v4350 = vrot.slane %v4290, 5
    %v4351 = vrot.slane %v4350, 4
    %v4352 = vrot.slane %v3637, 5
    %v4353 = vsel %vm1119, %v4351, %v4352
    %v4354 = vrot.slane %v4291, 5
    %v4355 = vrot.slane %v4354, 4
    %v4356 = vrot.slane %v3639, 5
    %v4357 = vsel %vm1119, %v4355, %v4356
    %v4358 = vrot.slane %v4292, 5
    %v4359 = vrot.slane %v4358, 4
    %v4360 = vrot.slane %v3641, 5
    %v4361 = vsel %vm1119, %v4359, %v4360
    %v4362 = vrot.slane %v4293, 5
    %v4363 = vrot.slane %v4362, 4
    %v4364 = vrot.slane %v3643, 5
    %v4365 = vsel %vm1119, %v4363, %v4364
    %v4366 = vrot.slane %v4294, 5
    %v4367 = vrot.slane %v4366, 4
    %v4368 = vrot.slane %v3645, 5
    %v4369 = vsel %vm1119, %v4367, %v4368
    %v4370 = vrot.slane %v4295, 5
    %v4371 = vrot.slane %v4370, 4
    %v4372 = vrot.slane %v3647, 5
    %v4373 = vsel %vm1119, %v4371, %v4372
    %v4374 = vrot.slane %v4296, 5
    %v4375 = vrot.slane %v4374, 4
    %v4376 = vrot.slane %v3649, 5
    %v4377 = vsel %vm1119, %v4375, %v4376
    %v4378 = vrot.slane %v4297, 5
    %v4379 = vrot.slane %v4378, 4
    %v4380 = vrot.slane %v3651, 5
    %v4381 = vsel %vm1119, %v4379, %v4380
    %v4382 = vrot.slane %v4298, 5
    %v4383 = vrot.slane %v4382, 4
    %v4384 = vrot.slane %v3653, 5
    %v4385 = vsel %vm1119, %v4383, %v4384
    %v4386 = vrot.slane %v4299, 5
    %v4387 = vrot.slane %v4386, 4
    %v4388 = vrot.slane %v3655, 5
    %v4389 = vsel %vm1119, %v4387, %v4388
    %v4390 = vrot.slane %v4300, 5
    %v4391 = vrot.slane %v4390, 4
    %v4392 = vrot.slane %v3657, 5
    %v4393 = vsel %vm1119, %v4391, %v4392
    %v4394 = vrot.slane %v4301, 5
    %v4395 = vrot.slane %v4394, 4
    %v4396 = vrot.slane %v3659, 5
    %v4397 = vsel %vm1119, %v4395, %v4396
    %s4398 = scalar_lea.vmem [#allocation2], 2048
    %v4399 = vld [vmem:[%s4398] sm:$0xff]
    %v4400 = vld [vmem:[%s4398 + $0x8] sm:$0xff]
    %v4401 = vld [vmem:[%s4398 + $0x10] sm:$0xff]
    %v4402 = vld [vmem:[%s4398 + $0x18] sm:$0xff]
    %v4403 = vld [vmem:[%s4398 + $0x20] sm:$0xff]
    %v4404 = vld [vmem:[%s4398 + $0x28] sm:$0xff]
    %v4405 = vld [vmem:[%s4398 + $0x30] sm:$0xff]
    %v4406 = vld [vmem:[%s4398 + $0x38] sm:$0xff]
    %v4407 = vld [vmem:[%s4398 + $0x40] sm:$0xff]
    %v4408 = vld [vmem:[%s4398 + $0x48] sm:$0xff]
    %v4409 = vld [vmem:[%s4398 + $0x50] sm:$0xff]
    %v4410 = vld [vmem:[%s4398 + $0x58] sm:$0xff]
    %v4411 = vld [vmem:[%s4398 + $0x60] sm:$0xff]
    %v4412 = vld [vmem:[%s4398 + $0x68] sm:$0xff]
    %v4413 = vld [vmem:[%s4398 + $0x70] sm:$0xff]
    %v4414 = vld [vmem:[%s4398 + $0x78] sm:$0xff]
    %v4415 = vld [vmem:[%s4398 + $0x80] sm:$0xff]
    %v4416 = vld [vmem:[%s4398 + $0x88] sm:$0xff]
    %v4417 = vld [vmem:[%s4398 + $0x90] sm:$0xff]
    %v4418 = vld [vmem:[%s4398 + $0x98] sm:$0xff]
    %v4419 = vld [vmem:[%s4398 + $0xa0] sm:$0xff]
    %v4420 = vld [vmem:[%s4398 + $0xa8] sm:$0xff]
    %v4421 = vld [vmem:[%s4398 + $0xb0] sm:$0xff]
    %v4422 = vld [vmem:[%s4398 + $0xb8] sm:$0xff]
    %v4423 = vld [vmem:[%s4398 + $0xc0] sm:$0xff]
    %v4424 = vld [vmem:[%s4398 + $0xc8] sm:$0xff]
    %v4425 = vld [vmem:[%s4398 + $0xd0] sm:$0xff]
    %v4426 = vld [vmem:[%s4398 + $0xd8] sm:$0xff]
    %v4427 = vld [vmem:[%s4398 + $0xe0] sm:$0xff]
    %v4428 = vld [vmem:[%s4398 + $0xe8] sm:$0xff]
    %v4429 = vld [vmem:[%s4398 + $0xf0] sm:$0xff]
    %v4430 = vld [vmem:[%s4398 + $0xf8] sm:$0xff]
    %v4431 = vunpack.c.l.b16 %v4337
    %v4432 = vunpack.c.h.b16 %v4337
    %v4433 = vunpack.c.l.b16 %v4341
    %v4434 = vunpack.c.h.b16 %v4341
    %v4435 = vunpack.c.l.b16 %v4345
    %v4436 = vunpack.c.h.b16 %v4345
    %v4437 = vunpack.c.l.b16 %v4349
    %v4438 = vunpack.c.h.b16 %v4349
    %v4439 = vunpack.c.l.b16 %v4353
    %v4440 = vunpack.c.h.b16 %v4353
    %v4441 = vunpack.c.l.b16 %v4357
    %v4442 = vunpack.c.h.b16 %v4357
    %v4443 = vunpack.c.l.b16 %v4361
    %v4444 = vunpack.c.h.b16 %v4361
    %v4445 = vunpack.c.l.b16 %v4365
    %v4446 = vunpack.c.h.b16 %v4365
    %v4447 = vunpack.c.l.b16 %v4369
    %v4448 = vunpack.c.h.b16 %v4369
    %v4449 = vunpack.c.l.b16 %v4373
    %v4450 = vunpack.c.h.b16 %v4373
    %v4451 = vunpack.c.l.b16 %v4377
    %v4452 = vunpack.c.h.b16 %v4377
    %v4453 = vunpack.c.l.b16 %v4381
    %v4454 = vunpack.c.h.b16 %v4381
    %v4455 = vunpack.c.l.b16 %v4385
    %v4456 = vunpack.c.h.b16 %v4385
    %v4457 = vunpack.c.l.b16 %v4389
    %v4458 = vunpack.c.h.b16 %v4389
    %v4459 = vunpack.c.l.b16 %v4393
    %v4460 = vunpack.c.h.b16 %v4393
    %v4461 = vunpack.c.l.b16 %v4397
    %v4462 = vunpack.c.h.b16 %v4397
    %v4463 = vpack.c.b16 %v4433, %v4431
    %v4464 = vpack.c.b16 %v4434, %v4432
    %v4465 = vpack.c.b16 %v4437, %v4435
    %v4466 = vpack.c.b16 %v4438, %v4436
    %v4467 = vpack.c.b16 %v4441, %v4439
    %v4468 = vpack.c.b16 %v4442, %v4440
    %v4469 = vpack.c.b16 %v4445, %v4443
    %v4470 = vpack.c.b16 %v4446, %v4444
    %v4471 = vpack.c.b16 %v4449, %v4447
    %v4472 = vpack.c.b16 %v4450, %v4448
    %v4473 = vpack.c.b16 %v4453, %v4451
    %v4474 = vpack.c.b16 %v4454, %v4452
    %v4475 = vpack.c.b16 %v4457, %v4455
    %v4476 = vpack.c.b16 %v4458, %v4456
    %v4477 = vpack.c.b16 %v4461, %v4459
    %v4478 = vpack.c.b16 %v4462, %v4460
    %v4527 = vunpack.c.l.b16 %v4399
    %v4528 = vunpack.c.h.b16 %v4399
    %v4529 = vunpack.c.l.b16 %v4400
    %v4530 = vunpack.c.h.b16 %v4400
    %v4531 = vunpack.c.l.b16 %v4401
    %v4532 = vunpack.c.h.b16 %v4401
    %v4533 = vunpack.c.l.b16 %v4402
    %v4534 = vunpack.c.h.b16 %v4402
    %v4535 = vunpack.c.l.b16 %v4403
    %v4536 = vunpack.c.h.b16 %v4403
    %v4537 = vunpack.c.l.b16 %v4404
    %v4538 = vunpack.c.h.b16 %v4404
    %v4539 = vunpack.c.l.b16 %v4405
    %v4540 = vunpack.c.h.b16 %v4405
    %v4541 = vunpack.c.l.b16 %v4406
    %v4542 = vunpack.c.h.b16 %v4406
    %v4543 = vunpack.c.l.b16 %v4407
    %v4544 = vunpack.c.h.b16 %v4407
    %v4545 = vunpack.c.l.b16 %v4408
    %v4546 = vunpack.c.h.b16 %v4408
    %v4547 = vunpack.c.l.b16 %v4409
    %v4548 = vunpack.c.h.b16 %v4409
    %v4549 = vunpack.c.l.b16 %v4410
    %v4550 = vunpack.c.h.b16 %v4410
    %v4551 = vunpack.c.l.b16 %v4411
    %v4552 = vunpack.c.h.b16 %v4411
    %v4553 = vunpack.c.l.b16 %v4412
    %v4554 = vunpack.c.h.b16 %v4412
    %v4555 = vunpack.c.l.b16 %v4413
    %v4556 = vunpack.c.h.b16 %v4413
    %v4557 = vunpack.c.l.b16 %v4414
    %v4558 = vunpack.c.h.b16 %v4414
    %v4559 = vunpack.c.l.b16 %v4415
    %v4560 = vunpack.c.h.b16 %v4415
    %v4561 = vunpack.c.l.b16 %v4416
    %v4562 = vunpack.c.h.b16 %v4416
    %v4563 = vunpack.c.l.b16 %v4417
    %v4564 = vunpack.c.h.b16 %v4417
    %v4565 = vunpack.c.l.b16 %v4418
    %v4566 = vunpack.c.h.b16 %v4418
    %v4567 = vunpack.c.l.b16 %v4419
    %v4568 = vunpack.c.h.b16 %v4419
    %v4569 = vunpack.c.l.b16 %v4420
    %v4570 = vunpack.c.h.b16 %v4420
    %v4571 = vunpack.c.l.b16 %v4421
    %v4572 = vunpack.c.h.b16 %v4421
    %v4573 = vunpack.c.l.b16 %v4422
    %v4574 = vunpack.c.h.b16 %v4422
    %v4575 = vunpack.c.l.b16 %v4423
    %v4576 = vunpack.c.h.b16 %v4423
    %v4577 = vunpack.c.l.b16 %v4424
    %v4578 = vunpack.c.h.b16 %v4424
    %v4579 = vunpack.c.l.b16 %v4425
    %v4580 = vunpack.c.h.b16 %v4425
    %v4581 = vunpack.c.l.b16 %v4426
    %v4582 = vunpack.c.h.b16 %v4426
    %v4583 = vunpack.c.l.b16 %v4427
    %v4584 = vunpack.c.h.b16 %v4427
    %v4585 = vunpack.c.l.b16 %v4428
    %v4586 = vunpack.c.h.b16 %v4428
    %v4587 = vunpack.c.l.b16 %v4429
    %v4588 = vunpack.c.h.b16 %v4429
    %v4589 = vunpack.c.l.b16 %v4430
    %v4590 = vunpack.c.h.b16 %v4430
    %v4591 = vpack.c.b16 %v4529, %v4527
    %v4592 = vpack.c.b16 %v4530, %v4528
    %v4593 = vpack.c.b16 %v4533, %v4531
    %v4594 = vpack.c.b16 %v4534, %v4532
    %v4595 = vpack.c.b16 %v4537, %v4535
    %v4596 = vpack.c.b16 %v4538, %v4536
    %v4597 = vpack.c.b16 %v4541, %v4539
    %v4598 = vpack.c.b16 %v4542, %v4540
    %v4599 = vpack.c.b16 %v4545, %v4543
    %v4600 = vpack.c.b16 %v4546, %v4544
    %v4601 = vpack.c.b16 %v4549, %v4547
    %v4602 = vpack.c.b16 %v4550, %v4548
    %v4603 = vpack.c.b16 %v4553, %v4551
    %v4604 = vpack.c.b16 %v4554, %v4552
    %v4605 = vpack.c.b16 %v4557, %v4555
    %v4606 = vpack.c.b16 %v4558, %v4556
    %v4607 = vpack.c.b16 %v4561, %v4559
    %v4608 = vpack.c.b16 %v4562, %v4560
    %v4609 = vpack.c.b16 %v4565, %v4563
    %v4610 = vpack.c.b16 %v4566, %v4564
    %v4611 = vpack.c.b16 %v4569, %v4567
    %v4612 = vpack.c.b16 %v4570, %v4568
    %v4613 = vpack.c.b16 %v4573, %v4571
    %v4614 = vpack.c.b16 %v4574, %v4572
    %v4615 = vpack.c.b16 %v4577, %v4575
    %v4616 = vpack.c.b16 %v4578, %v4576
    %v4617 = vpack.c.b16 %v4581, %v4579
    %v4618 = vpack.c.b16 %v4582, %v4580
    %v4619 = vpack.c.b16 %v4585, %v4583
    %v4620 = vpack.c.b16 %v4586, %v4584
    %v4621 = vpack.c.b16 %v4589, %v4587
    %v4622 = vpack.c.b16 %v4590, %v4588
    %4655 = vmatprep.subr.bf16.mxu0 %v4592
    %4656 = vmatpush1.bf16.msra.mxu0 %v4591
    %4657 = vmatprep.subr.bf16.mxu0 %v4594
    %4658 = vmatpush1.bf16.msra.mxu0 %v4593
    %4659 = vmatprep.subr.bf16.mxu0 %v4596
    %4660 = vmatpush1.bf16.msra.mxu0 %v4595
    %4661 = vmatprep.subr.bf16.mxu0 %v4598
    %4662 = vmatpush1.bf16.msra.mxu0 %v4597
    %4663 = vmatprep.subr.bf16.mxu0 %v4600
    %4664 = vmatpush1.bf16.msra.mxu0 %v4599
    %4665 = vmatprep.subr.bf16.mxu0 %v4602
    %4666 = vmatpush1.bf16.msra.mxu0 %v4601
    %4667 = vmatprep.subr.bf16.mxu0 %v4604
    %4668 = vmatpush1.bf16.msra.mxu0 %v4603
    %4669 = vmatprep.subr.bf16.mxu0 %v4606
    %4670 = vmatpush1.bf16.msra.mxu0 %v4605
    %4671 = vmatprep.subr.bf16.mxu0 %v4608
    %4672 = vmatpush1.bf16.msra.mxu0 %v4607
    %4673 = vmatprep.subr.bf16.mxu0 %v4610
    %4674 = vmatpush1.bf16.msra.mxu0 %v4609
    %4675 = vmatprep.subr.bf16.mxu0 %v4612
    %4676 = vmatpush1.bf16.msra.mxu0 %v4611
    %4677 = vmatprep.subr.bf16.mxu0 %v4614
    %4678 = vmatpush1.bf16.msra.mxu0 %v4613
    %4679 = vmatprep.subr.bf16.mxu0 %v4616
    %4680 = vmatpush1.bf16.msra.mxu0 %v4615
    %4681 = vmatprep.subr.bf16.mxu0 %v4618
    %4682 = vmatpush1.bf16.msra.mxu0 %v4617
    %4683 = vmatprep.subr.bf16.mxu0 %v4620
    %4684 = vmatpush1.bf16.msra.mxu0 %v4619
    %4685 = vmatprep.subr.bf16.mxu0 %v4622
    %4686 = vmatpush1.bf16.msra.mxu0 %v4621
    %4687 = vmatprep.mubr.bf16.mxu0 %v4464
    %4688 = vmatmul.mubr.bf16.gmra.mrb[0].mxu0 %v4463
    %v4689 = vpop.f32.mrb[0].mxu0
    %v4690 = vadd.f32 0.0, %v4689
    %v4691 = vpop.f32.mrb[0].mxu0
    %v4692 = vadd.f32 0.0, %v4691
    %v4693 = vpop.f32.mrb[0].mxu0
    %v4694 = vadd.f32 0.0, %v4693
    %v4695 = vpop.f32.mrb[0].mxu0
    %v4696 = vadd.f32 0.0, %v4695
    %4697 = vmatprep.mubr.bf16.mxu0 %v4466
    %4698 = vmatmul.mubr.bf16.gmra.mrb[0].mxu0 %v4465
    %v4699 = vpop.f32.mrb[0].mxu0
    %v4700 = vadd.f32 0.0, %v4699
    %v4701 = vpop.f32.mrb[0].mxu0
    %v4702 = vadd.f32 0.0, %v4701
    %v4703 = vpop.f32.mrb[0].mxu0
    %v4704 = vadd.f32 0.0, %v4703
    %v4705 = vpop.f32.mrb[0].mxu0
    %v4706 = vadd.f32 0.0, %v4705
    %4707 = vmatprep.mubr.bf16.mxu0 %v4468
    %4708 = vmatmul.mubr.bf16.gmra.mrb[0].mxu0 %v4467
    %v4709 = vpop.f32.mrb[0].mxu0
    %v4710 = vadd.f32 0.0, %v4709
    %v4711 = vpop.f32.mrb[0].mxu0
    %v4712 = vadd.f32 0.0, %v4711
    %v4713 = vpop.f32.mrb[0].mxu0
    %v4714 = vadd.f32 0.0, %v4713
    %v4715 = vpop.f32.mrb[0].mxu0
    %v4716 = vadd.f32 0.0, %v4715
    %4717 = vmatprep.mubr.bf16.mxu0 %v4470
    %4718 = vmatmul.mubr.bf16.gmra.mrb[0].mxu0 %v4469
    %v4719 = vpop.f32.mrb[0].mxu0
    %v4720 = vadd.f32 0.0, %v4719
    %v4721 = vpop.f32.mrb[0].mxu0
    %v4722 = vadd.f32 0.0, %v4721
    %v4723 = vpop.f32.mrb[0].mxu0
    %v4724 = vadd.f32 0.0, %v4723
    %v4725 = vpop.f32.mrb[0].mxu0
    %v4726 = vadd.f32 0.0, %v4725
    %4727 = vmatprep.mubr.bf16.mxu0 %v4472
    %4728 = vmatmul.mubr.bf16.gmra.mrb[0].mxu0 %v4471
    %v4729 = vpop.f32.mrb[0].mxu0
    %v4730 = vadd.f32 0.0, %v4729
    %v4731 = vpop.f32.mrb[0].mxu0
    %v4732 = vadd.f32 0.0, %v4731
    %v4733 = vpop.f32.mrb[0].mxu0
    %v4734 = vadd.f32 0.0, %v4733
    %v4735 = vpop.f32.mrb[0].mxu0
    %v4736 = vadd.f32 0.0, %v4735
    %4737 = vmatprep.mubr.bf16.mxu0 %v4474
    %4738 = vmatmul.mubr.bf16.gmra.mrb[0].mxu0 %v4473
    %v4739 = vpop.f32.mrb[0].mxu0
    %v4740 = vadd.f32 0.0, %v4739
    %v4741 = vpop.f32.mrb[0].mxu0
    %v4742 = vadd.f32 0.0, %v4741
    %v4743 = vpop.f32.mrb[0].mxu0
    %v4744 = vadd.f32 0.0, %v4743
    %v4745 = vpop.f32.mrb[0].mxu0
    %v4746 = vadd.f32 0.0, %v4745
    %4747 = vmatprep.mubr.bf16.mxu0 %v4476
    %4748 = vmatmul.mubr.bf16.gmra.mrb[0].mxu0 %v4475
    %v4749 = vpop.f32.mrb[0].mxu0
    %v4750 = vadd.f32 0.0, %v4749
    %v4751 = vpop.f32.mrb[0].mxu0
    %v4752 = vadd.f32 0.0, %v4751
    %v4753 = vpop.f32.mrb[0].mxu0
    %v4754 = vadd.f32 0.0, %v4753
    %v4755 = vpop.f32.mrb[0].mxu0
    %v4756 = vadd.f32 0.0, %v4755
    %4757 = vmatprep.mubr.bf16.mxu0 %v4478
    %4758 = vmatmul.mubr.bf16.gmra.mrb[0].mxu0 %v4477
    %v4759 = vpop.f32.mrb[0].mxu0
    %v4760 = vadd.f32 0.0, %v4759
    %v4761 = vpop.f32.mrb[0].mxu0
    %v4762 = vadd.f32 0.0, %v4761
    %v4763 = vpop.f32.mrb[0].mxu0
    %v4764 = vadd.f32 0.0, %v4763
    %v4765 = vpop.f32.mrb[0].mxu0
    %v4766 = vadd.f32 0.0, %v4765
    %4767 = vdwg.mxu0
    %v4768 = vadd.f32 %v4254, %v4690
    %v4769 = vadd.f32 %v4255, %v4692
    %v4770 = vadd.f32 %v4256, %v4694
    %v4771 = vadd.f32 %v4257, %v4696
    %v4772 = vadd.f32 %v4258, %v4700
    %v4773 = vadd.f32 %v4259, %v4702
    %v4774 = vadd.f32 %v4260, %v4704
    %v4775 = vadd.f32 %v4261, %v4706
    %v4776 = vadd.f32 %v4262, %v4710
    %v4777 = vadd.f32 %v4263, %v4712
    %v4778 = vadd.f32 %v4264, %v4714
    %v4779 = vadd.f32 %v4265, %v4716
    %v4780 = vadd.f32 %v4266, %v4720
    %v4781 = vadd.f32 %v4267, %v4722
    %v4782 = vadd.f32 %v4268, %v4724
    %v4783 = vadd.f32 %v4269, %v4726
    %v4784 = vadd.f32 %v4270, %v4730
    %v4785 = vadd.f32 %v4271, %v4732
    %v4786 = vadd.f32 %v4272, %v4734
    %v4787 = vadd.f32 %v4273, %v4736
    %v4788 = vadd.f32 %v4274, %v4740
    %v4789 = vadd.f32 %v4275, %v4742
    %v4790 = vadd.f32 %v4276, %v4744
    %v4791 = vadd.f32 %v4277, %v4746
    %v4792 = vadd.f32 %v4278, %v4750
    %v4793 = vadd.f32 %v4279, %v4752
    %v4794 = vadd.f32 %v4280, %v4754
    %v4795 = vadd.f32 %v4281, %v4756
    %v4796 = vadd.f32 %v4282, %v4760
    %v4797 = vadd.f32 %v4283, %v4762
    %v4798 = vadd.f32 %v4284, %v4764
    %v4799 = vadd.f32 %v4285, %v4766
    %v4800 = vadd.f32 %v4768, %v4770
    %v4801 = vadd.f32 %v4800, %v4772
    %v4802 = vadd.f32 %v4801, %v4774
    %v4803 = vadd.f32 %v4802, %v4776
    %v4804 = vadd.f32 %v4803, %v4778
    %v4805 = vadd.f32 %v4804, %v4780
    %v4806 = vadd.f32 %v4805, %v4782
    %v4807 = vadd.f32 %v4806, %v4784
    %v4808 = vadd.f32 %v4807, %v4786
    %v4809 = vadd.f32 %v4808, %v4788
    %v4810 = vadd.f32 %v4809, %v4790
    %v4811 = vadd.f32 %v4810, %v4792
    %v4812 = vadd.f32 %v4811, %v4794
    %v4813 = vadd.f32 %v4812, %v4796
    %v4814 = vadd.f32 %v4813, %v4798
    %v4815 = vrot.slane %v4814, 4
    %v4816 = vadd.f32 %v4814, %v4815
    %v4817 = vrot.slane %v4816, 2
    %v4818 = vadd.f32 %v4816, %v4817
    %v4819 = vrot.slane %v4818, 1
    %v4820 = vadd.f32 %v4818, %v4819
    %v4821 = vadd.f32 %v4769, %v4771
    %v4822 = vadd.f32 %v4821, %v4773
    %v4823 = vadd.f32 %v4822, %v4775
    %v4824 = vadd.f32 %v4823, %v4777
    %v4825 = vadd.f32 %v4824, %v4779
    %v4826 = vadd.f32 %v4825, %v4781
    %v4827 = vadd.f32 %v4826, %v4783
    %v4828 = vadd.f32 %v4827, %v4785
    %v4829 = vadd.f32 %v4828, %v4787
    %v4830 = vadd.f32 %v4829, %v4789
    %v4831 = vadd.f32 %v4830, %v4791
    %v4832 = vadd.f32 %v4831, %v4793
    %v4833 = vadd.f32 %v4832, %v4795
    %v4834 = vadd.f32 %v4833, %v4797
    %v4835 = vadd.f32 %v4834, %v4799
    %v4836 = vrot.slane %v4835, 4
    %v4837 = vadd.f32 %v4835, %v4836
    %v4838 = vrot.slane %v4837, 2
    %v4839 = vadd.f32 %v4837, %v4838
    %v4840 = vrot.slane %v4839, 1
    %v4841 = vadd.f32 %v4839, %v4840
    %v4842 = vmul.f32 %v4820, 0.0078125
    %v4843 = vmul.f32 %v4841, 0.0078125
    %v4844 = vmul.f32 %v4768, %v4768
    %v4845 = vmul.f32 %v4769, %v4769
    %v4846 = vmul.f32 %v4770, %v4770
    %v4847 = vmul.f32 %v4771, %v4771
    %v4848 = vmul.f32 %v4772, %v4772
    %v4849 = vmul.f32 %v4773, %v4773
    %v4850 = vmul.f32 %v4774, %v4774
    %v4851 = vmul.f32 %v4775, %v4775
    %v4852 = vmul.f32 %v4776, %v4776
    %v4853 = vmul.f32 %v4777, %v4777
    %v4854 = vmul.f32 %v4778, %v4778
    %v4855 = vmul.f32 %v4779, %v4779
    %v4856 = vmul.f32 %v4780, %v4780
    %v4857 = vmul.f32 %v4781, %v4781
    %v4858 = vmul.f32 %v4782, %v4782
    %v4859 = vmul.f32 %v4783, %v4783
    %v4860 = vmul.f32 %v4784, %v4784
    %v4861 = vmul.f32 %v4785, %v4785
    %v4862 = vmul.f32 %v4786, %v4786
    %v4863 = vmul.f32 %v4787, %v4787
    %v4864 = vmul.f32 %v4788, %v4788
    %v4865 = vmul.f32 %v4789, %v4789
    %v4866 = vmul.f32 %v4790, %v4790
    %v4867 = vmul.f32 %v4791, %v4791
    %v4868 = vmul.f32 %v4792, %v4792
    %v4869 = vmul.f32 %v4793, %v4793
    %v4870 = vmul.f32 %v4794, %v4794
    %v4871 = vmul.f32 %v4795, %v4795
    %v4872 = vmul.f32 %v4796, %v4796
    %v4873 = vmul.f32 %v4797, %v4797
    %v4874 = vmul.f32 %v4798, %v4798
    %v4875 = vmul.f32 %v4799, %v4799
    %v4876 = vadd.f32 %v4844, %v4846
    %v4877 = vadd.f32 %v4876, %v4848
    %v4878 = vadd.f32 %v4877, %v4850
    %v4879 = vadd.f32 %v4878, %v4852
    %v4880 = vadd.f32 %v4879, %v4854
    %v4881 = vadd.f32 %v4880, %v4856
    %v4882 = vadd.f32 %v4881, %v4858
    %v4883 = vadd.f32 %v4882, %v4860
    %v4884 = vadd.f32 %v4883, %v4862
    %v4885 = vadd.f32 %v4884, %v4864
    %v4886 = vadd.f32 %v4885, %v4866
    %v4887 = vadd.f32 %v4886, %v4868
    %v4888 = vadd.f32 %v4887, %v4870
    %v4889 = vadd.f32 %v4888, %v4872
    %v4890 = vadd.f32 %v4889, %v4874
    %v4891 = vrot.slane %v4890, 4
    %v4892 = vadd.f32 %v4890, %v4891
    %v4893 = vrot.slane %v4892, 2
    %v4894 = vadd.f32 %v4892, %v4893
    %v4895 = vrot.slane %v4894, 1
    %v4896 = vadd.f32 %v4894, %v4895
    %v4897 = vadd.f32 %v4845, %v4847
    %v4898 = vadd.f32 %v4897, %v4849
    %v4899 = vadd.f32 %v4898, %v4851
    %v4900 = vadd.f32 %v4899, %v4853
    %v4901 = vadd.f32 %v4900, %v4855
    %v4902 = vadd.f32 %v4901, %v4857
    %v4903 = vadd.f32 %v4902, %v4859
    %v4904 = vadd.f32 %v4903, %v4861
    %v4905 = vadd.f32 %v4904, %v4863
    %v4906 = vadd.f32 %v4905, %v4865
    %v4907 = vadd.f32 %v4906, %v4867
    %v4908 = vadd.f32 %v4907, %v4869
    %v4909 = vadd.f32 %v4908, %v4871
    %v4910 = vadd.f32 %v4909, %v4873
    %v4911 = vadd.f32 %v4910, %v4875
    %v4912 = vrot.slane %v4911, 4
    %v4913 = vadd.f32 %v4911, %v4912
    %v4914 = vrot.slane %v4913, 2
    %v4915 = vadd.f32 %v4913, %v4914
    %v4916 = vrot.slane %v4915, 1
    %v4917 = vadd.f32 %v4915, %v4916
    %v4918 = vmul.f32 %v4896, 0.0078125
    %v4919 = vmul.f32 %v4917, 0.0078125
    %v4920 = vmul.f32 %v4842, %v4842
    %v4921 = vmul.f32 %v4843, %v4843
    %v4922 = vsub.f32 %v4918, %v4920
    %v4923 = vsub.f32 %v4919, %v4921
    %v4924 = vadd.f32 %v4922, 1e-05
    %v4925 = vadd.f32 %v4923, 1e-05
    %v4926 = vrsqrt.pop %v4924
    %v4927 = vrsqrt.pop %v4925
    %v4928 = vld [vmem:[#allocation5] sm:$0x3]
    %v4930 = vlaneseq
    %v4931 = vshrl.u32 %v4930, 7
    %v4932 = vsub.s32 0, %v4931
    %v4933 = vrot.slane %v4928, %v4932
    %v4934 = vlaneseq
    %v4935 = vshrl.u32 %v4934, 7
    %v4936 = vsub.s32 1, %v4935
    %v4937 = vrot.slane %v4928, %v4936
    %v4940 = vmul.f32 %v4926, %v4933
    %v4941 = vmul.f32 %v4927, %v4937
    %v4942 = vld [vmem:[#allocation7] sm:$0x3]
    %v4943 = vmul.f32 %v4842, %v4940
    %v4944 = vmul.f32 %v4843, %v4941
    %v4947 = vcombine.low %v4943, %v4944
    %v4949 = vunpack.c.l.s4 1966171168
    %v4950 = vunpack.c.0.s8 %v4949
    %v4951 = vlaneseq
    %v4952 = vshrl.u32 %v4951, 7
    %v4953 = vsub.s32 %v4950, %v4952
    %v4954 = vrot.slane %v4947, %v4953
    %v4956 = vunpack.c.l.s4 1966171168
    %v4957 = vunpack.c.0.s8 %v4956
    %v4958 = vlaneseq
    %v4959 = vshrl.u32 %v4958, 7
    %v4960 = vsub.s32 %v4957, %v4959
    %v4961 = vrot.slane %v4954, %v4960
    %v4963 = vsub.f32 %v4942, %v4961
    %v4964 = vlaneseq
    %v4965 = vshrl.u32 %v4964, 7
    %v4966 = vsub.s32 0, %v4965
    %v4967 = vrot.slane %v4940, %v4966
    %v4968 = vlaneseq
    %v4969 = vshrl.u32 %v4968, 7
    %v4970 = vsub.s32 0, %v4969
    %v4971 = vrot.slane %v4941, %v4970
    %v4972 = vmul.f32 %v4768, %v4967
    %v4973 = vmul.f32 %v4769, %v4971
    %v4974 = vmul.f32 %v4770, %v4967
    %v4975 = vmul.f32 %v4771, %v4971
    %v4976 = vmul.f32 %v4772, %v4967
    %v4977 = vmul.f32 %v4773, %v4971
    %v4978 = vmul.f32 %v4774, %v4967
    %v4979 = vmul.f32 %v4775, %v4971
    %v4980 = vmul.f32 %v4776, %v4967
    %v4981 = vmul.f32 %v4777, %v4971
    %v4982 = vmul.f32 %v4778, %v4967
    %v4983 = vmul.f32 %v4779, %v4971
    %v4984 = vmul.f32 %v4780, %v4967
    %v4985 = vmul.f32 %v4781, %v4971
    %v4986 = vmul.f32 %v4782, %v4967
    %v4987 = vmul.f32 %v4783, %v4971
    %v4988 = vmul.f32 %v4784, %v4967
    %v4989 = vmul.f32 %v4785, %v4971
    %v4990 = vmul.f32 %v4786, %v4967
    %v4991 = vmul.f32 %v4787, %v4971
    %v4992 = vmul.f32 %v4788, %v4967
    %v4993 = vmul.f32 %v4789, %v4971
    %v4994 = vmul.f32 %v4790, %v4967
    %v4995 = vmul.f32 %v4791, %v4971
    %v4996 = vmul.f32 %v4792, %v4967
    %v4997 = vmul.f32 %v4793, %v4971
    %v4998 = vmul.f32 %v4794, %v4967
    %v4999 = vmul.f32 %v4795, %v4971
    %v5000 = vmul.f32 %v4796, %v4967
    %v5001 = vmul.f32 %v4797, %v4971
    %v5002 = vmul.f32 %v4798, %v4967
    %v5003 = vmul.f32 %v4799, %v4971
    %v5005 = vlaneseq
    %v5006 = vshrl.u32 %v5005, 7
    %v5007 = vsub.s32 0, %v5006
    %v5008 = vrot.slane %v4963, %v5007
    %v5009 = vlaneseq
    %v5010 = vshrl.u32 %v5009, 7
    %v5011 = vsub.s32 1, %v5010
    %v5012 = vrot.slane %v4963, %v5011
    %v5015 = vadd.f32 %v4972, %v5008
    %v5016 = vadd.f32 %v4973, %v5012
    %v5017 = vadd.f32 %v4974, %v5008
    %v5018 = vadd.f32 %v4975, %v5012
    %v5019 = vadd.f32 %v4976, %v5008
    %v5020 = vadd.f32 %v4977, %v5012
    %v5021 = vadd.f32 %v4978, %v5008
    %v5022 = vadd.f32 %v4979, %v5012
    %v5023 = vadd.f32 %v4980, %v5008
    %v5024 = vadd.f32 %v4981, %v5012
    %v5025 = vadd.f32 %v4982, %v5008
    %v5026 = vadd.f32 %v4983, %v5012
    %v5027 = vadd.f32 %v4984, %v5008
    %v5028 = vadd.f32 %v4985, %v5012
    %v5029 = vadd.f32 %v4986, %v5008
    %v5030 = vadd.f32 %v4987, %v5012
    %v5031 = vadd.f32 %v4988, %v5008
    %v5032 = vadd.f32 %v4989, %v5012
    %v5033 = vadd.f32 %v4990, %v5008
    %v5034 = vadd.f32 %v4991, %v5012
    %v5035 = vadd.f32 %v4992, %v5008
    %v5036 = vadd.f32 %v4993, %v5012
    %v5037 = vadd.f32 %v4994, %v5008
    %v5038 = vadd.f32 %v4995, %v5012
    %v5039 = vadd.f32 %v4996, %v5008
    %v5040 = vadd.f32 %v4997, %v5012
    %v5041 = vadd.f32 %v4998, %v5008
    %v5042 = vadd.f32 %v4999, %v5012
    %v5043 = vadd.f32 %v5000, %v5008
    %v5044 = vadd.f32 %v5001, %v5012
    %v5045 = vadd.f32 %v5002, %v5008
    %v5046 = vadd.f32 %v5003, %v5012
    %v5047 = vmax.f32 %v5015, 0.0
    %v5048 = vmax.f32 %v5016, 0.0
    %v5049 = vmax.f32 %v5017, 0.0
    %v5050 = vmax.f32 %v5018, 0.0
    %v5051 = vmax.f32 %v5019, 0.0
    %v5052 = vmax.f32 %v5020, 0.0
    %v5053 = vmax.f32 %v5021, 0.0
    %v5054 = vmax.f32 %v5022, 0.0
    %v5055 = vmax.f32 %v5023, 0.0
    %v5056 = vmax.f32 %v5024, 0.0
    %v5057 = vmax.f32 %v5025, 0.0
    %v5058 = vmax.f32 %v5026, 0.0
    %v5059 = vmax.f32 %v5027, 0.0
    %v5060 = vmax.f32 %v5028, 0.0
    %v5061 = vmax.f32 %v5029, 0.0
    %v5062 = vmax.f32 %v5030, 0.0
    %v5063 = vmax.f32 %v5031, 0.0
    %v5064 = vmax.f32 %v5032, 0.0
    %v5065 = vmax.f32 %v5033, 0.0
    %v5066 = vmax.f32 %v5034, 0.0
    %v5067 = vmax.f32 %v5035, 0.0
    %v5068 = vmax.f32 %v5036, 0.0
    %v5069 = vmax.f32 %v5037, 0.0
    %v5070 = vmax.f32 %v5038, 0.0
    %v5071 = vmax.f32 %v5039, 0.0
    %v5072 = vmax.f32 %v5040, 0.0
    %v5073 = vmax.f32 %v5041, 0.0
    %v5074 = vmax.f32 %v5042, 0.0
    %v5075 = vmax.f32 %v5043, 0.0
    %v5076 = vmax.f32 %v5044, 0.0
    %v5077 = vmax.f32 %v5045, 0.0
    %v5078 = vmax.f32 %v5046, 0.0
    %v5079 = vpack.c.bf16 %v5049, %v5047
    %v5080 = vpack.c.bf16 %v5050, %v5048
    %v5081 = vpack.c.bf16 %v5053, %v5051
    %v5082 = vpack.c.bf16 %v5054, %v5052
    %v5083 = vpack.c.bf16 %v5057, %v5055
    %v5084 = vpack.c.bf16 %v5058, %v5056
    %v5085 = vpack.c.bf16 %v5061, %v5059
    %v5086 = vpack.c.bf16 %v5062, %v5060
    %v5087 = vpack.c.bf16 %v5065, %v5063
    %v5088 = vpack.c.bf16 %v5066, %v5064
    %v5089 = vpack.c.bf16 %v5069, %v5067
    %v5090 = vpack.c.bf16 %v5070, %v5068
    %v5091 = vpack.c.bf16 %v5073, %v5071
    %v5092 = vpack.c.bf16 %v5074, %v5072
    %v5093 = vpack.c.bf16 %v5077, %v5075
    %v5094 = vpack.c.bf16 %v5078, %v5076
    %v5111 = vunpack.c.l.b16 %v5079
    %v5112 = vunpack.c.l.b16 %v5080
    %v5113 = vunpack.c.h.b16 %v5079
    %v5114 = vunpack.c.h.b16 %v5080
    %v5115 = vunpack.c.l.b16 %v5081
    %v5116 = vunpack.c.l.b16 %v5082
    %v5117 = vunpack.c.h.b16 %v5081
    %v5118 = vunpack.c.h.b16 %v5082
    %v5119 = vunpack.c.l.b16 %v5083
    %v5120 = vunpack.c.l.b16 %v5084
    %v5121 = vunpack.c.h.b16 %v5083
    %v5122 = vunpack.c.h.b16 %v5084
    %v5123 = vunpack.c.l.b16 %v5085
    %v5124 = vunpack.c.l.b16 %v5086
    %v5125 = vunpack.c.h.b16 %v5085
    %v5126 = vunpack.c.h.b16 %v5086
    %v5127 = vunpack.c.l.b16 %v5087
    %v5128 = vunpack.c.l.b16 %v5088
    %v5129 = vunpack.c.h.b16 %v5087
    %v5130 = vunpack.c.h.b16 %v5088
    %v5131 = vunpack.c.l.b16 %v5089
    %v5132 = vunpack.c.l.b16 %v5090
    %v5133 = vunpack.c.h.b16 %v5089
    %v5134 = vunpack.c.h.b16 %v5090
    %v5135 = vunpack.c.l.b16 %v5091
    %v5136 = vunpack.c.l.b16 %v5092
    %v5137 = vunpack.c.h.b16 %v5091
    %v5138 = vunpack.c.h.b16 %v5092
    %v5139 = vunpack.c.l.b16 %v5093
    %v5140 = vunpack.c.l.b16 %v5094
    %v5141 = vunpack.c.h.b16 %v5093
    %v5142 = vunpack.c.h.b16 %v5094
    %v5143 = vpack.c.b16 %v5112, %v5111
    %v5144 = vpack.c.b16 %v5114, %v5113
    %v5145 = vpack.c.b16 %v5116, %v5115
    %v5146 = vpack.c.b16 %v5118, %v5117
    %v5147 = vpack.c.b16 %v5120, %v5119
    %v5148 = vpack.c.b16 %v5122, %v5121
    %v5149 = vpack.c.b16 %v5124, %v5123
    %v5150 = vpack.c.b16 %v5126, %v5125
    %v5151 = vpack.c.b16 %v5128, %v5127
    %v5152 = vpack.c.b16 %v5130, %v5129
    %v5153 = vpack.c.b16 %v5132, %v5131
    %v5154 = vpack.c.b16 %v5134, %v5133
    %v5155 = vpack.c.b16 %v5136, %v5135
    %v5156 = vpack.c.b16 %v5138, %v5137
    %v5157 = vpack.c.b16 %v5140, %v5139
    %v5158 = vpack.c.b16 %v5142, %v5141
    %5175 = vst [vmem:[#allocation8] sm:$0xff] %v5143
    %5176 = vst [vmem:[#allocation8 + $0x8] sm:$0xff] %v5144
    %5177 = vst [vmem:[#allocation8 + $0x10] sm:$0xff] %v5145
    %5178 = vst [vmem:[#allocation8 + $0x18] sm:$0xff] %v5146
    %5179 = vst [vmem:[#allocation8 + $0x20] sm:$0xff] %v5147
    %5180 = vst [vmem:[#allocation8 + $0x28] sm:$0xff] %v5148
    %5181 = vst [vmem:[#allocation8 + $0x30] sm:$0xff] %v5149
    %5182 = vst [vmem:[#allocation8 + $0x38] sm:$0xff] %v5150
    %5183 = vst [vmem:[#allocation8 + $0x40] sm:$0xff] %v5151
    %5184 = vst [vmem:[#allocation8 + $0x48] sm:$0xff] %v5152
    %5185 = vst [vmem:[#allocation8 + $0x50] sm:$0xff] %v5153
    %5186 = vst [vmem:[#allocation8 + $0x58] sm:$0xff] %v5154
    %5187 = vst [vmem:[#allocation8 + $0x60] sm:$0xff] %v5155
    %5188 = vst [vmem:[#allocation8 + $0x68] sm:$0xff] %v5156
    %5189 = vst [vmem:[#allocation8 + $0x70] sm:$0xff] %v5157
    %5190 = vst [vmem:[#allocation8 + $0x78] sm:$0xff] %v5158
    // Predicated region
    $region30: #{tpu_custom_call.1} parent=1 // pred_check
      _
    $region31: #{tpu_custom_call.1} parent=1 // pred_check_branch
      %5192 = sbr.rel (0) target = $region33
    $region32: #{tpu_custom_call.1} parent=1 // pred_region
      %s5194 = ssub.s32 2048, 2048
      %5195 = vsyncadd [#allocation4], %s5194
      %s5196 = sshll.u32 [#allocation8], 4
      %s5197 = int_to_ptr.vmem [resolvable:$true] %s5196
      %5202 = dma.vmem_to_hbm [thread:$0]  %s5197, 2048, %s4, [#allocation4], 128, 128, 8
    $region33: #{tpu_custom_call.1} parent=1 // pred_fallthru
      _
    // Predicated region
    $region34: #{tpu_custom_call.1} parent=1 // pred_check
      _
    $region35: #{tpu_custom_call.1} parent=1 // pred_check_branch
      %5204 = sbr.rel (0) target = $region37
    $region36: #{tpu_custom_call.1} parent=1 // pred_region
      %5205 = dma.done [#allocation4], 2048
    $region37: #{tpu_custom_call.1} parent=1 // pred_fallthru
      _
    %5206 = vsyncpa [#allocation3], 1
    %5207 = vsyncpa [#allocation6], 1
    %5208 = vsyncpa [#allocation4], 1

</llo_original>
